<compile_context>
chip_gen: v7x
topology: tpu7x:2x2x1
jax: 0.10.0
libtpu: 0.0.40
codegen_flags: <defaults>
</compile_context>

<pallas_src>
import functools

import jax
import jax.numpy as jnp
from jax import lax
from jax.experimental import pallas as pl
from jax.experimental.pallas import tpu as pltpu

CLIP_VAL = 8
FRACTION_BITS = 12
_SCALE = float(2 ** FRACTION_BITS)
_INV_SCALE = 1.0 / _SCALE
_LN_EPS = 1e-5


# ----------------------------------------------------------------------------
# in-kernel helpers
# ----------------------------------------------------------------------------
def _fxp(x):
    """Replicates make_fxp: clip to +/-(8 - 2^-12), truncate onto Q*.12 grid.
    The f32->i32->f32 round-trip is kept (2 converts) because a floor/ceil
    truncation select is MORE VPU ops; the preceding clip guarantees
    |scaled| <= 32767 so the i32 cast is overflow-safe and bit-exact."""
    hi = CLIP_VAL - _INV_SCALE
    y = jnp.clip(x, -hi, hi)
    y = (y * _SCALE).astype(jnp.int32).astype(jnp.float32)  # trunc toward zero
    return y * _INV_SCALE


def _layernorm(x, g, b):
    mu = jnp.mean(x, axis=-1, keepdims=True)
    xc = x - mu
    var = jnp.mean(xc * xc, axis=-1, keepdims=True)
    return xc * lax.rsqrt(var + _LN_EPS) * g + b


def _erf(x):
    # Abramowitz & Stegun 7.1.26 (|err| < 1.5e-7, far below the 2^-12 quant
    # step).  Kept instead of lax.erf so lowering only needs EUP-friendly exp.
    a1, a2, a3, a4, a5 = 0.254829592, -0.284496736, 1.421413741, -1.453152027, 1.061405429
    p = 0.3275911
    s = jnp.where(x >= 0, 1.0, -1.0)
    ax = jnp.abs(x)
    t = 1.0 / (1.0 + p * ax)
    poly = t * (a1 + t * (a2 + t * (a3 + t * (a4 + t * a5))))
    return s * (1.0 - poly * jnp.exp(-ax * ax))


def _gelu(x):
    return 0.5 * x * (1.0 + _erf(x * 0.7071067811865476))  # exact (erf) GELU


# ----------------------------------------------------------------------------
# the one fused kernel
# ----------------------------------------------------------------------------
def _vit_kernel(patch_ref, ln1_g, ln1_b, pw_ref, pb_ref, ln2_g, ln2_b,
                cls_ref, pos_ref,
                aln_g, aln_b, qkv_w, proj_w, proj_b,
                fln_g, fln_b, ff1_w, ff1_b, ff2_w, ff2_b,
                hln_g, hln_b, hw_ref, hb_ref,
                o_ref, x_scr, *, heads, dim_head, scale):
    """Grid = (batch, depth).  One batch element per parallel step; the token
    activation stays resident in x_scr across the (arbitrary) depth axis."""
    d = pl.program_id(1)

    # ---- patch embedding: only at the first depth step ----
    @pl.when(d == 0)
    def _():
        p = _fxp(patch_ref[0])                                        # (n, patch_dim)
        p = _fxp(_layernorm(p, ln1_g[...], ln1_b[...]))
        p = _fxp(jnp.dot(p, pw_ref[...], preferred_element_type=jnp.float32) + pb_ref[...])
        p = _fxp(_layernorm(p, ln2_g[...], ln2_b[...]))               # (n, dim)
        pos = pos_ref[...]                                            # (n+1, dim)
        x_scr[0:1, :] = _fxp(cls_ref[...] + pos[0:1, :])              # cls token row
        x_scr[1:, :] = _fxp(p + pos[1:, :])                           # patch rows

    # ---- transformer block d (activations never leave VMEM) ----
    x = x_scr[...]                                                    # (N, dim), fxp'd
    normed = _fxp(_layernorm(x, aln_g[0], aln_b[0]))

    outs = []
    for h in range(heads):                                            # static unroll, heads small
        qh = _fxp(jnp.dot(normed, qkv_w[0, 3 * h + 0], preferred_element_type=jnp.float32))
        kh = _fxp(jnp.dot(normed, qkv_w[0, 3 * h + 1], preferred_element_type=jnp.float32))
        vh = _fxp(jnp.dot(normed, qkv_w[0, 3 * h + 2], preferred_element_type=jnp.float32))
        dots = lax.dot_general(qh, kh, (((1,), (1,)), ((), ())),
                               preferred_element_type=jnp.float32) * scale
        dots = _fxp(dots)
        m = jnp.max(dots, axis=-1, keepdims=True)
        e = jnp.exp(dots - m)
        attn = _fxp(e / jnp.sum(e, axis=-1, keepdims=True))           # softmax -> fxp (dropout p=0)
        outs.append(_fxp(jnp.dot(attn, vh, preferred_element_type=jnp.float32)))

    out_all = outs[0] if heads == 1 else jnp.concatenate(outs, axis=-1)  # (N, inner)
    proj = _fxp(jnp.dot(out_all, proj_w[0], preferred_element_type=jnp.float32) + proj_b[0])
    x = _fxp(proj + x)                                                # residual

    normed = _fxp(_layernorm(x, fln_g[0], fln_b[0]))
    h1 = _fxp(jnp.dot(normed, ff1_w[0], preferred_element_type=jnp.float32) + ff1_b[0])
    h1 = _fxp(_gelu(h1))
    h2 = _fxp(jnp.dot(h1, ff2_w[0], preferred_element_type=jnp.float32) + ff2_b[0])
    x = _fxp(h2 + x)                                                  # residual
    x_scr[...] = x

    # ---- classification head: only at the last depth step ----
    @pl.when(d == pl.num_programs(1) - 1)
    def _():
        cls_vec = x[0:1, :]                                           # already fxp'd
        z = _fxp(_layernorm(cls_vec, hln_g[...], hln_b[...]))
        o_ref[0] = _fxp(jnp.dot(z, hw_ref[...], preferred_element_type=jnp.float32) + hb_ref[...])


# ----------------------------------------------------------------------------
# pallas_call wrapper
# ----------------------------------------------------------------------------
def _const_spec(shape):
    """Full-array block, same block for every grid point (loaded once)."""
    zeros = (0,) * len(shape)
    return pl.BlockSpec(shape, lambda b, d, _z=zeros: _z)


def _layer_spec(shape):
    """Per-layer block selected by the depth grid axis."""
    zeros = (0,) * (len(shape) - 1)
    return pl.BlockSpec(shape, lambda b, d, _z=zeros: (d,) + _z)


def vit_forward_op(patches, pp, *, heads, dim_head):
    B, n, patch_dim = patches.shape
    dim = pp["patch_w"].shape[1]
    N = n + 1
    depth = pp["qkv_w"].shape[0]
    mlp = pp["ff1_w"].shape[2]
    nc = pp["head_w"].shape[1]
    inner = heads * dim_head
    scale = dim_head ** -0.5
    pos = pp["pos"][:N]

    kernel = functools.partial(_vit_kernel, heads=heads, dim_head=dim_head, scale=scale)

    out = pl.pallas_call(
        kernel,
        grid_spec=pltpu.PrefetchScalarGridSpec(
            num_scalar_prefetch=0,
            grid=(B, depth),
            in_specs=[
                pl.BlockSpec((1, n, patch_dim), lambda b, d: (b, 0, 0)),
                _const_spec((1, patch_dim)), _const_spec((1, patch_dim)),      # LN1
                _const_spec((patch_dim, dim)), _const_spec((1, dim)),          # patch linear
                _const_spec((1, dim)), _const_spec((1, dim)),                  # LN2
                _const_spec((1, dim)),                                         # cls token
                _const_spec((N, dim)),                                         # pos embedding
                _layer_spec((1, 1, dim)), _layer_spec((1, 1, dim)),            # attn LN
                _layer_spec((1, 3 * heads, dim, dim_head)),                    # per-head q/k/v panels
                _layer_spec((1, inner, dim)), _layer_spec((1, 1, dim)),        # projection
                _layer_spec((1, 1, dim)), _layer_spec((1, 1, dim)),            # ff LN
                _layer_spec((1, dim, mlp)), _layer_spec((1, 1, mlp)),          # ff1
                _layer_spec((1, mlp, dim)), _layer_spec((1, 1, dim)),          # ff2
                _const_spec((1, dim)), _const_spec((1, dim)),                  # head LN
                _const_spec((dim, nc)), _const_spec((1, nc)),                  # head linear
            ],
            out_specs=pl.BlockSpec((1, 1, nc), lambda b, d: (b, 0, 0)),
            scratch_shapes=[pltpu.VMEM((N, dim), jnp.float32)],
        ),
        out_shape=jax.ShapeDtypeStruct((B, 1, nc), jnp.float32),
        compiler_params=pltpu.CompilerParams(
            dimension_semantics=("parallel", "arbitrary")),
    )(patches,
      pp["ln1_g"], pp["ln1_b"], pp["patch_w"], pp["patch_b"],
      pp["ln2_g"], pp["ln2_b"], pp["cls"], pos,
      pp["attn_ln_g"], pp["attn_ln_b"], pp["qkv_w"],
      pp["proj_w"], pp["proj_b"], pp["ff_ln_g"], pp["ff_ln_b"],
      pp["ff1_w"], pp["ff1_b"], pp["ff2_w"], pp["ff2_b"],
      pp["head_ln_g"], pp["head_ln_b"], pp["head_w"], pp["head_b"])
    return out.reshape(B, nc)


# ----------------------------------------------------------------------------
# parameters (deterministic synthetic init, torch (out, in) layout)
# ----------------------------------------------------------------------------
def init_params(key, *, channels, patch_size, dim, depth, heads, dim_head,
                mlp_dim, num_patches, num_classes):
    patch_dim = channels * patch_size * patch_size
    inner = heads * dim_head
    keys = iter(jax.random.split(key, 64))

    def nrm(shape, s=0.05):
        return (s * jax.random.normal(next(keys), shape)).astype(jnp.float32)

    params = {
        "ln1_g": jnp.ones((patch_dim,), jnp.float32),
        "ln1_b": jnp.zeros((patch_dim,), jnp.float32),
        "patch_w": nrm((dim, patch_dim)), "patch_b": nrm((dim,)),
        "ln2_g": jnp.ones((dim,), jnp.float32), "ln2_b": jnp.zeros((dim,), jnp.float32),
        "pos": nrm((1, num_patches + 1, dim), 0.1),
        "cls": nrm((1, 1, dim), 0.1),
        "layers": [],
        "head_ln_g": jnp.ones((dim,), jnp.float32),
        "head_ln_b": jnp.zeros((dim,), jnp.float32),
        "head_w": nrm((num_classes, dim)), "head_b": nrm((num_classes,)),
    }
    for _ in range(depth):
        params["layers"].append({
            "attn_ln_g": jnp.ones((dim,), jnp.float32),
            "attn_ln_b": jnp.zeros((dim,), jnp.float32),
            "qkv_w": nrm((inner * 3, dim)),            # no bias in to_qkv
            "proj_w": nrm((dim, inner)), "proj_b": nrm((dim,)),
            "ff_ln_g": jnp.ones((dim,), jnp.float32),
            "ff_ln_b": jnp.zeros((dim,), jnp.float32),
            "ff1_w": nrm((mlp_dim, dim)), "ff1_b": nrm((mlp_dim,)),
            "ff2_w": nrm((dim, mlp_dim)), "ff2_b": nrm((dim,)),
        })
    return params


def prepare_params(params, *, heads, dim_head):
    """One-time relayout outside jit:
       * weights -> (in, out); vectors -> (1, d); pos -> (N, dim)
       * per-layer params stacked into (depth, ...) arrays
       * qkv weights split into contiguous per-head q/k/v panels."""
    t = jnp.transpose
    r = lambda v: v.reshape(1, -1)

    def relayout_qkv(W):                       # torch (3*inner, dim)
        d_model = W.shape[1]
        W = W.reshape(3, heads, dim_head, d_model)       # (t, h, dh, dim)
        W = jnp.transpose(W, (1, 0, 3, 2))               # (h, t, dim, dh)
        return W.reshape(3 * heads, d_model, dim_head)   # index = 3*h + t

    layers = params["layers"]
    p = {
        "ln1_g": r(params["ln1_g"]), "ln1_b": r(params["ln1_b"]),
        "patch_w": t(params["patch_w"]), "patch_b": r(params["patch_b"]),
        "ln2_g": r(params["ln2_g"]), "ln2_b": r(params["ln2_b"]),
        "pos": params["pos"][0],
        "cls": params["cls"].reshape(1, -1),
        "head_ln_g": r(params["head_ln_g"]), "head_ln_b": r(params["head_ln_b"]),
        "head_w": t(params["head_w"]), "head_b": r(params["head_b"]),
        "attn_ln_g": jnp.stack([r(lp["attn_ln_g"]) for lp in layers]),
        "attn_ln_b": jnp.stack([r(lp["attn_ln_b"]) for lp in layers]),
        "qkv_w":     jnp.stack([relayout_qkv(lp["qkv_w"]) for lp in layers]),
        "proj_w":    jnp.stack([t(lp["proj_w"]) for lp in layers]),
        "proj_b":    jnp.stack([r(lp["proj_b"]) for lp in layers]),
        "ff_ln_g":   jnp.stack([r(lp["ff_ln_g"]) for lp in layers]),
        "ff_ln_b":   jnp.stack([r(lp["ff_ln_b"]) for lp in layers]),
        "ff1_w":     jnp.stack([t(lp["ff1_w"]) for lp in layers]),
        "ff1_b":     jnp.stack([r(lp["ff1_b"]) for lp in layers]),
        "ff2_w":     jnp.stack([t(lp["ff2_w"]) for lp in layers]),
        "ff2_b":     jnp.stack([r(lp["ff2_b"]) for lp in layers]),
    }
    return p


# ----------------------------------------------------------------------------
# full forward pass
# ----------------------------------------------------------------------------
def fixed_point_vit_forward(img, w_unused, b_unused, params, *, patch_size, heads, dim_head):
    del w_unused, b_unused  # unused by the reference forward() as well
    B, C, H, W = img.shape
    p = patch_size
    hh, ww = H // p, W // p
    n = hh * ww
    patch_dim = C * p * p

    # Rearrange 'b c (h p1) (w p2) -> b (h w) (p1 p2 c)'.  make_fxp(img) and the
    # make_fxp after the rearrange commute with this pure permutation, so a
    # single fxp is applied inside the kernel (bit-identical).
    x = img.reshape(B, C, hh, p, ww, p)
    x = jnp.transpose(x, (0, 2, 4, 3, 5, 1)).reshape(B, n, patch_dim)
    # TODO(synk): save_signals writes a C header to disk; intentionally omitted.

    return vit_forward_op(x, params, heads=heads, dim_head=dim_head)


# ----------------------------------------------------------------------------
# main
# ----------------------------------------------------------------------------
if __name__ == "__main__":
    key = jax.random.PRNGKey(0)
    k_img, k_par = jax.random.split(key)

    B, C, Himg, Wimg = 2, 3, 16, 16
    patch_size = 8
    dim, depth, heads, dim_head, mlp_dim, num_classes = 32, 2, 2, 16, 64, 10
    num_patches = (Himg // patch_size) * (Wimg // patch_size)

    img = jax.random.normal(k_img, (B, C, Himg, Wimg), jnp.float32)
    params = init_params(
        k_par, channels=C, patch_size=patch_size, dim=dim, depth=depth,
        heads=heads, dim_head=dim_head, mlp_dim=mlp_dim,
        num_patches=num_patches, num_classes=num_classes)
    prepared = prepare_params(params, heads=heads, dim_head=dim_head)  # outside jit

    # forward(img, w, b): `w` and `b` are unused by the reference module.
    w_dummy = jnp.zeros((1,), jnp.float32)
    b_dummy = jnp.zeros((1,), jnp.float32)

    fwd = jax.jit(functools.partial(
        fixed_point_vit_forward,
        patch_size=patch_size, heads=heads, dim_head=dim_head))
    out = jax.block_until_ready(fwd(img, w_dummy, b_dummy, prepared))
    assert out.shape == (B, num_classes)
    print("KERNEL_OK")
</pallas_src>

<mosaic_0001>
module attributes {stable_mosaic.version = 11 : i64} {
  func.func @_vit_kernel(%arg0: i32, %arg1: i32, %arg2: memref<1x4x192xf32, #tpu.memory_space<vmem>>, %arg3: memref<1x192xf32, #tpu.memory_space<vmem>>, %arg4: memref<1x192xf32, #tpu.memory_space<vmem>>, %arg5: memref<192x32xf32, #tpu.memory_space<vmem>>, %arg6: memref<1x32xf32, #tpu.memory_space<vmem>>, %arg7: memref<1x32xf32, #tpu.memory_space<vmem>>, %arg8: memref<1x32xf32, #tpu.memory_space<vmem>>, %arg9: memref<1x32xf32, #tpu.memory_space<vmem>>, %arg10: memref<5x32xf32, #tpu.memory_space<vmem>>, %arg11: memref<1x1x32xf32, #tpu.memory_space<vmem>>, %arg12: memref<1x1x32xf32, #tpu.memory_space<vmem>>, %arg13: memref<1x6x32x16xf32, #tpu.memory_space<vmem>>, %arg14: memref<1x32x32xf32, #tpu.memory_space<vmem>>, %arg15: memref<1x1x32xf32, #tpu.memory_space<vmem>>, %arg16: memref<1x1x32xf32, #tpu.memory_space<vmem>>, %arg17: memref<1x1x32xf32, #tpu.memory_space<vmem>>, %arg18: memref<1x32x64xf32, #tpu.memory_space<vmem>>, %arg19: memref<1x1x64xf32, #tpu.memory_space<vmem>>, %arg20: memref<1x64x32xf32, #tpu.memory_space<vmem>>, %arg21: memref<1x1x32xf32, #tpu.memory_space<vmem>>, %arg22: memref<1x32xf32, #tpu.memory_space<vmem>>, %arg23: memref<1x32xf32, #tpu.memory_space<vmem>>, %arg24: memref<32x10xf32, #tpu.memory_space<vmem>>, %arg25: memref<1x10xf32, #tpu.memory_space<vmem>>, %arg26: memref<1x1x10xf32, #tpu.memory_space<vmem>>, %arg27: memref<5x32xf32, #tpu.memory_space<vmem>>) attributes {dimension_semantics = [#tpu.dimension_semantics<parallel>, #tpu.dimension_semantics<arbitrary>], iteration_bounds = array<i64: 2, 2>, scalar_prefetch = 0 : i64, scratch_operands = 1 : i64, tpu.core_type = #tpu.core_type<tc>, window_params = [{transform_indices = @transform_0, window_bounds = array<i64: 1, 4, 192>}, {pipeline_mode = #tpu.pipeline_mode<synchronous>, transform_indices = @transform_1, window_bounds = array<i64: 1, 192>}, {pipeline_mode = #tpu.pipeline_mode<synchronous>, transform_indices = @transform_2, window_bounds = array<i64: 1, 192>}, {pipeline_mode = #tpu.pipeline_mode<synchronous>, transform_indices = @transform_3, window_bounds = array<i64: 192, 32>}, {pipeline_mode = #tpu.pipeline_mode<synchronous>, transform_indices = @transform_4, window_bounds = array<i64: 1, 32>}, {pipeline_mode = #tpu.pipeline_mode<synchronous>, transform_indices = @transform_5, window_bounds = array<i64: 1, 32>}, {pipeline_mode = #tpu.pipeline_mode<synchronous>, transform_indices = @transform_6, window_bounds = array<i64: 1, 32>}, {pipeline_mode = #tpu.pipeline_mode<synchronous>, transform_indices = @transform_7, window_bounds = array<i64: 1, 32>}, {pipeline_mode = #tpu.pipeline_mode<synchronous>, transform_indices = @transform_8, window_bounds = array<i64: 5, 32>}, {transform_indices = @transform_9, window_bounds = array<i64: 1, 1, 32>}, {transform_indices = @transform_10, window_bounds = array<i64: 1, 1, 32>}, {transform_indices = @transform_11, window_bounds = array<i64: 1, 6, 32, 16>}, {transform_indices = @transform_12, window_bounds = array<i64: 1, 32, 32>}, {transform_indices = @transform_13, window_bounds = array<i64: 1, 1, 32>}, {transform_indices = @transform_14, window_bounds = array<i64: 1, 1, 32>}, {transform_indices = @transform_15, window_bounds = array<i64: 1, 1, 32>}, {transform_indices = @transform_16, window_bounds = array<i64: 1, 32, 64>}, {transform_indices = @transform_17, window_bounds = array<i64: 1, 1, 64>}, {transform_indices = @transform_18, window_bounds = array<i64: 1, 64, 32>}, {transform_indices = @transform_19, window_bounds = array<i64: 1, 1, 32>}, {pipeline_mode = #tpu.pipeline_mode<synchronous>, transform_indices = @transform_20, window_bounds = array<i64: 1, 32>}, {pipeline_mode = #tpu.pipeline_mode<synchronous>, transform_indices = @transform_21, window_bounds = array<i64: 1, 32>}, {pipeline_mode = #tpu.pipeline_mode<synchronous>, transform_indices = @transform_22, window_bounds = array<i64: 32, 10>}, {pipeline_mode = #tpu.pipeline_mode<synchronous>, transform_indices = @transform_23, window_bounds = array<i64: 1, 10>}, {transform_indices = @transform_24, window_bounds = array<i64: 1, 1, 10>}]} {
    %c0_i32 = arith.constant 0 : i32
    %0 = arith.cmpi eq, %arg1, %c0_i32 : i32
    %1 = arith.extui %0 : i1 to i32
    %c0_i32_0 = arith.constant 0 : i32
    %2 = arith.cmpi ne, %1, %c0_i32_0 : i32
    scf.if %2 {
      %c0_178 = arith.constant 0 : index
      %c0_179 = arith.constant 0 : index
      %c0_180 = arith.constant 0 : index
      %365 = vector.load %arg2[%c0_178, %c0_179, %c0_180] : memref<1x4x192xf32, #tpu.memory_space<vmem>>, vector<1x4x192xf32>
      %366 = vector.shape_cast %365 : vector<1x4x192xf32> to vector<4x192xf32>
      %cst_181 = arith.constant -7.99975586 : f32
      %cst_182 = arith.constant 7.99975586 : f32
      %367 = vector.broadcast %cst_181 : f32 to vector<4x192xf32>
      %368 = arith.maximumf %367, %366 : vector<4x192xf32>
      %369 = vector.broadcast %cst_182 : f32 to vector<4x192xf32>
      %370 = arith.minimumf %369, %368 : vector<4x192xf32>
      %cst_183 = arith.constant 4.096000e+03 : f32
      %371 = vector.broadcast %cst_183 : f32 to vector<4x192xf32>
      %372 = arith.mulf %370, %371 : vector<4x192xf32>
      %373 = arith.fptosi %372 : vector<4x192xf32> to vector<4x192xi32>
      %374 = arith.sitofp %373 : vector<4x192xi32> to vector<4x192xf32>
      %cst_184 = arith.constant 2.44140625E-4 : f32
      %375 = vector.broadcast %cst_184 : f32 to vector<4x192xf32>
      %376 = arith.mulf %374, %375 : vector<4x192xf32>
      %c0_185 = arith.constant 0 : index
      %c0_186 = arith.constant 0 : index
      %377 = vector.load %arg3[%c0_185, %c0_186] : memref<1x192xf32, #tpu.memory_space<vmem>>, vector<1x192xf32>
      %c0_187 = arith.constant 0 : index
      %c0_188 = arith.constant 0 : index
      %378 = vector.load %arg4[%c0_187, %c0_188] : memref<1x192xf32, #tpu.memory_space<vmem>>, vector<1x192xf32>
      %cst_189 = arith.constant dense<0.000000e+00> : vector<4xf32>
      %379 = vector.multi_reduction <add>, %376, %cst_189 [1] : vector<4x192xf32> to vector<4xf32>
      %380 = vector.shape_cast %379 : vector<4xf32> to vector<4x1xf32>
      %cst_190 = arith.constant 1.920000e+02 : f32
      %381 = vector.broadcast %cst_190 : f32 to vector<4x1xf32>
      %382 = arith.divf %380, %381 : vector<4x1xf32>
      %383 = vector.broadcast %382 : vector<4x1xf32> to vector<4x192xf32>
      %384 = arith.subf %376, %383 : vector<4x192xf32>
      %385 = arith.mulf %384, %384 : vector<4x192xf32>
      %cst_191 = arith.constant dense<0.000000e+00> : vector<4xf32>
      %386 = vector.multi_reduction <add>, %385, %cst_191 [1] : vector<4x192xf32> to vector<4xf32>
      %387 = vector.shape_cast %386 : vector<4xf32> to vector<4x1xf32>
      %cst_192 = arith.constant 1.920000e+02 : f32
      %388 = vector.broadcast %cst_192 : f32 to vector<4x1xf32>
      %389 = arith.divf %387, %388 : vector<4x1xf32>
      %cst_193 = arith.constant 9.99999974E-6 : f32
      %390 = vector.broadcast %cst_193 : f32 to vector<4x1xf32>
      %391 = arith.addf %389, %390 : vector<4x1xf32>
      %392 = math.rsqrt %391 : vector<4x1xf32>
      %393 = vector.broadcast %392 : vector<4x1xf32> to vector<4x192xf32>
      %394 = arith.mulf %384, %393 : vector<4x192xf32>
      %395 = vector.broadcast %377 : vector<1x192xf32> to vector<4x192xf32>
      %396 = arith.mulf %394, %395 : vector<4x192xf32>
      %397 = vector.broadcast %378 : vector<1x192xf32> to vector<4x192xf32>
      %398 = arith.addf %396, %397 : vector<4x192xf32>
      %cst_194 = arith.constant -7.99975586 : f32
      %cst_195 = arith.constant 7.99975586 : f32
      %399 = vector.broadcast %cst_194 : f32 to vector<4x192xf32>
      %400 = arith.maximumf %399, %398 : vector<4x192xf32>
      %401 = vector.broadcast %cst_195 : f32 to vector<4x192xf32>
      %402 = arith.minimumf %401, %400 : vector<4x192xf32>
      %cst_196 = arith.constant 4.096000e+03 : f32
      %403 = vector.broadcast %cst_196 : f32 to vector<4x192xf32>
      %404 = arith.mulf %402, %403 : vector<4x192xf32>
      %405 = arith.fptosi %404 : vector<4x192xf32> to vector<4x192xi32>
      %406 = arith.sitofp %405 : vector<4x192xi32> to vector<4x192xf32>
      %cst_197 = arith.constant 2.44140625E-4 : f32
      %407 = vector.broadcast %cst_197 : f32 to vector<4x192xf32>
      %408 = arith.mulf %406, %407 : vector<4x192xf32>
      %c0_198 = arith.constant 0 : index
      %c0_199 = arith.constant 0 : index
      %409 = vector.load %arg5[%c0_198, %c0_199] : memref<192x32xf32, #tpu.memory_space<vmem>>, vector<192x32xf32>
      %cst_200 = arith.constant dense<0.000000e+00> : vector<4x32xf32>
      %410 = tpu.matmul %408, %409, %cst_200 {dimension_numbers = #tpu.dot_dimension_numbers<[1], [0], [0], [1], [0, 0, 1, 1], [], []>} : vector<4x192xf32>, vector<192x32xf32>, vector<4x32xf32> -> vector<4x32xf32>
      %c0_201 = arith.constant 0 : index
      %c0_202 = arith.constant 0 : index
      %411 = vector.load %arg6[%c0_201, %c0_202] : memref<1x32xf32, #tpu.memory_space<vmem>>, vector<1x32xf32>
      %412 = vector.broadcast %411 : vector<1x32xf32> to vector<4x32xf32>
      %413 = arith.addf %410, %412 : vector<4x32xf32>
      %cst_203 = arith.constant -7.99975586 : f32
      %cst_204 = arith.constant 7.99975586 : f32
      %414 = vector.broadcast %cst_203 : f32 to vector<4x32xf32>
      %415 = arith.maximumf %414, %413 : vector<4x32xf32>
      %416 = vector.broadcast %cst_204 : f32 to vector<4x32xf32>
      %417 = arith.minimumf %416, %415 : vector<4x32xf32>
      %cst_205 = arith.constant 4.096000e+03 : f32
      %418 = vector.broadcast %cst_205 : f32 to vector<4x32xf32>
      %419 = arith.mulf %417, %418 : vector<4x32xf32>
      %420 = arith.fptosi %419 : vector<4x32xf32> to vector<4x32xi32>
      %421 = arith.sitofp %420 : vector<4x32xi32> to vector<4x32xf32>
      %cst_206 = arith.constant 2.44140625E-4 : f32
      %422 = vector.broadcast %cst_206 : f32 to vector<4x32xf32>
      %423 = arith.mulf %421, %422 : vector<4x32xf32>
      %c0_207 = arith.constant 0 : index
      %c0_208 = arith.constant 0 : index
      %424 = vector.load %arg7[%c0_207, %c0_208] : memref<1x32xf32, #tpu.memory_space<vmem>>, vector<1x32xf32>
      %c0_209 = arith.constant 0 : index
      %c0_210 = arith.constant 0 : index
      %425 = vector.load %arg8[%c0_209, %c0_210] : memref<1x32xf32, #tpu.memory_space<vmem>>, vector<1x32xf32>
      %cst_211 = arith.constant dense<0.000000e+00> : vector<4xf32>
      %426 = vector.multi_reduction <add>, %423, %cst_211 [1] : vector<4x32xf32> to vector<4xf32>
      %427 = vector.shape_cast %426 : vector<4xf32> to vector<4x1xf32>
      %cst_212 = arith.constant 3.200000e+01 : f32
      %428 = vector.broadcast %cst_212 : f32 to vector<4x1xf32>
      %429 = arith.divf %427, %428 : vector<4x1xf32>
      %430 = vector.broadcast %429 : vector<4x1xf32> to vector<4x32xf32>
      %431 = arith.subf %423, %430 : vector<4x32xf32>
      %432 = arith.mulf %431, %431 : vector<4x32xf32>
      %cst_213 = arith.constant dense<0.000000e+00> : vector<4xf32>
      %433 = vector.multi_reduction <add>, %432, %cst_213 [1] : vector<4x32xf32> to vector<4xf32>
      %434 = vector.shape_cast %433 : vector<4xf32> to vector<4x1xf32>
      %cst_214 = arith.constant 3.200000e+01 : f32
      %435 = vector.broadcast %cst_214 : f32 to vector<4x1xf32>
      %436 = arith.divf %434, %435 : vector<4x1xf32>
      %cst_215 = arith.constant 9.99999974E-6 : f32
      %437 = vector.broadcast %cst_215 : f32 to vector<4x1xf32>
      %438 = arith.addf %436, %437 : vector<4x1xf32>
      %439 = math.rsqrt %438 : vector<4x1xf32>
      %440 = vector.broadcast %439 : vector<4x1xf32> to vector<4x32xf32>
      %441 = arith.mulf %431, %440 : vector<4x32xf32>
      %442 = vector.broadcast %424 : vector<1x32xf32> to vector<4x32xf32>
      %443 = arith.mulf %441, %442 : vector<4x32xf32>
      %444 = vector.broadcast %425 : vector<1x32xf32> to vector<4x32xf32>
      %445 = arith.addf %443, %444 : vector<4x32xf32>
      %cst_216 = arith.constant -7.99975586 : f32
      %cst_217 = arith.constant 7.99975586 : f32
      %446 = vector.broadcast %cst_216 : f32 to vector<4x32xf32>
      %447 = arith.maximumf %446, %445 : vector<4x32xf32>
      %448 = vector.broadcast %cst_217 : f32 to vector<4x32xf32>
      %449 = arith.minimumf %448, %447 : vector<4x32xf32>
      %cst_218 = arith.constant 4.096000e+03 : f32
      %450 = vector.broadcast %cst_218 : f32 to vector<4x32xf32>
      %451 = arith.mulf %449, %450 : vector<4x32xf32>
      %452 = arith.fptosi %451 : vector<4x32xf32> to vector<4x32xi32>
      %453 = arith.sitofp %452 : vector<4x32xi32> to vector<4x32xf32>
      %cst_219 = arith.constant 2.44140625E-4 : f32
      %454 = vector.broadcast %cst_219 : f32 to vector<4x32xf32>
      %455 = arith.mulf %453, %454 : vector<4x32xf32>
      %c0_220 = arith.constant 0 : index
      %c0_221 = arith.constant 0 : index
      %456 = vector.load %arg10[%c0_220, %c0_221] : memref<5x32xf32, #tpu.memory_space<vmem>>, vector<5x32xf32>
      %c0_222 = arith.constant 0 : index
      %c0_223 = arith.constant 0 : index
      %457 = vector.load %arg9[%c0_222, %c0_223] : memref<1x32xf32, #tpu.memory_space<vmem>>, vector<1x32xf32>
      %458 = vector.extract_strided_slice %456 {offsets = [0, 0], sizes = [1, 32], strides = [1, 1]} : vector<5x32xf32> to vector<1x32xf32>
      %459 = arith.addf %457, %458 : vector<1x32xf32>
      %cst_224 = arith.constant -7.99975586 : f32
      %cst_225 = arith.constant 7.99975586 : f32
      %460 = vector.broadcast %cst_224 : f32 to vector<1x32xf32>
      %461 = arith.maximumf %460, %459 : vector<1x32xf32>
      %462 = vector.broadcast %cst_225 : f32 to vector<1x32xf32>
      %463 = arith.minimumf %462, %461 : vector<1x32xf32>
      %cst_226 = arith.constant 4.096000e+03 : f32
      %464 = vector.broadcast %cst_226 : f32 to vector<1x32xf32>
      %465 = arith.mulf %463, %464 : vector<1x32xf32>
      %466 = arith.fptosi %465 : vector<1x32xf32> to vector<1x32xi32>
      %467 = arith.sitofp %466 : vector<1x32xi32> to vector<1x32xf32>
      %cst_227 = arith.constant 2.44140625E-4 : f32
      %468 = vector.broadcast %cst_227 : f32 to vector<1x32xf32>
      %469 = arith.mulf %467, %468 : vector<1x32xf32>
      %c0_228 = arith.constant 0 : index
      %c0_229 = arith.constant 0 : index
      %470 = vector.load %arg27[%c0_228, %c0_229] : memref<5x32xf32, #tpu.memory_space<vmem>>, vector<1x32xf32>
      tpu.vector_store %arg27[%c0_228, %c0_229], %469 {strides = array<i32>} : memref<5x32xf32, #tpu.memory_space<vmem>>, vector<1x32xf32>,
      %471 = vector.extract_strided_slice %456 {offsets = [1, 0], sizes = [4, 32], strides = [1, 1]} : vector<5x32xf32> to vector<4x32xf32>
      %472 = arith.addf %455, %471 : vector<4x32xf32>
      %cst_230 = arith.constant -7.99975586 : f32
      %cst_231 = arith.constant 7.99975586 : f32
      %473 = vector.broadcast %cst_230 : f32 to vector<4x32xf32>
      %474 = arith.maximumf %473, %472 : vector<4x32xf32>
      %475 = vector.broadcast %cst_231 : f32 to vector<4x32xf32>
      %476 = arith.minimumf %475, %474 : vector<4x32xf32>
      %cst_232 = arith.constant 4.096000e+03 : f32
      %477 = vector.broadcast %cst_232 : f32 to vector<4x32xf32>
      %478 = arith.mulf %476, %477 : vector<4x32xf32>
      %479 = arith.fptosi %478 : vector<4x32xf32> to vector<4x32xi32>
      %480 = arith.sitofp %479 : vector<4x32xi32> to vector<4x32xf32>
      %cst_233 = arith.constant 2.44140625E-4 : f32
      %481 = vector.broadcast %cst_233 : f32 to vector<4x32xf32>
      %482 = arith.mulf %480, %481 : vector<4x32xf32>
      %c1_234 = arith.constant 1 : index
      %c0_235 = arith.constant 0 : index
      %483 = vector.load %arg27[%c1_234, %c0_235] : memref<5x32xf32, #tpu.memory_space<vmem>>, vector<4x32xf32>
      tpu.vector_store %arg27[%c1_234, %c0_235], %482 {strides = array<i32>} : memref<5x32xf32, #tpu.memory_space<vmem>>, vector<4x32xf32>,
    } else {
    }
    %c0 = arith.constant 0 : index
    %c0_1 = arith.constant 0 : index
    %3 = vector.load %arg27[%c0, %c0_1] : memref<5x32xf32, #tpu.memory_space<vmem>>, vector<5x32xf32>
    %c0_2 = arith.constant 0 : index
    %c0_3 = arith.constant 0 : index
    %c0_4 = arith.constant 0 : index
    %4 = vector.load %arg11[%c0_2, %c0_3, %c0_4] : memref<1x1x32xf32, #tpu.memory_space<vmem>>, vector<1x1x32xf32>
    %5 = vector.shape_cast %4 : vector<1x1x32xf32> to vector<1x32xf32>
    %c0_5 = arith.constant 0 : index
    %c0_6 = arith.constant 0 : index
    %c0_7 = arith.constant 0 : index
    %6 = vector.load %arg12[%c0_5, %c0_6, %c0_7] : memref<1x1x32xf32, #tpu.memory_space<vmem>>, vector<1x1x32xf32>
    %7 = vector.shape_cast %6 : vector<1x1x32xf32> to vector<1x32xf32>
    %cst = arith.constant dense<0.000000e+00> : vector<5xf32>
    %8 = vector.multi_reduction <add>, %3, %cst [1] : vector<5x32xf32> to vector<5xf32>
    %9 = vector.shape_cast %8 : vector<5xf32> to vector<5x1xf32>
    %cst_8 = arith.constant 3.200000e+01 : f32
    %10 = vector.broadcast %cst_8 : f32 to vector<5x1xf32>
    %11 = arith.divf %9, %10 : vector<5x1xf32>
    %12 = vector.broadcast %11 : vector<5x1xf32> to vector<5x32xf32>
    %13 = arith.subf %3, %12 : vector<5x32xf32>
    %14 = arith.mulf %13, %13 : vector<5x32xf32>
    %cst_9 = arith.constant dense<0.000000e+00> : vector<5xf32>
    %15 = vector.multi_reduction <add>, %14, %cst_9 [1] : vector<5x32xf32> to vector<5xf32>
    %16 = vector.shape_cast %15 : vector<5xf32> to vector<5x1xf32>
    %cst_10 = arith.constant 3.200000e+01 : f32
    %17 = vector.broadcast %cst_10 : f32 to vector<5x1xf32>
    %18 = arith.divf %16, %17 : vector<5x1xf32>
    %cst_11 = arith.constant 9.99999974E-6 : f32
    %19 = vector.broadcast %cst_11 : f32 to vector<5x1xf32>
    %20 = arith.addf %18, %19 : vector<5x1xf32>
    %21 = math.rsqrt %20 : vector<5x1xf32>
    %22 = vector.broadcast %21 : vector<5x1xf32> to vector<5x32xf32>
    %23 = arith.mulf %13, %22 : vector<5x32xf32>
    %24 = vector.broadcast %5 : vector<1x32xf32> to vector<5x32xf32>
    %25 = arith.mulf %23, %24 : vector<5x32xf32>
    %26 = vector.broadcast %7 : vector<1x32xf32> to vector<5x32xf32>
    %27 = arith.addf %25, %26 : vector<5x32xf32>
    %cst_12 = arith.constant -7.99975586 : f32
    %cst_13 = arith.constant 7.99975586 : f32
    %28 = vector.broadcast %cst_12 : f32 to vector<5x32xf32>
    %29 = arith.maximumf %28, %27 : vector<5x32xf32>
    %30 = vector.broadcast %cst_13 : f32 to vector<5x32xf32>
    %31 = arith.minimumf %30, %29 : vector<5x32xf32>
    %cst_14 = arith.constant 4.096000e+03 : f32
    %32 = vector.broadcast %cst_14 : f32 to vector<5x32xf32>
    %33 = arith.mulf %31, %32 : vector<5x32xf32>
    %34 = arith.fptosi %33 : vector<5x32xf32> to vector<5x32xi32>
    %35 = arith.sitofp %34 : vector<5x32xi32> to vector<5x32xf32>
    %cst_15 = arith.constant 2.44140625E-4 : f32
    %36 = vector.broadcast %cst_15 : f32 to vector<5x32xf32>
    %37 = arith.mulf %35, %36 : vector<5x32xf32>
    %c0_16 = arith.constant 0 : index
    %c0_17 = arith.constant 0 : index
    %c0_18 = arith.constant 0 : index
    %c0_19 = arith.constant 0 : index
    %38 = vector.load %arg13[%c0_16, %c0_17, %c0_18, %c0_19] : memref<1x6x32x16xf32, #tpu.memory_space<vmem>>, vector<1x1x32x16xf32>
    %39 = vector.shape_cast %38 : vector<1x1x32x16xf32> to vector<32x16xf32>
    %cst_20 = arith.constant dense<0.000000e+00> : vector<5x16xf32>
    %40 = tpu.matmul %37, %39, %cst_20 {dimension_numbers = #tpu.dot_dimension_numbers<[1], [0], [0], [1], [0, 0, 1, 1], [], []>} : vector<5x32xf32>, vector<32x16xf32>, vector<5x16xf32> -> vector<5x16xf32>
    %cst_21 = arith.constant -7.99975586 : f32
    %cst_22 = arith.constant 7.99975586 : f32
    %41 = vector.broadcast %cst_21 : f32 to vector<5x16xf32>
    %42 = arith.maximumf %41, %40 : vector<5x16xf32>
    %43 = vector.broadcast %cst_22 : f32 to vector<5x16xf32>
    %44 = arith.minimumf %43, %42 : vector<5x16xf32>
    %cst_23 = arith.constant 4.096000e+03 : f32
    %45 = vector.broadcast %cst_23 : f32 to vector<5x16xf32>
    %46 = arith.mulf %44, %45 : vector<5x16xf32>
    %47 = arith.fptosi %46 : vector<5x16xf32> to vector<5x16xi32>
    %48 = arith.sitofp %47 : vector<5x16xi32> to vector<5x16xf32>
    %cst_24 = arith.constant 2.44140625E-4 : f32
    %49 = vector.broadcast %cst_24 : f32 to vector<5x16xf32>
    %50 = arith.mulf %48, %49 : vector<5x16xf32>
    %c0_25 = arith.constant 0 : index
    %c1 = arith.constant 1 : index
    %c0_26 = arith.constant 0 : index
    %c0_27 = arith.constant 0 : index
    %51 = vector.load %arg13[%c0_25, %c1, %c0_26, %c0_27] : memref<1x6x32x16xf32, #tpu.memory_space<vmem>>, vector<1x1x32x16xf32>
    %52 = vector.shape_cast %51 : vector<1x1x32x16xf32> to vector<32x16xf32>
    %cst_28 = arith.constant dense<0.000000e+00> : vector<5x16xf32>
    %53 = tpu.matmul %37, %52, %cst_28 {dimension_numbers = #tpu.dot_dimension_numbers<[1], [0], [0], [1], [0, 0, 1, 1], [], []>} : vector<5x32xf32>, vector<32x16xf32>, vector<5x16xf32> -> vector<5x16xf32>
    %cst_29 = arith.constant -7.99975586 : f32
    %cst_30 = arith.constant 7.99975586 : f32
    %54 = vector.broadcast %cst_29 : f32 to vector<5x16xf32>
    %55 = arith.maximumf %54, %53 : vector<5x16xf32>
    %56 = vector.broadcast %cst_30 : f32 to vector<5x16xf32>
    %57 = arith.minimumf %56, %55 : vector<5x16xf32>
    %cst_31 = arith.constant 4.096000e+03 : f32
    %58 = vector.broadcast %cst_31 : f32 to vector<5x16xf32>
    %59 = arith.mulf %57, %58 : vector<5x16xf32>
    %60 = arith.fptosi %59 : vector<5x16xf32> to vector<5x16xi32>
    %61 = arith.sitofp %60 : vector<5x16xi32> to vector<5x16xf32>
    %cst_32 = arith.constant 2.44140625E-4 : f32
    %62 = vector.broadcast %cst_32 : f32 to vector<5x16xf32>
    %63 = arith.mulf %61, %62 : vector<5x16xf32>
    %c0_33 = arith.constant 0 : index
    %c2 = arith.constant 2 : index
    %c0_34 = arith.constant 0 : index
    %c0_35 = arith.constant 0 : index
    %64 = vector.load %arg13[%c0_33, %c2, %c0_34, %c0_35] : memref<1x6x32x16xf32, #tpu.memory_space<vmem>>, vector<1x1x32x16xf32>
    %65 = vector.shape_cast %64 : vector<1x1x32x16xf32> to vector<32x16xf32>
    %cst_36 = arith.constant dense<0.000000e+00> : vector<5x16xf32>
    %66 = tpu.matmul %37, %65, %cst_36 {dimension_numbers = #tpu.dot_dimension_numbers<[1], [0], [0], [1], [0, 0, 1, 1], [], []>} : vector<5x32xf32>, vector<32x16xf32>, vector<5x16xf32> -> vector<5x16xf32>
    %cst_37 = arith.constant -7.99975586 : f32
    %cst_38 = arith.constant 7.99975586 : f32
    %67 = vector.broadcast %cst_37 : f32 to vector<5x16xf32>
    %68 = arith.maximumf %67, %66 : vector<5x16xf32>
    %69 = vector.broadcast %cst_38 : f32 to vector<5x16xf32>
    %70 = arith.minimumf %69, %68 : vector<5x16xf32>
    %cst_39 = arith.constant 4.096000e+03 : f32
    %71 = vector.broadcast %cst_39 : f32 to vector<5x16xf32>
    %72 = arith.mulf %70, %71 : vector<5x16xf32>
    %73 = arith.fptosi %72 : vector<5x16xf32> to vector<5x16xi32>
    %74 = arith.sitofp %73 : vector<5x16xi32> to vector<5x16xf32>
    %cst_40 = arith.constant 2.44140625E-4 : f32
    %75 = vector.broadcast %cst_40 : f32 to vector<5x16xf32>
    %76 = arith.mulf %74, %75 : vector<5x16xf32>
    %cst_41 = arith.constant dense<0.000000e+00> : vector<5x5xf32>
    %77 = tpu.matmul %50, %63, %cst_41 {dimension_numbers = #tpu.dot_dimension_numbers<[1], [1], [0], [0], [0, 0, 1, 0], [], []>} : vector<5x16xf32>, vector<5x16xf32>, vector<5x5xf32> -> vector<5x5xf32>
    %cst_42 = arith.constant 2.500000e-01 : f32
    %78 = vector.broadcast %cst_42 : f32 to vector<5x5xf32>
    %79 = arith.mulf %77, %78 : vector<5x5xf32>
    %cst_43 = arith.constant -7.99975586 : f32
    %cst_44 = arith.constant 7.99975586 : f32
    %80 = vector.broadcast %cst_43 : f32 to vector<5x5xf32>
    %81 = arith.maximumf %80, %79 : vector<5x5xf32>
    %82 = vector.broadcast %cst_44 : f32 to vector<5x5xf32>
    %83 = arith.minimumf %82, %81 : vector<5x5xf32>
    %cst_45 = arith.constant 4.096000e+03 : f32
    %84 = vector.broadcast %cst_45 : f32 to vector<5x5xf32>
    %85 = arith.mulf %83, %84 : vector<5x5xf32>
    %86 = arith.fptosi %85 : vector<5x5xf32> to vector<5x5xi32>
    %87 = arith.sitofp %86 : vector<5x5xi32> to vector<5x5xf32>
    %cst_46 = arith.constant 2.44140625E-4 : f32
    %88 = vector.broadcast %cst_46 : f32 to vector<5x5xf32>
    %89 = arith.mulf %87, %88 : vector<5x5xf32>
    %cst_47 = arith.constant dense<0xFF800000> : vector<5xf32>
    %90 = vector.multi_reduction <maximumf>, %89, %cst_47 [1] : vector<5x5xf32> to vector<5xf32>
    %91 = vector.shape_cast %90 : vector<5xf32> to vector<5x1xf32>
    %92 = vector.broadcast %91 : vector<5x1xf32> to vector<5x5xf32>
    %93 = arith.subf %89, %92 : vector<5x5xf32>
    %94 = math.exp %93 : vector<5x5xf32>
    %cst_48 = arith.constant dense<0.000000e+00> : vector<5xf32>
    %95 = vector.multi_reduction <add>, %94, %cst_48 [1] : vector<5x5xf32> to vector<5xf32>
    %96 = vector.shape_cast %95 : vector<5xf32> to vector<5x1xf32>
    %97 = vector.broadcast %96 : vector<5x1xf32> to vector<5x5xf32>
    %98 = arith.divf %94, %97 : vector<5x5xf32>
    %cst_49 = arith.constant -7.99975586 : f32
    %cst_50 = arith.constant 7.99975586 : f32
    %99 = vector.broadcast %cst_49 : f32 to vector<5x5xf32>
    %100 = arith.maximumf %99, %98 : vector<5x5xf32>
    %101 = vector.broadcast %cst_50 : f32 to vector<5x5xf32>
    %102 = arith.minimumf %101, %100 : vector<5x5xf32>
    %cst_51 = arith.constant 4.096000e+03 : f32
    %103 = vector.broadcast %cst_51 : f32 to vector<5x5xf32>
    %104 = arith.mulf %102, %103 : vector<5x5xf32>
    %105 = arith.fptosi %104 : vector<5x5xf32> to vector<5x5xi32>
    %106 = arith.sitofp %105 : vector<5x5xi32> to vector<5x5xf32>
    %cst_52 = arith.constant 2.44140625E-4 : f32
    %107 = vector.broadcast %cst_52 : f32 to vector<5x5xf32>
    %108 = arith.mulf %106, %107 : vector<5x5xf32>
    %cst_53 = arith.constant dense<0.000000e+00> : vector<5x16xf32>
    %109 = tpu.matmul %108, %76, %cst_53 {dimension_numbers = #tpu.dot_dimension_numbers<[1], [0], [0], [1], [0, 0, 1, 1], [], []>} : vector<5x5xf32>, vector<5x16xf32>, vector<5x16xf32> -> vector<5x16xf32>
    %cst_54 = arith.constant -7.99975586 : f32
    %cst_55 = arith.constant 7.99975586 : f32
    %110 = vector.broadcast %cst_54 : f32 to vector<5x16xf32>
    %111 = arith.maximumf %110, %109 : vector<5x16xf32>
    %112 = vector.broadcast %cst_55 : f32 to vector<5x16xf32>
    %113 = arith.minimumf %112, %111 : vector<5x16xf32>
    %cst_56 = arith.constant 4.096000e+03 : f32
    %114 = vector.broadcast %cst_56 : f32 to vector<5x16xf32>
    %115 = arith.mulf %113, %114 : vector<5x16xf32>
    %116 = arith.fptosi %115 : vector<5x16xf32> to vector<5x16xi32>
    %117 = arith.sitofp %116 : vector<5x16xi32> to vector<5x16xf32>
    %cst_57 = arith.constant 2.44140625E-4 : f32
    %118 = vector.broadcast %cst_57 : f32 to vector<5x16xf32>
    %119 = arith.mulf %117, %118 : vector<5x16xf32>
    %c0_58 = arith.constant 0 : index
    %c3 = arith.constant 3 : index
    %c0_59 = arith.constant 0 : index
    %c0_60 = arith.constant 0 : index
    %120 = vector.load %arg13[%c0_58, %c3, %c0_59, %c0_60] : memref<1x6x32x16xf32, #tpu.memory_space<vmem>>, vector<1x1x32x16xf32>
    %121 = vector.shape_cast %120 : vector<1x1x32x16xf32> to vector<32x16xf32>
    %cst_61 = arith.constant dense<0.000000e+00> : vector<5x16xf32>
    %122 = tpu.matmul %37, %121, %cst_61 {dimension_numbers = #tpu.dot_dimension_numbers<[1], [0], [0], [1], [0, 0, 1, 1], [], []>} : vector<5x32xf32>, vector<32x16xf32>, vector<5x16xf32> -> vector<5x16xf32>
    %cst_62 = arith.constant -7.99975586 : f32
    %cst_63 = arith.constant 7.99975586 : f32
    %123 = vector.broadcast %cst_62 : f32 to vector<5x16xf32>
    %124 = arith.maximumf %123, %122 : vector<5x16xf32>
    %125 = vector.broadcast %cst_63 : f32 to vector<5x16xf32>
    %126 = arith.minimumf %125, %124 : vector<5x16xf32>
    %cst_64 = arith.constant 4.096000e+03 : f32
    %127 = vector.broadcast %cst_64 : f32 to vector<5x16xf32>
    %128 = arith.mulf %126, %127 : vector<5x16xf32>
    %129 = arith.fptosi %128 : vector<5x16xf32> to vector<5x16xi32>
    %130 = arith.sitofp %129 : vector<5x16xi32> to vector<5x16xf32>
    %cst_65 = arith.constant 2.44140625E-4 : f32
    %131 = vector.broadcast %cst_65 : f32 to vector<5x16xf32>
    %132 = arith.mulf %130, %131 : vector<5x16xf32>
    %c0_66 = arith.constant 0 : index
    %c4 = arith.constant 4 : index
    %c0_67 = arith.constant 0 : index
    %c0_68 = arith.constant 0 : index
    %133 = vector.load %arg13[%c0_66, %c4, %c0_67, %c0_68] : memref<1x6x32x16xf32, #tpu.memory_space<vmem>>, vector<1x1x32x16xf32>
    %134 = vector.shape_cast %133 : vector<1x1x32x16xf32> to vector<32x16xf32>
    %cst_69 = arith.constant dense<0.000000e+00> : vector<5x16xf32>
    %135 = tpu.matmul %37, %134, %cst_69 {dimension_numbers = #tpu.dot_dimension_numbers<[1], [0], [0], [1], [0, 0, 1, 1], [], []>} : vector<5x32xf32>, vector<32x16xf32>, vector<5x16xf32> -> vector<5x16xf32>
    %cst_70 = arith.constant -7.99975586 : f32
    %cst_71 = arith.constant 7.99975586 : f32
    %136 = vector.broadcast %cst_70 : f32 to vector<5x16xf32>
    %137 = arith.maximumf %136, %135 : vector<5x16xf32>
    %138 = vector.broadcast %cst_71 : f32 to vector<5x16xf32>
    %139 = arith.minimumf %138, %137 : vector<5x16xf32>
    %cst_72 = arith.constant 4.096000e+03 : f32
    %140 = vector.broadcast %cst_72 : f32 to vector<5x16xf32>
    %141 = arith.mulf %139, %140 : vector<5x16xf32>
    %142 = arith.fptosi %141 : vector<5x16xf32> to vector<5x16xi32>
    %143 = arith.sitofp %142 : vector<5x16xi32> to vector<5x16xf32>
    %cst_73 = arith.constant 2.44140625E-4 : f32
    %144 = vector.broadcast %cst_73 : f32 to vector<5x16xf32>
    %145 = arith.mulf %143, %144 : vector<5x16xf32>
    %c0_74 = arith.constant 0 : index
    %c5 = arith.constant 5 : index
    %c0_75 = arith.constant 0 : index
    %c0_76 = arith.constant 0 : index
    %146 = vector.load %arg13[%c0_74, %c5, %c0_75, %c0_76] : memref<1x6x32x16xf32, #tpu.memory_space<vmem>>, vector<1x1x32x16xf32>
    %147 = vector.shape_cast %146 : vector<1x1x32x16xf32> to vector<32x16xf32>
    %cst_77 = arith.constant dense<0.000000e+00> : vector<5x16xf32>
    %148 = tpu.matmul %37, %147, %cst_77 {dimension_numbers = #tpu.dot_dimension_numbers<[1], [0], [0], [1], [0, 0, 1, 1], [], []>} : vector<5x32xf32>, vector<32x16xf32>, vector<5x16xf32> -> vector<5x16xf32>
    %cst_78 = arith.constant -7.99975586 : f32
    %cst_79 = arith.constant 7.99975586 : f32
    %149 = vector.broadcast %cst_78 : f32 to vector<5x16xf32>
    %150 = arith.maximumf %149, %148 : vector<5x16xf32>
    %151 = vector.broadcast %cst_79 : f32 to vector<5x16xf32>
    %152 = arith.minimumf %151, %150 : vector<5x16xf32>
    %cst_80 = arith.constant 4.096000e+03 : f32
    %153 = vector.broadcast %cst_80 : f32 to vector<5x16xf32>
    %154 = arith.mulf %152, %153 : vector<5x16xf32>
    %155 = arith.fptosi %154 : vector<5x16xf32> to vector<5x16xi32>
    %156 = arith.sitofp %155 : vector<5x16xi32> to vector<5x16xf32>
    %cst_81 = arith.constant 2.44140625E-4 : f32
    %157 = vector.broadcast %cst_81 : f32 to vector<5x16xf32>
    %158 = arith.mulf %156, %157 : vector<5x16xf32>
    %cst_82 = arith.constant dense<0.000000e+00> : vector<5x5xf32>
    %159 = tpu.matmul %132, %145, %cst_82 {dimension_numbers = #tpu.dot_dimension_numbers<[1], [1], [0], [0], [0, 0, 1, 0], [], []>} : vector<5x16xf32>, vector<5x16xf32>, vector<5x5xf32> -> vector<5x5xf32>
    %cst_83 = arith.constant 2.500000e-01 : f32
    %160 = vector.broadcast %cst_83 : f32 to vector<5x5xf32>
    %161 = arith.mulf %159, %160 : vector<5x5xf32>
    %cst_84 = arith.constant -7.99975586 : f32
    %cst_85 = arith.constant 7.99975586 : f32
    %162 = vector.broadcast %cst_84 : f32 to vector<5x5xf32>
    %163 = arith.maximumf %162, %161 : vector<5x5xf32>
    %164 = vector.broadcast %cst_85 : f32 to vector<5x5xf32>
    %165 = arith.minimumf %164, %163 : vector<5x5xf32>
    %cst_86 = arith.constant 4.096000e+03 : f32
    %166 = vector.broadcast %cst_86 : f32 to vector<5x5xf32>
    %167 = arith.mulf %165, %166 : vector<5x5xf32>
    %168 = arith.fptosi %167 : vector<5x5xf32> to vector<5x5xi32>
    %169 = arith.sitofp %168 : vector<5x5xi32> to vector<5x5xf32>
    %cst_87 = arith.constant 2.44140625E-4 : f32
    %170 = vector.broadcast %cst_87 : f32 to vector<5x5xf32>
    %171 = arith.mulf %169, %170 : vector<5x5xf32>
    %cst_88 = arith.constant dense<0xFF800000> : vector<5xf32>
    %172 = vector.multi_reduction <maximumf>, %171, %cst_88 [1] : vector<5x5xf32> to vector<5xf32>
    %173 = vector.shape_cast %172 : vector<5xf32> to vector<5x1xf32>
    %174 = vector.broadcast %173 : vector<5x1xf32> to vector<5x5xf32>
    %175 = arith.subf %171, %174 : vector<5x5xf32>
    %176 = math.exp %175 : vector<5x5xf32>
    %cst_89 = arith.constant dense<0.000000e+00> : vector<5xf32>
    %177 = vector.multi_reduction <add>, %176, %cst_89 [1] : vector<5x5xf32> to vector<5xf32>
    %178 = vector.shape_cast %177 : vector<5xf32> to vector<5x1xf32>
    %179 = vector.broadcast %178 : vector<5x1xf32> to vector<5x5xf32>
    %180 = arith.divf %176, %179 : vector<5x5xf32>
    %cst_90 = arith.constant -7.99975586 : f32
    %cst_91 = arith.constant 7.99975586 : f32
    %181 = vector.broadcast %cst_90 : f32 to vector<5x5xf32>
    %182 = arith.maximumf %181, %180 : vector<5x5xf32>
    %183 = vector.broadcast %cst_91 : f32 to vector<5x5xf32>
    %184 = arith.minimumf %183, %182 : vector<5x5xf32>
    %cst_92 = arith.constant 4.096000e+03 : f32
    %185 = vector.broadcast %cst_92 : f32 to vector<5x5xf32>
    %186 = arith.mulf %184, %185 : vector<5x5xf32>
    %187 = arith.fptosi %186 : vector<5x5xf32> to vector<5x5xi32>
    %188 = arith.sitofp %187 : vector<5x5xi32> to vector<5x5xf32>
    %cst_93 = arith.constant 2.44140625E-4 : f32
    %189 = vector.broadcast %cst_93 : f32 to vector<5x5xf32>
    %190 = arith.mulf %188, %189 : vector<5x5xf32>
    %cst_94 = arith.constant dense<0.000000e+00> : vector<5x16xf32>
    %191 = tpu.matmul %190, %158, %cst_94 {dimension_numbers = #tpu.dot_dimension_numbers<[1], [0], [0], [1], [0, 0, 1, 1], [], []>} : vector<5x5xf32>, vector<5x16xf32>, vector<5x16xf32> -> vector<5x16xf32>
    %cst_95 = arith.constant -7.99975586 : f32
    %cst_96 = arith.constant 7.99975586 : f32
    %192 = vector.broadcast %cst_95 : f32 to vector<5x16xf32>
    %193 = arith.maximumf %192, %191 : vector<5x16xf32>
    %194 = vector.broadcast %cst_96 : f32 to vector<5x16xf32>
    %195 = arith.minimumf %194, %193 : vector<5x16xf32>
    %cst_97 = arith.constant 4.096000e+03 : f32
    %196 = vector.broadcast %cst_97 : f32 to vector<5x16xf32>
    %197 = arith.mulf %195, %196 : vector<5x16xf32>
    %198 = arith.fptosi %197 : vector<5x16xf32> to vector<5x16xi32>
    %199 = arith.sitofp %198 : vector<5x16xi32> to vector<5x16xf32>
    %cst_98 = arith.constant 2.44140625E-4 : f32
    %200 = vector.broadcast %cst_98 : f32 to vector<5x16xf32>
    %201 = arith.mulf %199, %200 : vector<5x16xf32>
    %202 = tpu.concatenate %119, %201 in 1 : vector<5x16xf32>, vector<5x16xf32> -> vector<5x32xf32>
    %c0_99 = arith.constant 0 : index
    %c0_100 = arith.constant 0 : index
    %c0_101 = arith.constant 0 : index
    %203 = vector.load %arg14[%c0_99, %c0_100, %c0_101] : memref<1x32x32xf32, #tpu.memory_space<vmem>>, vector<1x32x32xf32>
    %204 = vector.shape_cast %203 : vector<1x32x32xf32> to vector<32x32xf32>
    %cst_102 = arith.constant dense<0.000000e+00> : vector<5x32xf32>
    %205 = tpu.matmul %202, %204, %cst_102 {dimension_numbers = #tpu.dot_dimension_numbers<[1], [0], [0], [1], [0, 0, 1, 1], [], []>} : vector<5x32xf32>, vector<32x32xf32>, vector<5x32xf32> -> vector<5x32xf32>
    %c0_103 = arith.constant 0 : index
    %c0_104 = arith.constant 0 : index
    %c0_105 = arith.constant 0 : index
    %206 = vector.load %arg15[%c0_103, %c0_104, %c0_105] : memref<1x1x32xf32, #tpu.memory_space<vmem>>, vector<1x1x32xf32>
    %207 = vector.shape_cast %206 : vector<1x1x32xf32> to vector<1x32xf32>
    %208 = vector.broadcast %207 : vector<1x32xf32> to vector<5x32xf32>
    %209 = arith.addf %205, %208 : vector<5x32xf32>
    %cst_106 = arith.constant -7.99975586 : f32
    %cst_107 = arith.constant 7.99975586 : f32
    %210 = vector.broadcast %cst_106 : f32 to vector<5x32xf32>
    %211 = arith.maximumf %210, %209 : vector<5x32xf32>
    %212 = vector.broadcast %cst_107 : f32 to vector<5x32xf32>
    %213 = arith.minimumf %212, %211 : vector<5x32xf32>
    %cst_108 = arith.constant 4.096000e+03 : f32
    %214 = vector.broadcast %cst_108 : f32 to vector<5x32xf32>
    %215 = arith.mulf %213, %214 : vector<5x32xf32>
    %216 = arith.fptosi %215 : vector<5x32xf32> to vector<5x32xi32>
    %217 = arith.sitofp %216 : vector<5x32xi32> to vector<5x32xf32>
    %cst_109 = arith.constant 2.44140625E-4 : f32
    %218 = vector.broadcast %cst_109 : f32 to vector<5x32xf32>
    %219 = arith.mulf %217, %218 : vector<5x32xf32>
    %220 = arith.addf %219, %3 : vector<5x32xf32>
    %cst_110 = arith.constant -7.99975586 : f32
    %cst_111 = arith.constant 7.99975586 : f32
    %221 = vector.broadcast %cst_110 : f32 to vector<5x32xf32>
    %222 = arith.maximumf %221, %220 : vector<5x32xf32>
    %223 = vector.broadcast %cst_111 : f32 to vector<5x32xf32>
    %224 = arith.minimumf %223, %222 : vector<5x32xf32>
    %cst_112 = arith.constant 4.096000e+03 : f32
    %225 = vector.broadcast %cst_112 : f32 to vector<5x32xf32>
    %226 = arith.mulf %224, %225 : vector<5x32xf32>
    %227 = arith.fptosi %226 : vector<5x32xf32> to vector<5x32xi32>
    %228 = arith.sitofp %227 : vector<5x32xi32> to vector<5x32xf32>
    %cst_113 = arith.constant 2.44140625E-4 : f32
    %229 = vector.broadcast %cst_113 : f32 to vector<5x32xf32>
    %230 = arith.mulf %228, %229 : vector<5x32xf32>
    %c0_114 = arith.constant 0 : index
    %c0_115 = arith.constant 0 : index
    %c0_116 = arith.constant 0 : index
    %231 = vector.load %arg16[%c0_114, %c0_115, %c0_116] : memref<1x1x32xf32, #tpu.memory_space<vmem>>, vector<1x1x32xf32>
    %232 = vector.shape_cast %231 : vector<1x1x32xf32> to vector<1x32xf32>
    %c0_117 = arith.constant 0 : index
    %c0_118 = arith.constant 0 : index
    %c0_119 = arith.constant 0 : index
    %233 = vector.load %arg17[%c0_117, %c0_118, %c0_119] : memref<1x1x32xf32, #tpu.memory_space<vmem>>, vector<1x1x32xf32>
    %234 = vector.shape_cast %233 : vector<1x1x32xf32> to vector<1x32xf32>
    %cst_120 = arith.constant dense<0.000000e+00> : vector<5xf32>
    %235 = vector.multi_reduction <add>, %230, %cst_120 [1] : vector<5x32xf32> to vector<5xf32>
    %236 = vector.shape_cast %235 : vector<5xf32> to vector<5x1xf32>
    %cst_121 = arith.constant 3.200000e+01 : f32
    %237 = vector.broadcast %cst_121 : f32 to vector<5x1xf32>
    %238 = arith.divf %236, %237 : vector<5x1xf32>
    %239 = vector.broadcast %238 : vector<5x1xf32> to vector<5x32xf32>
    %240 = arith.subf %230, %239 : vector<5x32xf32>
    %241 = arith.mulf %240, %240 : vector<5x32xf32>
    %cst_122 = arith.constant dense<0.000000e+00> : vector<5xf32>
    %242 = vector.multi_reduction <add>, %241, %cst_122 [1] : vector<5x32xf32> to vector<5xf32>
    %243 = vector.shape_cast %242 : vector<5xf32> to vector<5x1xf32>
    %cst_123 = arith.constant 3.200000e+01 : f32
    %244 = vector.broadcast %cst_123 : f32 to vector<5x1xf32>
    %245 = arith.divf %243, %244 : vector<5x1xf32>
    %cst_124 = arith.constant 9.99999974E-6 : f32
    %246 = vector.broadcast %cst_124 : f32 to vector<5x1xf32>
    %247 = arith.addf %245, %246 : vector<5x1xf32>
    %248 = math.rsqrt %247 : vector<5x1xf32>
    %249 = vector.broadcast %248 : vector<5x1xf32> to vector<5x32xf32>
    %250 = arith.mulf %240, %249 : vector<5x32xf32>
    %251 = vector.broadcast %232 : vector<1x32xf32> to vector<5x32xf32>
    %252 = arith.mulf %250, %251 : vector<5x32xf32>
    %253 = vector.broadcast %234 : vector<1x32xf32> to vector<5x32xf32>
    %254 = arith.addf %252, %253 : vector<5x32xf32>
    %cst_125 = arith.constant -7.99975586 : f32
    %cst_126 = arith.constant 7.99975586 : f32
    %255 = vector.broadcast %cst_125 : f32 to vector<5x32xf32>
    %256 = arith.maximumf %255, %254 : vector<5x32xf32>
    %257 = vector.broadcast %cst_126 : f32 to vector<5x32xf32>
    %258 = arith.minimumf %257, %256 : vector<5x32xf32>
    %cst_127 = arith.constant 4.096000e+03 : f32
    %259 = vector.broadcast %cst_127 : f32 to vector<5x32xf32>
    %260 = arith.mulf %258, %259 : vector<5x32xf32>
    %261 = arith.fptosi %260 : vector<5x32xf32> to vector<5x32xi32>
    %262 = arith.sitofp %261 : vector<5x32xi32> to vector<5x32xf32>
    %cst_128 = arith.constant 2.44140625E-4 : f32
    %263 = vector.broadcast %cst_128 : f32 to vector<5x32xf32>
    %264 = arith.mulf %262, %263 : vector<5x32xf32>
    %c0_129 = arith.constant 0 : index
    %c0_130 = arith.constant 0 : index
    %c0_131 = arith.constant 0 : index
    %265 = vector.load %arg18[%c0_129, %c0_130, %c0_131] : memref<1x32x64xf32, #tpu.memory_space<vmem>>, vector<1x32x64xf32>
    %266 = vector.shape_cast %265 : vector<1x32x64xf32> to vector<32x64xf32>
    %cst_132 = arith.constant dense<0.000000e+00> : vector<5x64xf32>
    %267 = tpu.matmul %264, %266, %cst_132 {dimension_numbers = #tpu.dot_dimension_numbers<[1], [0], [0], [1], [0, 0, 1, 1], [], []>} : vector<5x32xf32>, vector<32x64xf32>, vector<5x64xf32> -> vector<5x64xf32>
    %c0_133 = arith.constant 0 : index
    %c0_134 = arith.constant 0 : index
    %c0_135 = arith.constant 0 : index
    %268 = vector.load %arg19[%c0_133, %c0_134, %c0_135] : memref<1x1x64xf32, #tpu.memory_space<vmem>>, vector<1x1x64xf32>
    %269 = vector.shape_cast %268 : vector<1x1x64xf32> to vector<1x64xf32>
    %270 = vector.broadcast %269 : vector<1x64xf32> to vector<5x64xf32>
    %271 = arith.addf %267, %270 : vector<5x64xf32>
    %cst_136 = arith.constant -7.99975586 : f32
    %cst_137 = arith.constant 7.99975586 : f32
    %272 = vector.broadcast %cst_136 : f32 to vector<5x64xf32>
    %273 = arith.maximumf %272, %271 : vector<5x64xf32>
    %274 = vector.broadcast %cst_137 : f32 to vector<5x64xf32>
    %275 = arith.minimumf %274, %273 : vector<5x64xf32>
    %cst_138 = arith.constant 4.096000e+03 : f32
    %276 = vector.broadcast %cst_138 : f32 to vector<5x64xf32>
    %277 = arith.mulf %275, %276 : vector<5x64xf32>
    %278 = arith.fptosi %277 : vector<5x64xf32> to vector<5x64xi32>
    %279 = arith.sitofp %278 : vector<5x64xi32> to vector<5x64xf32>
    %cst_139 = arith.constant 2.44140625E-4 : f32
    %280 = vector.broadcast %cst_139 : f32 to vector<5x64xf32>
    %281 = arith.mulf %279, %280 : vector<5x64xf32>
    %cst_140 = arith.constant 5.000000e-01 : f32
    %282 = vector.broadcast %cst_140 : f32 to vector<5x64xf32>
    %283 = arith.mulf %282, %281 : vector<5x64xf32>
    %cst_141 = arith.constant 0.707106769 : f32
    %284 = vector.broadcast %cst_141 : f32 to vector<5x64xf32>
    %285 = arith.mulf %281, %284 : vector<5x64xf32>
    %cst_142 = arith.constant 0.000000e+00 : f32
    %286 = vector.broadcast %cst_142 : f32 to vector<5x64xf32>
    %287 = arith.cmpf oge, %285, %286 : vector<5x64xf32>
    %cst_143 = arith.constant 1.000000e+00 : f32
    %cst_144 = arith.constant -1.000000e+00 : f32
    %288 = vector.broadcast %cst_143 : f32 to vector<5x64xf32>
    %289 = vector.broadcast %cst_144 : f32 to vector<5x64xf32>
    %290 = arith.select %287, %288, %289 : vector<5x64xi1>, vector<5x64xf32>
    %291 = math.absf %285 : vector<5x64xf32>
    %cst_145 = arith.constant 0.327591091 : f32
    %292 = vector.broadcast %cst_145 : f32 to vector<5x64xf32>
    %293 = arith.mulf %292, %291 : vector<5x64xf32>
    %cst_146 = arith.constant 1.000000e+00 : f32
    %294 = vector.broadcast %cst_146 : f32 to vector<5x64xf32>
    %295 = arith.addf %294, %293 : vector<5x64xf32>
    %cst_147 = arith.constant 1.000000e+00 : f32
    %296 = vector.broadcast %cst_147 : f32 to vector<5x64xf32>
    %297 = arith.divf %296, %295 : vector<5x64xf32>
    %cst_148 = arith.constant 1.06140542 : f32
    %298 = vector.broadcast %cst_148 : f32 to vector<5x64xf32>
    %299 = arith.mulf %297, %298 : vector<5x64xf32>
    %cst_149 = arith.constant -1.45315206 : f32
    %300 = vector.broadcast %cst_149 : f32 to vector<5x64xf32>
    %301 = arith.addf %300, %299 : vector<5x64xf32>
    %302 = arith.mulf %297, %301 : vector<5x64xf32>
    %cst_150 = arith.constant 1.42141378 : f32
    %303 = vector.broadcast %cst_150 : f32 to vector<5x64xf32>
    %304 = arith.addf %303, %302 : vector<5x64xf32>
    %305 = arith.mulf %297, %304 : vector<5x64xf32>
    %cst_151 = arith.constant -0.284496725 : f32
    %306 = vector.broadcast %cst_151 : f32 to vector<5x64xf32>
    %307 = arith.addf %306, %305 : vector<5x64xf32>
    %308 = arith.mulf %297, %307 : vector<5x64xf32>
    %cst_152 = arith.constant 0.254829586 : f32
    %309 = vector.broadcast %cst_152 : f32 to vector<5x64xf32>
    %310 = arith.addf %309, %308 : vector<5x64xf32>
    %311 = arith.mulf %297, %310 : vector<5x64xf32>
    %cst_153 = arith.constant 0.000000e+00 : f32
    %312 = vector.broadcast %cst_153 : f32 to vector<5x64xf32>
    %313 = arith.subf %312, %291 : vector<5x64xf32>
    %314 = arith.mulf %313, %291 : vector<5x64xf32>
    %315 = math.exp %314 : vector<5x64xf32>
    %316 = arith.mulf %311, %315 : vector<5x64xf32>
    %cst_154 = arith.constant 1.000000e+00 : f32
    %317 = vector.broadcast %cst_154 : f32 to vector<5x64xf32>
    %318 = arith.subf %317, %316 : vector<5x64xf32>
    %319 = arith.mulf %290, %318 : vector<5x64xf32>
    %cst_155 = arith.constant 1.000000e+00 : f32
    %320 = vector.broadcast %cst_155 : f32 to vector<5x64xf32>
    %321 = arith.addf %320, %319 : vector<5x64xf32>
    %322 = arith.mulf %283, %321 : vector<5x64xf32>
    %cst_156 = arith.constant -7.99975586 : f32
    %cst_157 = arith.constant 7.99975586 : f32
    %323 = vector.broadcast %cst_156 : f32 to vector<5x64xf32>
    %324 = arith.maximumf %323, %322 : vector<5x64xf32>
    %325 = vector.broadcast %cst_157 : f32 to vector<5x64xf32>
    %326 = arith.minimumf %325, %324 : vector<5x64xf32>
    %cst_158 = arith.constant 4.096000e+03 : f32
    %327 = vector.broadcast %cst_158 : f32 to vector<5x64xf32>
    %328 = arith.mulf %326, %327 : vector<5x64xf32>
    %329 = arith.fptosi %328 : vector<5x64xf32> to vector<5x64xi32>
    %330 = arith.sitofp %329 : vector<5x64xi32> to vector<5x64xf32>
    %cst_159 = arith.constant 2.44140625E-4 : f32
    %331 = vector.broadcast %cst_159 : f32 to vector<5x64xf32>
    %332 = arith.mulf %330, %331 : vector<5x64xf32>
    %c0_160 = arith.constant 0 : index
    %c0_161 = arith.constant 0 : index
    %c0_162 = arith.constant 0 : index
    %333 = vector.load %arg20[%c0_160, %c0_161, %c0_162] : memref<1x64x32xf32, #tpu.memory_space<vmem>>, vector<1x64x32xf32>
    %334 = vector.shape_cast %333 : vector<1x64x32xf32> to vector<64x32xf32>
    %cst_163 = arith.constant dense<0.000000e+00> : vector<5x32xf32>
    %335 = tpu.matmul %332, %334, %cst_163 {dimension_numbers = #tpu.dot_dimension_numbers<[1], [0], [0], [1], [0, 0, 1, 1], [], []>} : vector<5x64xf32>, vector<64x32xf32>, vector<5x32xf32> -> vector<5x32xf32>
    %c0_164 = arith.constant 0 : index
    %c0_165 = arith.constant 0 : index
    %c0_166 = arith.constant 0 : index
    %336 = vector.load %arg21[%c0_164, %c0_165, %c0_166] : memref<1x1x32xf32, #tpu.memory_space<vmem>>, vector<1x1x32xf32>
    %337 = vector.shape_cast %336 : vector<1x1x32xf32> to vector<1x32xf32>
    %338 = vector.broadcast %337 : vector<1x32xf32> to vector<5x32xf32>
    %339 = arith.addf %335, %338 : vector<5x32xf32>
    %cst_167 = arith.constant -7.99975586 : f32
    %cst_168 = arith.constant 7.99975586 : f32
    %340 = vector.broadcast %cst_167 : f32 to vector<5x32xf32>
    %341 = arith.maximumf %340, %339 : vector<5x32xf32>
    %342 = vector.broadcast %cst_168 : f32 to vector<5x32xf32>
    %343 = arith.minimumf %342, %341 : vector<5x32xf32>
    %cst_169 = arith.constant 4.096000e+03 : f32
    %344 = vector.broadcast %cst_169 : f32 to vector<5x32xf32>
    %345 = arith.mulf %343, %344 : vector<5x32xf32>
    %346 = arith.fptosi %345 : vector<5x32xf32> to vector<5x32xi32>
    %347 = arith.sitofp %346 : vector<5x32xi32> to vector<5x32xf32>
    %cst_170 = arith.constant 2.44140625E-4 : f32
    %348 = vector.broadcast %cst_170 : f32 to vector<5x32xf32>
    %349 = arith.mulf %347, %348 : vector<5x32xf32>
    %350 = arith.addf %349, %230 : vector<5x32xf32>
    %cst_171 = arith.constant -7.99975586 : f32
    %cst_172 = arith.constant 7.99975586 : f32
    %351 = vector.broadcast %cst_171 : f32 to vector<5x32xf32>
    %352 = arith.maximumf %351, %350 : vector<5x32xf32>
    %353 = vector.broadcast %cst_172 : f32 to vector<5x32xf32>
    %354 = arith.minimumf %353, %352 : vector<5x32xf32>
    %cst_173 = arith.constant 4.096000e+03 : f32
    %355 = vector.broadcast %cst_173 : f32 to vector<5x32xf32>
    %356 = arith.mulf %354, %355 : vector<5x32xf32>
    %357 = arith.fptosi %356 : vector<5x32xf32> to vector<5x32xi32>
    %358 = arith.sitofp %357 : vector<5x32xi32> to vector<5x32xf32>
    %cst_174 = arith.constant 2.44140625E-4 : f32
    %359 = vector.broadcast %cst_174 : f32 to vector<5x32xf32>
    %360 = arith.mulf %358, %359 : vector<5x32xf32>
    %c0_175 = arith.constant 0 : index
    %c0_176 = arith.constant 0 : index
    %361 = vector.load %arg27[%c0_175, %c0_176] : memref<5x32xf32, #tpu.memory_space<vmem>>, vector<5x32xf32>
    tpu.vector_store %arg27[%c0_175, %c0_176], %360 {strides = array<i32>} : memref<5x32xf32, #tpu.memory_space<vmem>>, vector<5x32xf32>,
    %c1_i32 = arith.constant 1 : i32
    %362 = arith.cmpi eq, %arg1, %c1_i32 : i32
    %363 = arith.extui %362 : i1 to i32
    %c0_i32_177 = arith.constant 0 : i32
    %364 = arith.cmpi ne, %363, %c0_i32_177 : i32
    scf.if %364 {
      %365 = vector.extract_strided_slice %360 {offsets = [0, 0], sizes = [1, 32], strides = [1, 1]} : vector<5x32xf32> to vector<1x32xf32>
      %c0_178 = arith.constant 0 : index
      %c0_179 = arith.constant 0 : index
      %366 = vector.load %arg22[%c0_178, %c0_179] : memref<1x32xf32, #tpu.memory_space<vmem>>, vector<1x32xf32>
      %c0_180 = arith.constant 0 : index
      %c0_181 = arith.constant 0 : index
      %367 = vector.load %arg23[%c0_180, %c0_181] : memref<1x32xf32, #tpu.memory_space<vmem>>, vector<1x32xf32>
      %cst_182 = arith.constant dense<0.000000e+00> : vector<1xf32>
      %368 = vector.multi_reduction <add>, %365, %cst_182 [1] : vector<1x32xf32> to vector<1xf32>
      %369 = vector.shape_cast %368 : vector<1xf32> to vector<1x1xf32>
      %cst_183 = arith.constant 3.200000e+01 : f32
      %370 = vector.broadcast %cst_183 : f32 to vector<1x1xf32>
      %371 = arith.divf %369, %370 : vector<1x1xf32>
      %372 = vector.broadcast %371 : vector<1x1xf32> to vector<1x32xf32>
      %373 = arith.subf %365, %372 : vector<1x32xf32>
      %374 = arith.mulf %373, %373 : vector<1x32xf32>
      %cst_184 = arith.constant dense<0.000000e+00> : vector<1xf32>
      %375 = vector.multi_reduction <add>, %374, %cst_184 [1] : vector<1x32xf32> to vector<1xf32>
      %376 = vector.shape_cast %375 : vector<1xf32> to vector<1x1xf32>
      %cst_185 = arith.constant 3.200000e+01 : f32
      %377 = vector.broadcast %cst_185 : f32 to vector<1x1xf32>
      %378 = arith.divf %376, %377 : vector<1x1xf32>
      %cst_186 = arith.constant 9.99999974E-6 : f32
      %379 = vector.broadcast %cst_186 : f32 to vector<1x1xf32>
      %380 = arith.addf %378, %379 : vector<1x1xf32>
      %381 = math.rsqrt %380 : vector<1x1xf32>
      %382 = vector.broadcast %381 : vector<1x1xf32> to vector<1x32xf32>
      %383 = arith.mulf %373, %382 : vector<1x32xf32>
      %384 = arith.mulf %383, %366 : vector<1x32xf32>
      %385 = arith.addf %384, %367 : vector<1x32xf32>
      %cst_187 = arith.constant -7.99975586 : f32
      %cst_188 = arith.constant 7.99975586 : f32
      %386 = vector.broadcast %cst_187 : f32 to vector<1x32xf32>
      %387 = arith.maximumf %386, %385 : vector<1x32xf32>
      %388 = vector.broadcast %cst_188 : f32 to vector<1x32xf32>
      %389 = arith.minimumf %388, %387 : vector<1x32xf32>
      %cst_189 = arith.constant 4.096000e+03 : f32
      %390 = vector.broadcast %cst_189 : f32 to vector<1x32xf32>
      %391 = arith.mulf %389, %390 : vector<1x32xf32>
      %392 = arith.fptosi %391 : vector<1x32xf32> to vector<1x32xi32>
      %393 = arith.sitofp %392 : vector<1x32xi32> to vector<1x32xf32>
      %cst_190 = arith.constant 2.44140625E-4 : f32
      %394 = vector.broadcast %cst_190 : f32 to vector<1x32xf32>
      %395 = arith.mulf %393, %394 : vector<1x32xf32>
      %c0_191 = arith.constant 0 : index
      %c0_192 = arith.constant 0 : index
      %396 = vector.load %arg24[%c0_191, %c0_192] : memref<32x10xf32, #tpu.memory_space<vmem>>, vector<32x10xf32>
      %cst_193 = arith.constant dense<0.000000e+00> : vector<1x10xf32>
      %397 = tpu.matmul %395, %396, %cst_193 {dimension_numbers = #tpu.dot_dimension_numbers<[1], [0], [0], [1], [0, 0, 1, 1], [], []>} : vector<1x32xf32>, vector<32x10xf32>, vector<1x10xf32> -> vector<1x10xf32>
      %c0_194 = arith.constant 0 : index
      %c0_195 = arith.constant 0 : index
      %398 = vector.load %arg25[%c0_194, %c0_195] : memref<1x10xf32, #tpu.memory_space<vmem>>, vector<1x10xf32>
      %399 = arith.addf %397, %398 : vector<1x10xf32>
      %cst_196 = arith.constant -7.99975586 : f32
      %cst_197 = arith.constant 7.99975586 : f32
      %400 = vector.broadcast %cst_196 : f32 to vector<1x10xf32>
      %401 = arith.maximumf %400, %399 : vector<1x10xf32>
      %402 = vector.broadcast %cst_197 : f32 to vector<1x10xf32>
      %403 = arith.minimumf %402, %401 : vector<1x10xf32>
      %cst_198 = arith.constant 4.096000e+03 : f32
      %404 = vector.broadcast %cst_198 : f32 to vector<1x10xf32>
      %405 = arith.mulf %403, %404 : vector<1x10xf32>
      %406 = arith.fptosi %405 : vector<1x10xf32> to vector<1x10xi32>
      %407 = arith.sitofp %406 : vector<1x10xi32> to vector<1x10xf32>
      %cst_199 = arith.constant 2.44140625E-4 : f32
      %408 = vector.broadcast %cst_199 : f32 to vector<1x10xf32>
      %409 = arith.mulf %407, %408 : vector<1x10xf32>
      %c0_200 = arith.constant 0 : index
      %c0_201 = arith.constant 0 : index
      %c0_202 = arith.constant 0 : index
      %410 = vector.load %arg26[%c0_200, %c0_201, %c0_202] : memref<1x1x10xf32, #tpu.memory_space<vmem>>, vector<1x1x10xf32>
      %411 = vector.shape_cast %410 : vector<1x1x10xf32> to vector<1x10xf32>
      %412 = vector.shape_cast %409 : vector<1x10xf32> to vector<1x1x10xf32>
      tpu.vector_store %arg26[%c0_200, %c0_201, %c0_202], %412 {strides = array<i32>} : memref<1x1x10xf32, #tpu.memory_space<vmem>>, vector<1x1x10xf32>,
    } else {
    }
    return
  }
  func.func @transform_0(%arg0: i32, %arg1: i32) -> (i32, i32, i32) {
    %c0_i32 = arith.constant 0 : i32
    %c0_i32_0 = arith.constant 0 : i32
    %c0_i32_1 = arith.constant 0 : i32
    return %arg0, %c0_i32, %c0_i32_0 : i32, i32, i32
  }
  func.func @transform_1(%arg0: i32, %arg1: i32) -> (i32, i32) {
    %c0_i32 = arith.constant 0 : i32
    %c0_i32_0 = arith.constant 0 : i32
    %c0_i32_1 = arith.constant 0 : i32
    return %c0_i32, %c0_i32_0 : i32, i32
  }
  func.func @transform_2(%arg0: i32, %arg1: i32) -> (i32, i32) {
    %c0_i32 = arith.constant 0 : i32
    %c0_i32_0 = arith.constant 0 : i32
    %c0_i32_1 = arith.constant 0 : i32
    return %c0_i32, %c0_i32_0 : i32, i32
  }
  func.func @transform_3(%arg0: i32, %arg1: i32) -> (i32, i32) {
    %c0_i32 = arith.constant 0 : i32
    %c0_i32_0 = arith.constant 0 : i32
    %c0_i32_1 = arith.constant 0 : i32
    return %c0_i32, %c0_i32_0 : i32, i32
  }
  func.func @transform_4(%arg0: i32, %arg1: i32) -> (i32, i32) {
    %c0_i32 = arith.constant 0 : i32
    %c0_i32_0 = arith.constant 0 : i32
    %c0_i32_1 = arith.constant 0 : i32
    return %c0_i32, %c0_i32_0 : i32, i32
  }
  func.func @transform_5(%arg0: i32, %arg1: i32) -> (i32, i32) {
    %c0_i32 = arith.constant 0 : i32
    %c0_i32_0 = arith.constant 0 : i32
    %c0_i32_1 = arith.constant 0 : i32
    return %c0_i32, %c0_i32_0 : i32, i32
  }
  func.func @transform_6(%arg0: i32, %arg1: i32) -> (i32, i32) {
    %c0_i32 = arith.constant 0 : i32
    %c0_i32_0 = arith.constant 0 : i32
    %c0_i32_1 = arith.constant 0 : i32
    return %c0_i32, %c0_i32_0 : i32, i32
  }
  func.func @transform_7(%arg0: i32, %arg1: i32) -> (i32, i32) {
    %c0_i32 = arith.constant 0 : i32
    %c0_i32_0 = arith.constant 0 : i32
    %c0_i32_1 = arith.constant 0 : i32
    return %c0_i32, %c0_i32_0 : i32, i32
  }
  func.func @transform_8(%arg0: i32, %arg1: i32) -> (i32, i32) {
    %c0_i32 = arith.constant 0 : i32
    %c0_i32_0 = arith.constant 0 : i32
    %c0_i32_1 = arith.constant 0 : i32
    return %c0_i32, %c0_i32_0 : i32, i32
  }
  func.func @transform_9(%arg0: i32, %arg1: i32) -> (i32, i32, i32) {
    %c0_i32 = arith.constant 0 : i32
    %c0_i32_0 = arith.constant 0 : i32
    %c0_i32_1 = arith.constant 0 : i32
    return %arg1, %c0_i32, %c0_i32_0 : i32, i32, i32
  }
  func.func @transform_10(%arg0: i32, %arg1: i32) -> (i32, i32, i32) {
    %c0_i32 = arith.constant 0 : i32
    %c0_i32_0 = arith.constant 0 : i32
    %c0_i32_1 = arith.constant 0 : i32
    return %arg1, %c0_i32, %c0_i32_0 : i32, i32, i32
  }
  func.func @transform_11(%arg0: i32, %arg1: i32) -> (i32, i32, i32, i32) {
    %c0_i32 = arith.constant 0 : i32
    %c0_i32_0 = arith.constant 0 : i32
    %c0_i32_1 = arith.constant 0 : i32
    %c0_i32_2 = arith.constant 0 : i32
    return %arg1, %c0_i32, %c0_i32_0, %c0_i32_1 : i32, i32, i32, i32
  }
  func.func @transform_12(%arg0: i32, %arg1: i32) -> (i32, i32, i32) {
    %c0_i32 = arith.constant 0 : i32
    %c0_i32_0 = arith.constant 0 : i32
    %c0_i32_1 = arith.constant 0 : i32
    return %arg1, %c0_i32, %c0_i32_0 : i32, i32, i32
  }
  func.func @transform_13(%arg0: i32, %arg1: i32) -> (i32, i32, i32) {
    %c0_i32 = arith.constant 0 : i32
    %c0_i32_0 = arith.constant 0 : i32
    %c0_i32_1 = arith.constant 0 : i32
    return %arg1, %c0_i32, %c0_i32_0 : i32, i32, i32
  }
  func.func @transform_14(%arg0: i32, %arg1: i32) -> (i32, i32, i32) {
    %c0_i32 = arith.constant 0 : i32
    %c0_i32_0 = arith.constant 0 : i32
    %c0_i32_1 = arith.constant 0 : i32
    return %arg1, %c0_i32, %c0_i32_0 : i32, i32, i32
  }
  func.func @transform_15(%arg0: i32, %arg1: i32) -> (i32, i32, i32) {
    %c0_i32 = arith.constant 0 : i32
    %c0_i32_0 = arith.constant 0 : i32
    %c0_i32_1 = arith.constant 0 : i32
    return %arg1, %c0_i32, %c0_i32_0 : i32, i32, i32
  }
  func.func @transform_16(%arg0: i32, %arg1: i32) -> (i32, i32, i32) {
    %c0_i32 = arith.constant 0 : i32
    %c0_i32_0 = arith.constant 0 : i32
    %c0_i32_1 = arith.constant 0 : i32
    return %arg1, %c0_i32, %c0_i32_0 : i32, i32, i32
  }
  func.func @transform_17(%arg0: i32, %arg1: i32) -> (i32, i32, i32) {
    %c0_i32 = arith.constant 0 : i32
    %c0_i32_0 = arith.constant 0 : i32
    %c0_i32_1 = arith.constant 0 : i32
    return %arg1, %c0_i32, %c0_i32_0 : i32, i32, i32
  }
  func.func @transform_18(%arg0: i32, %arg1: i32) -> (i32, i32, i32) {
    %c0_i32 = arith.constant 0 : i32
    %c0_i32_0 = arith.constant 0 : i32
    %c0_i32_1 = arith.constant 0 : i32
    return %arg1, %c0_i32, %c0_i32_0 : i32, i32, i32
  }
  func.func @transform_19(%arg0: i32, %arg1: i32) -> (i32, i32, i32) {
    %c0_i32 = arith.constant 0 : i32
    %c0_i32_0 = arith.constant 0 : i32
    %c0_i32_1 = arith.constant 0 : i32
    return %arg1, %c0_i32, %c0_i32_0 : i32, i32, i32
  }
  func.func @transform_20(%arg0: i32, %arg1: i32) -> (i32, i32) {
    %c0_i32 = arith.constant 0 : i32
    %c0_i32_0 = arith.constant 0 : i32
    %c0_i32_1 = arith.constant 0 : i32
    return %c0_i32, %c0_i32_0 : i32, i32
  }
  func.func @transform_21(%arg0: i32, %arg1: i32) -> (i32, i32) {
    %c0_i32 = arith.constant 0 : i32
    %c0_i32_0 = arith.constant 0 : i32
    %c0_i32_1 = arith.constant 0 : i32
    return %c0_i32, %c0_i32_0 : i32, i32
  }
  func.func @transform_22(%arg0: i32, %arg1: i32) -> (i32, i32) {
    %c0_i32 = arith.constant 0 : i32
    %c0_i32_0 = arith.constant 0 : i32
    %c0_i32_1 = arith.constant 0 : i32
    return %c0_i32, %c0_i32_0 : i32, i32
  }
  func.func @transform_23(%arg0: i32, %arg1: i32) -> (i32, i32) {
    %c0_i32 = arith.constant 0 : i32
    %c0_i32_0 = arith.constant 0 : i32
    %c0_i32_1 = arith.constant 0 : i32
    return %c0_i32, %c0_i32_0 : i32, i32
  }
  func.func @transform_24(%arg0: i32, %arg1: i32) -> (i32, i32, i32) {
    %c0_i32 = arith.constant 0 : i32
    %c0_i32_0 = arith.constant 0 : i32
    %c0_i32_1 = arith.constant 0 : i32
    return %arg0, %c0_i32, %c0_i32_0 : i32, i32, i32
  }
}

</mosaic_0001>

<llo_original>
// kernel: fixed_point_vit_forward.1
$region0: #{fixed_point_vit_forward.1}
  #allocation0 [shape = 'u32[]', space=smem, size = 0x4, offset = 0x4, fixed_abs, tag = 'smem constant byte address 0x4 - core index']
  #allocation1 [shape = 'u32[144,128]{1,0:T(1,128)}', space=vmem, size = 0x12000, scoped, tag = 'internal scratch']
  #allocation2 [shape = 'f32[5,32]{1,0:T(8,128)}', space=vmem, size = 0x1000, scoped, tag = 'scratch operand']
  %s0 = inlined_call_operand.vmem [shape: f32[2,4,192], index: 0, kind: input, shape index: {}]
  %s1 = inlined_call_operand.vmem [shape: f32[1,192], index: 1, kind: input, shape index: {}]
  %s2 = inlined_call_operand.vmem [shape: f32[1,192], index: 2, kind: input, shape index: {}]
  %s3 = inlined_call_operand.vmem [shape: f32[192,32], index: 3, kind: input, shape index: {}]
  %s4 = inlined_call_operand.vmem [shape: f32[1,32], index: 4, kind: input, shape index: {}]
  %s5 = inlined_call_operand.vmem [shape: f32[1,32], index: 5, kind: input, shape index: {}]
  %s6 = inlined_call_operand.vmem [shape: f32[1,32], index: 6, kind: input, shape index: {}]
  %s7 = inlined_call_operand.vmem [shape: f32[1,32], index: 7, kind: input, shape index: {}]
  %s8 = inlined_call_operand.vmem [shape: f32[5,32], index: 8, kind: input, shape index: {}]
  %s9 = inlined_call_operand.vmem [shape: f32[2,1,32], index: 9, kind: input, shape index: {}]
  %s10 = inlined_call_operand.vmem [shape: f32[2,1,32], index: 10, kind: input, shape index: {}]
  %s11 = inlined_call_operand.vmem [shape: f32[2,6,32,16], index: 11, kind: input, shape index: {}]
  %s12 = inlined_call_operand.vmem [shape: f32[2,32,32], index: 12, kind: input, shape index: {}]
  %s13 = inlined_call_operand.vmem [shape: f32[2,1,32], index: 13, kind: input, shape index: {}]
  %s14 = inlined_call_operand.vmem [shape: f32[2,1,32], index: 14, kind: input, shape index: {}]
  %s15 = inlined_call_operand.vmem [shape: f32[2,1,32], index: 15, kind: input, shape index: {}]
  %s16 = inlined_call_operand.vmem [shape: f32[2,32,64], index: 16, kind: input, shape index: {}]
  %s17 = inlined_call_operand.vmem [shape: f32[2,1,64], index: 17, kind: input, shape index: {}]
  %s18 = inlined_call_operand.vmem [shape: f32[2,64,32], index: 18, kind: input, shape index: {}]
  %s19 = inlined_call_operand.vmem [shape: f32[2,1,32], index: 19, kind: input, shape index: {}]
  %s20 = inlined_call_operand.vmem [shape: f32[1,32], index: 20, kind: input, shape index: {}]
  %s21 = inlined_call_operand.vmem [shape: f32[1,32], index: 21, kind: input, shape index: {}]
  %s22 = inlined_call_operand.vmem [shape: f32[32,10], index: 22, kind: input, shape index: {}]
  %s23 = inlined_call_operand.vmem [shape: f32[1,10], index: 23, kind: input, shape index: {}]
  %s24 = inlined_call_operand.hbm [shape: f32[2,1,10], index: 24, kind: output, shape index: {}]
  %s25 = sld [smem:[#allocation0]]
  $region137: #{fixed_point_vit_forward.1} parent=0
    _
  %s27 = ssub.s32 1, %s25
  %s28 = scalar_select 0, %s27, %s25
  $region1: #{fixed_point_vit_forward.1} parent=0
    #allocation3 [shape = 'u8[1024]{0}', space=vmem, size = 0x400, scoped, tag = 'output window, operand 0']
    #allocation4 [shape = 's32[2]{0}', space=sflag, size = 0x8, scoped, tag = 'scoped memory for fixed_point_vit_forward.1']
    %29 = vsyncpa [#allocation4], 0
    %s30 = scalar_lea.sflag [#allocation4], 1
    %31 = vsyncpa %s30, 0
    loop: start=0, step=1, limit=6
    $region2: #{fixed_point_vit_forward.1} parent=1 // loop_pre_header
      _
    $region3: #{fixed_point_vit_forward.1} parent=1 // loop_header
      %s33 = sphi 0, %s37
      %p34 = scmp.ge.s32.totalorder %s33, 6
      %s40 = sphi 0, %s52
      %s41 = sphi 0, %s48
      %s42 = sphi 0, %s40
      %s43 = sphi 0, %s41
      %s44 = sphi 0, %s42
      %s45 = sphi 0, %s43
      %s55 = sphi 0, %s57
      %s58 = sphi 0, %s55
      %s59 = sphi 0, %s58
      %s75 = sphi 0, %s59
      %s79 = sphi 0, %s79
      %s81 = sphi 0, %s79
      %s82 = sphi 0, %s81
      %s96 = sphi 0, %s82
      %s100 = sphi 0, %s100
      %s102 = sphi 0, %s100
      %s103 = sphi 0, %s102
      %s117 = sphi 0, %s103
      %s121 = sphi 0, %s121
      %s123 = sphi 0, %s121
      %s124 = sphi 0, %s123
      %s138 = sphi 0, %s124
      %s142 = sphi 0, %s142
      %s144 = sphi 0, %s142
      %s145 = sphi 0, %s144
      %s159 = sphi 0, %s145
      %s163 = sphi 0, %s163
      %s165 = sphi 0, %s163
      %s166 = sphi 0, %s165
      %s180 = sphi 0, %s166
      %s184 = sphi 0, %s184
      %s186 = sphi 0, %s184
      %s187 = sphi 0, %s186
      %s201 = sphi 0, %s187
      %s205 = sphi 0, %s205
      %s207 = sphi 0, %s205
      %s208 = sphi 0, %s207
      %s222 = sphi 0, %s208
      %s226 = sphi 0, %s226
      %s228 = sphi 0, %s226
      %s229 = sphi 0, %s228
      %s243 = sphi 0, %s229
      %s249 = sphi 0, %s251
      %s252 = sphi 0, %s249
      %s253 = sphi 0, %s252
      %s269 = sphi 0, %s253
      %s275 = sphi 0, %s277
      %s278 = sphi 0, %s275
      %s279 = sphi 0, %s278
      %s295 = sphi 0, %s279
      %s301 = sphi 0, %s303
      %s304 = sphi 0, %s301
      %s305 = sphi 0, %s304
      %s321 = sphi 0, %s305
      %s327 = sphi 0, %s329
      %s330 = sphi 0, %s327
      %s331 = sphi 0, %s330
      %s347 = sphi 0, %s331
      %s353 = sphi 0, %s355
      %s356 = sphi 0, %s353
      %s357 = sphi 0, %s356
      %s373 = sphi 0, %s357
      %s379 = sphi 0, %s381
      %s382 = sphi 0, %s379
      %s383 = sphi 0, %s382
      %s399 = sphi 0, %s383
      %s405 = sphi 0, %s407
      %s408 = sphi 0, %s405
      %s409 = sphi 0, %s408
      %s425 = sphi 0, %s409
      %s431 = sphi 0, %s433
      %s434 = sphi 0, %s431
      %s435 = sphi 0, %s434
      %s451 = sphi 0, %s435
      %s457 = sphi 0, %s459
      %s460 = sphi 0, %s457
      %s461 = sphi 0, %s460
      %s477 = sphi 0, %s461
      %s483 = sphi 0, %s485
      %s486 = sphi 0, %s483
      %s487 = sphi 0, %s486
      %s503 = sphi 0, %s487
      %s509 = sphi 0, %s511
      %s512 = sphi 0, %s509
      %s513 = sphi 0, %s512
      %s529 = sphi 0, %s513
      %s533 = sphi 0, %s533
      %s535 = sphi 0, %s533
      %s536 = sphi 0, %s535
      %s550 = sphi 0, %s536
      %s554 = sphi 0, %s554
      %s556 = sphi 0, %s554
      %s557 = sphi 0, %s556
      %s571 = sphi 0, %s557
      %s575 = sphi 0, %s575
      %s577 = sphi 0, %s575
      %s578 = sphi 0, %s577
      %s592 = sphi 0, %s578
      %s596 = sphi 0, %s596
      %s598 = sphi 0, %s596
      %s599 = sphi 0, %s598
      %s613 = sphi 0, %s599
      %s619 = sphi 0, %s621
      %s622 = sphi 0, %s619
      %s623 = sphi 0, %s622
      %s639 = sphi 0, %s623
    $region4: #{fixed_point_vit_forward.1} parent=1 // loop_header_branch
      %36 = sbr.rel (%p34) target = $region8
    $region5: #{fixed_point_vit_forward.1} parent=1 // loop_body
      %s38 = ssub.s32 %s33, 1
      %s39 = ssub.s32 %s33, 2
      %s46 = sadd.s32 1, %s41
      %p47 = scmp.ge.s32.totalorder %s46, 2
      %s48 = scalar_select %p47, 0, %s46
      %s49 = sadd.s32 1, %s40
      %s50 = scalar_select %p47, %s49, %s40
      %p51 = scmp.ge.s32.totalorder %s50, 2
      %s52 = scalar_select %p51, 0, %s50
      %s53 = ssub.s32 %s40, %s52
      %p54 = scmp.eq.s32.totalorder %s53, 0
      %s56 = sadd.s32 %s55, 1
      %s57 = scalar_select %p54, %s55, %s56
      %p60 = pneg %p54
      %p61 = scmp.eq.s32.totalorder %s33, 3
      %p62 = por %p60, %p61
      %p63 = scmp.ne.s32.totalorder %s55, %s58
      %p64 = scmp.eq.s32.totalorder %s33, 0
      %p65 = por %p63, %p64
      %p66 = scmp.ne.s32.totalorder %s55, %s58
      %p67 = scmp.eq.s32.totalorder %s38, 3
      %p68 = por %p66, %p67
      %p69 = scmp.ne.s32.totalorder %s58, %s59
      %p70 = scmp.eq.s32.totalorder %s38, 0
      %p71 = por %p69, %p70
      %p72 = scmp.ne.s32.totalorder %s58, %s59
      %p73 = scmp.eq.s32.totalorder %s39, 3
      %p74 = por %p72, %p73
      %p76 = scmp.ne.s32.totalorder %s59, %s75
      %p77 = scmp.eq.s32.totalorder %s39, 0
      %p78 = por %p76, %p77
      %s80 = sadd.s32 %s79, 1
      %p83 = scmp.eq.s32.totalorder %s33, 3
      %p84 = scmp.ne.s32.totalorder %s79, %s81
      %p85 = scmp.eq.s32.totalorder %s33, 0
      %p86 = por %p84, %p85
      %p87 = scmp.ne.s32.totalorder %s79, %s81
      %p88 = scmp.eq.s32.totalorder %s38, 3
      %p89 = por %p87, %p88
      %p90 = scmp.ne.s32.totalorder %s81, %s82
      %p91 = scmp.eq.s32.totalorder %s38, 0
      %p92 = por %p90, %p91
      %p93 = scmp.ne.s32.totalorder %s81, %s82
      %p94 = scmp.eq.s32.totalorder %s39, 3
      %p95 = por %p93, %p94
      %p97 = scmp.ne.s32.totalorder %s82, %s96
      %p98 = scmp.eq.s32.totalorder %s39, 0
      %p99 = por %p97, %p98
      %s101 = sadd.s32 %s100, 1
      %p104 = scmp.eq.s32.totalorder %s33, 3
      %p105 = scmp.ne.s32.totalorder %s100, %s102
      %p106 = scmp.eq.s32.totalorder %s33, 0
      %p107 = por %p105, %p106
      %p108 = scmp.ne.s32.totalorder %s100, %s102
      %p109 = scmp.eq.s32.totalorder %s38, 3
      %p110 = por %p108, %p109
      %p111 = scmp.ne.s32.totalorder %s102, %s103
      %p112 = scmp.eq.s32.totalorder %s38, 0
      %p113 = por %p111, %p112
      %p114 = scmp.ne.s32.totalorder %s102, %s103
      %p115 = scmp.eq.s32.totalorder %s39, 3
      %p116 = por %p114, %p115
      %p118 = scmp.ne.s32.totalorder %s103, %s117
      %p119 = scmp.eq.s32.totalorder %s39, 0
      %p120 = por %p118, %p119
      %s122 = sadd.s32 %s121, 1
      %p125 = scmp.eq.s32.totalorder %s33, 3
      %p126 = scmp.ne.s32.totalorder %s121, %s123
      %p127 = scmp.eq.s32.totalorder %s33, 0
      %p128 = por %p126, %p127
      %p129 = scmp.ne.s32.totalorder %s121, %s123
      %p130 = scmp.eq.s32.totalorder %s38, 3
      %p131 = por %p129, %p130
      %p132 = scmp.ne.s32.totalorder %s123, %s124
      %p133 = scmp.eq.s32.totalorder %s38, 0
      %p134 = por %p132, %p133
      %p135 = scmp.ne.s32.totalorder %s123, %s124
      %p136 = scmp.eq.s32.totalorder %s39, 3
      %p137 = por %p135, %p136
      %p139 = scmp.ne.s32.totalorder %s124, %s138
      %p140 = scmp.eq.s32.totalorder %s39, 0
      %p141 = por %p139, %p140
      %s143 = sadd.s32 %s142, 1
      %p146 = scmp.eq.s32.totalorder %s33, 3
      %p147 = scmp.ne.s32.totalorder %s142, %s144
      %p148 = scmp.eq.s32.totalorder %s33, 0
      %p149 = por %p147, %p148
      %p150 = scmp.ne.s32.totalorder %s142, %s144
      %p151 = scmp.eq.s32.totalorder %s38, 3
      %p152 = por %p150, %p151
      %p153 = scmp.ne.s32.totalorder %s144, %s145
      %p154 = scmp.eq.s32.totalorder %s38, 0
      %p155 = por %p153, %p154
      %p156 = scmp.ne.s32.totalorder %s144, %s145
      %p157 = scmp.eq.s32.totalorder %s39, 3
      %p158 = por %p156, %p157
      %p160 = scmp.ne.s32.totalorder %s145, %s159
      %p161 = scmp.eq.s32.totalorder %s39, 0
      %p162 = por %p160, %p161
      %s164 = sadd.s32 %s163, 1
      %p167 = scmp.eq.s32.totalorder %s33, 3
      %p168 = scmp.ne.s32.totalorder %s163, %s165
      %p169 = scmp.eq.s32.totalorder %s33, 0
      %p170 = por %p168, %p169
      %p171 = scmp.ne.s32.totalorder %s163, %s165
      %p172 = scmp.eq.s32.totalorder %s38, 3
      %p173 = por %p171, %p172
      %p174 = scmp.ne.s32.totalorder %s165, %s166
      %p175 = scmp.eq.s32.totalorder %s38, 0
      %p176 = por %p174, %p175
      %p177 = scmp.ne.s32.totalorder %s165, %s166
      %p178 = scmp.eq.s32.totalorder %s39, 3
      %p179 = por %p177, %p178
      %p181 = scmp.ne.s32.totalorder %s166, %s180
      %p182 = scmp.eq.s32.totalorder %s39, 0
      %p183 = por %p181, %p182
      %s185 = sadd.s32 %s184, 1
      %p188 = scmp.eq.s32.totalorder %s33, 3
      %p189 = scmp.ne.s32.totalorder %s184, %s186
      %p190 = scmp.eq.s32.totalorder %s33, 0
      %p191 = por %p189, %p190
      %p192 = scmp.ne.s32.totalorder %s184, %s186
      %p193 = scmp.eq.s32.totalorder %s38, 3
      %p194 = por %p192, %p193
      %p195 = scmp.ne.s32.totalorder %s186, %s187
      %p196 = scmp.eq.s32.totalorder %s38, 0
      %p197 = por %p195, %p196
      %p198 = scmp.ne.s32.totalorder %s186, %s187
      %p199 = scmp.eq.s32.totalorder %s39, 3
      %p200 = por %p198, %p199
      %p202 = scmp.ne.s32.totalorder %s187, %s201
      %p203 = scmp.eq.s32.totalorder %s39, 0
      %p204 = por %p202, %p203
      %s206 = sadd.s32 %s205, 1
      %p209 = scmp.eq.s32.totalorder %s33, 3
      %p210 = scmp.ne.s32.totalorder %s205, %s207
      %p211 = scmp.eq.s32.totalorder %s33, 0
      %p212 = por %p210, %p211
      %p213 = scmp.ne.s32.totalorder %s205, %s207
      %p214 = scmp.eq.s32.totalorder %s38, 3
      %p215 = por %p213, %p214
      %p216 = scmp.ne.s32.totalorder %s207, %s208
      %p217 = scmp.eq.s32.totalorder %s38, 0
      %p218 = por %p216, %p217
      %p219 = scmp.ne.s32.totalorder %s207, %s208
      %p220 = scmp.eq.s32.totalorder %s39, 3
      %p221 = por %p219, %p220
      %p223 = scmp.ne.s32.totalorder %s208, %s222
      %p224 = scmp.eq.s32.totalorder %s39, 0
      %p225 = por %p223, %p224
      %s227 = sadd.s32 %s226, 1
      %p230 = scmp.eq.s32.totalorder %s33, 3
      %p231 = scmp.ne.s32.totalorder %s226, %s228
      %p232 = scmp.eq.s32.totalorder %s33, 0
      %p233 = por %p231, %p232
      %p234 = scmp.ne.s32.totalorder %s226, %s228
      %p235 = scmp.eq.s32.totalorder %s38, 3
      %p236 = por %p234, %p235
      %p237 = scmp.ne.s32.totalorder %s228, %s229
      %p238 = scmp.eq.s32.totalorder %s38, 0
      %p239 = por %p237, %p238
      %p240 = scmp.ne.s32.totalorder %s228, %s229
      %p241 = scmp.eq.s32.totalorder %s39, 3
      %p242 = por %p240, %p241
      %p244 = scmp.ne.s32.totalorder %s229, %s243
      %p245 = scmp.eq.s32.totalorder %s39, 0
      %p246 = por %p244, %p245
      %s247 = ssub.s32 %s41, %s48
      %p248 = scmp.eq.s32.totalorder %s247, 0
      %s250 = sadd.s32 %s249, 1
      %s251 = scalar_select %p248, %s249, %s250
      %p254 = pneg %p248
      %p255 = scmp.eq.s32.totalorder %s33, 3
      %p256 = por %p254, %p255
      %p257 = scmp.ne.s32.totalorder %s249, %s252
      %p258 = scmp.eq.s32.totalorder %s33, 0
      %p259 = por %p257, %p258
      %p260 = scmp.ne.s32.totalorder %s249, %s252
      %p261 = scmp.eq.s32.totalorder %s38, 3
      %p262 = por %p260, %p261
      %p263 = scmp.ne.s32.totalorder %s252, %s253
      %p264 = scmp.eq.s32.totalorder %s38, 0
      %p265 = por %p263, %p264
      %p266 = scmp.ne.s32.totalorder %s252, %s253
      %p267 = scmp.eq.s32.totalorder %s39, 3
      %p268 = por %p266, %p267
      %p270 = scmp.ne.s32.totalorder %s253, %s269
      %p271 = scmp.eq.s32.totalorder %s39, 0
      %p272 = por %p270, %p271
      %s273 = ssub.s32 %s41, %s48
      %p274 = scmp.eq.s32.totalorder %s273, 0
      %s276 = sadd.s32 %s275, 1
      %s277 = scalar_select %p274, %s275, %s276
      %p280 = pneg %p274
      %p281 = scmp.eq.s32.totalorder %s33, 3
      %p282 = por %p280, %p281
      %p283 = scmp.ne.s32.totalorder %s275, %s278
      %p284 = scmp.eq.s32.totalorder %s33, 0
      %p285 = por %p283, %p284
      %p286 = scmp.ne.s32.totalorder %s275, %s278
      %p287 = scmp.eq.s32.totalorder %s38, 3
      %p288 = por %p286, %p287
      %p289 = scmp.ne.s32.totalorder %s278, %s279
      %p290 = scmp.eq.s32.totalorder %s38, 0
      %p291 = por %p289, %p290
      %p292 = scmp.ne.s32.totalorder %s278, %s279
      %p293 = scmp.eq.s32.totalorder %s39, 3
      %p294 = por %p292, %p293
      %p296 = scmp.ne.s32.totalorder %s279, %s295
      %p297 = scmp.eq.s32.totalorder %s39, 0
      %p298 = por %p296, %p297
      %s299 = ssub.s32 %s41, %s48
      %p300 = scmp.eq.s32.totalorder %s299, 0
      %s302 = sadd.s32 %s301, 1
      %s303 = scalar_select %p300, %s301, %s302
      %p306 = pneg %p300
      %p307 = scmp.eq.s32.totalorder %s33, 3
      %p308 = por %p306, %p307
      %p309 = scmp.ne.s32.totalorder %s301, %s304
      %p310 = scmp.eq.s32.totalorder %s33, 0
      %p311 = por %p309, %p310
      %p312 = scmp.ne.s32.totalorder %s301, %s304
      %p313 = scmp.eq.s32.totalorder %s38, 3
      %p314 = por %p312, %p313
      %p315 = scmp.ne.s32.totalorder %s304, %s305
      %p316 = scmp.eq.s32.totalorder %s38, 0
      %p317 = por %p315, %p316
      %p318 = scmp.ne.s32.totalorder %s304, %s305
      %p319 = scmp.eq.s32.totalorder %s39, 3
      %p320 = por %p318, %p319
      %p322 = scmp.ne.s32.totalorder %s305, %s321
      %p323 = scmp.eq.s32.totalorder %s39, 0
      %p324 = por %p322, %p323
      %s325 = ssub.s32 %s41, %s48
      %p326 = scmp.eq.s32.totalorder %s325, 0
      %s328 = sadd.s32 %s327, 1
      %s329 = scalar_select %p326, %s327, %s328
      %p332 = pneg %p326
      %p333 = scmp.eq.s32.totalorder %s33, 3
      %p334 = por %p332, %p333
      %p335 = scmp.ne.s32.totalorder %s327, %s330
      %p336 = scmp.eq.s32.totalorder %s33, 0
      %p337 = por %p335, %p336
      %p338 = scmp.ne.s32.totalorder %s327, %s330
      %p339 = scmp.eq.s32.totalorder %s38, 3
      %p340 = por %p338, %p339
      %p341 = scmp.ne.s32.totalorder %s330, %s331
      %p342 = scmp.eq.s32.totalorder %s38, 0
      %p343 = por %p341, %p342
      %p344 = scmp.ne.s32.totalorder %s330, %s331
      %p345 = scmp.eq.s32.totalorder %s39, 3
      %p346 = por %p344, %p345
      %p348 = scmp.ne.s32.totalorder %s331, %s347
      %p349 = scmp.eq.s32.totalorder %s39, 0
      %p350 = por %p348, %p349
      %s351 = ssub.s32 %s41, %s48
      %p352 = scmp.eq.s32.totalorder %s351, 0
      %s354 = sadd.s32 %s353, 1
      %s355 = scalar_select %p352, %s353, %s354
      %p358 = pneg %p352
      %p359 = scmp.eq.s32.totalorder %s33, 3
      %p360 = por %p358, %p359
      %p361 = scmp.ne.s32.totalorder %s353, %s356
      %p362 = scmp.eq.s32.totalorder %s33, 0
      %p363 = por %p361, %p362
      %p364 = scmp.ne.s32.totalorder %s353, %s356
      %p365 = scmp.eq.s32.totalorder %s38, 3
      %p366 = por %p364, %p365
      %p367 = scmp.ne.s32.totalorder %s356, %s357
      %p368 = scmp.eq.s32.totalorder %s38, 0
      %p369 = por %p367, %p368
      %p370 = scmp.ne.s32.totalorder %s356, %s357
      %p371 = scmp.eq.s32.totalorder %s39, 3
      %p372 = por %p370, %p371
      %p374 = scmp.ne.s32.totalorder %s357, %s373
      %p375 = scmp.eq.s32.totalorder %s39, 0
      %p376 = por %p374, %p375
      %s377 = ssub.s32 %s41, %s48
      %p378 = scmp.eq.s32.totalorder %s377, 0
      %s380 = sadd.s32 %s379, 1
      %s381 = scalar_select %p378, %s379, %s380
      %p384 = pneg %p378
      %p385 = scmp.eq.s32.totalorder %s33, 3
      %p386 = por %p384, %p385
      %p387 = scmp.ne.s32.totalorder %s379, %s382
      %p388 = scmp.eq.s32.totalorder %s33, 0
      %p389 = por %p387, %p388
      %p390 = scmp.ne.s32.totalorder %s379, %s382
      %p391 = scmp.eq.s32.totalorder %s38, 3
      %p392 = por %p390, %p391
      %p393 = scmp.ne.s32.totalorder %s382, %s383
      %p394 = scmp.eq.s32.totalorder %s38, 0
      %p395 = por %p393, %p394
      %p396 = scmp.ne.s32.totalorder %s382, %s383
      %p397 = scmp.eq.s32.totalorder %s39, 3
      %p398 = por %p396, %p397
      %p400 = scmp.ne.s32.totalorder %s383, %s399
      %p401 = scmp.eq.s32.totalorder %s39, 0
      %p402 = por %p400, %p401
      %s403 = ssub.s32 %s41, %s48
      %p404 = scmp.eq.s32.totalorder %s403, 0
      %s406 = sadd.s32 %s405, 1
      %s407 = scalar_select %p404, %s405, %s406
      %p410 = pneg %p404
      %p411 = scmp.eq.s32.totalorder %s33, 3
      %p412 = por %p410, %p411
      %p413 = scmp.ne.s32.totalorder %s405, %s408
      %p414 = scmp.eq.s32.totalorder %s33, 0
      %p415 = por %p413, %p414
      %p416 = scmp.ne.s32.totalorder %s405, %s408
      %p417 = scmp.eq.s32.totalorder %s38, 3
      %p418 = por %p416, %p417
      %p419 = scmp.ne.s32.totalorder %s408, %s409
      %p420 = scmp.eq.s32.totalorder %s38, 0
      %p421 = por %p419, %p420
      %p422 = scmp.ne.s32.totalorder %s408, %s409
      %p423 = scmp.eq.s32.totalorder %s39, 3
      %p424 = por %p422, %p423
      %p426 = scmp.ne.s32.totalorder %s409, %s425
      %p427 = scmp.eq.s32.totalorder %s39, 0
      %p428 = por %p426, %p427
      %s429 = ssub.s32 %s41, %s48
      %p430 = scmp.eq.s32.totalorder %s429, 0
      %s432 = sadd.s32 %s431, 1
      %s433 = scalar_select %p430, %s431, %s432
      %p436 = pneg %p430
      %p437 = scmp.eq.s32.totalorder %s33, 3
      %p438 = por %p436, %p437
      %p439 = scmp.ne.s32.totalorder %s431, %s434
      %p440 = scmp.eq.s32.totalorder %s33, 0
      %p441 = por %p439, %p440
      %p442 = scmp.ne.s32.totalorder %s431, %s434
      %p443 = scmp.eq.s32.totalorder %s38, 3
      %p444 = por %p442, %p443
      %p445 = scmp.ne.s32.totalorder %s434, %s435
      %p446 = scmp.eq.s32.totalorder %s38, 0
      %p447 = por %p445, %p446
      %p448 = scmp.ne.s32.totalorder %s434, %s435
      %p449 = scmp.eq.s32.totalorder %s39, 3
      %p450 = por %p448, %p449
      %p452 = scmp.ne.s32.totalorder %s435, %s451
      %p453 = scmp.eq.s32.totalorder %s39, 0
      %p454 = por %p452, %p453
      %s455 = ssub.s32 %s41, %s48
      %p456 = scmp.eq.s32.totalorder %s455, 0
      %s458 = sadd.s32 %s457, 1
      %s459 = scalar_select %p456, %s457, %s458
      %p462 = pneg %p456
      %p463 = scmp.eq.s32.totalorder %s33, 3
      %p464 = por %p462, %p463
      %p465 = scmp.ne.s32.totalorder %s457, %s460
      %p466 = scmp.eq.s32.totalorder %s33, 0
      %p467 = por %p465, %p466
      %p468 = scmp.ne.s32.totalorder %s457, %s460
      %p469 = scmp.eq.s32.totalorder %s38, 3
      %p470 = por %p468, %p469
      %p471 = scmp.ne.s32.totalorder %s460, %s461
      %p472 = scmp.eq.s32.totalorder %s38, 0
      %p473 = por %p471, %p472
      %p474 = scmp.ne.s32.totalorder %s460, %s461
      %p475 = scmp.eq.s32.totalorder %s39, 3
      %p476 = por %p474, %p475
      %p478 = scmp.ne.s32.totalorder %s461, %s477
      %p479 = scmp.eq.s32.totalorder %s39, 0
      %p480 = por %p478, %p479
      %s481 = ssub.s32 %s41, %s48
      %p482 = scmp.eq.s32.totalorder %s481, 0
      %s484 = sadd.s32 %s483, 1
      %s485 = scalar_select %p482, %s483, %s484
      %p488 = pneg %p482
      %p489 = scmp.eq.s32.totalorder %s33, 3
      %p490 = por %p488, %p489
      %p491 = scmp.ne.s32.totalorder %s483, %s486
      %p492 = scmp.eq.s32.totalorder %s33, 0
      %p493 = por %p491, %p492
      %p494 = scmp.ne.s32.totalorder %s483, %s486
      %p495 = scmp.eq.s32.totalorder %s38, 3
      %p496 = por %p494, %p495
      %p497 = scmp.ne.s32.totalorder %s486, %s487
      %p498 = scmp.eq.s32.totalorder %s38, 0
      %p499 = por %p497, %p498
      %p500 = scmp.ne.s32.totalorder %s486, %s487
      %p501 = scmp.eq.s32.totalorder %s39, 3
      %p502 = por %p500, %p501
      %p504 = scmp.ne.s32.totalorder %s487, %s503
      %p505 = scmp.eq.s32.totalorder %s39, 0
      %p506 = por %p504, %p505
      %s507 = ssub.s32 %s41, %s48
      %p508 = scmp.eq.s32.totalorder %s507, 0
      %s510 = sadd.s32 %s509, 1
      %s511 = scalar_select %p508, %s509, %s510
      %p514 = pneg %p508
      %p515 = scmp.eq.s32.totalorder %s33, 3
      %p516 = por %p514, %p515
      %p517 = scmp.ne.s32.totalorder %s509, %s512
      %p518 = scmp.eq.s32.totalorder %s33, 0
      %p519 = por %p517, %p518
      %p520 = scmp.ne.s32.totalorder %s509, %s512
      %p521 = scmp.eq.s32.totalorder %s38, 3
      %p522 = por %p520, %p521
      %p523 = scmp.ne.s32.totalorder %s512, %s513
      %p524 = scmp.eq.s32.totalorder %s38, 0
      %p525 = por %p523, %p524
      %p526 = scmp.ne.s32.totalorder %s512, %s513
      %p527 = scmp.eq.s32.totalorder %s39, 3
      %p528 = por %p526, %p527
      %p530 = scmp.ne.s32.totalorder %s513, %s529
      %p531 = scmp.eq.s32.totalorder %s39, 0
      %p532 = por %p530, %p531
      %s534 = sadd.s32 %s533, 1
      %p537 = scmp.eq.s32.totalorder %s33, 3
      %p538 = scmp.ne.s32.totalorder %s533, %s535
      %p539 = scmp.eq.s32.totalorder %s33, 0
      %p540 = por %p538, %p539
      %p541 = scmp.ne.s32.totalorder %s533, %s535
      %p542 = scmp.eq.s32.totalorder %s38, 3
      %p543 = por %p541, %p542
      %p544 = scmp.ne.s32.totalorder %s535, %s536
      %p545 = scmp.eq.s32.totalorder %s38, 0
      %p546 = por %p544, %p545
      %p547 = scmp.ne.s32.totalorder %s535, %s536
      %p548 = scmp.eq.s32.totalorder %s39, 3
      %p549 = por %p547, %p548
      %p551 = scmp.ne.s32.totalorder %s536, %s550
      %p552 = scmp.eq.s32.totalorder %s39, 0
      %p553 = por %p551, %p552
      %s555 = sadd.s32 %s554, 1
      %p558 = scmp.eq.s32.totalorder %s33, 3
      %p559 = scmp.ne.s32.totalorder %s554, %s556
      %p560 = scmp.eq.s32.totalorder %s33, 0
      %p561 = por %p559, %p560
      %p562 = scmp.ne.s32.totalorder %s554, %s556
      %p563 = scmp.eq.s32.totalorder %s38, 3
      %p564 = por %p562, %p563
      %p565 = scmp.ne.s32.totalorder %s556, %s557
      %p566 = scmp.eq.s32.totalorder %s38, 0
      %p567 = por %p565, %p566
      %p568 = scmp.ne.s32.totalorder %s556, %s557
      %p569 = scmp.eq.s32.totalorder %s39, 3
      %p570 = por %p568, %p569
      %p572 = scmp.ne.s32.totalorder %s557, %s571
      %p573 = scmp.eq.s32.totalorder %s39, 0
      %p574 = por %p572, %p573
      %s576 = sadd.s32 %s575, 1
      %p579 = scmp.eq.s32.totalorder %s33, 3
      %p580 = scmp.ne.s32.totalorder %s575, %s577
      %p581 = scmp.eq.s32.totalorder %s33, 0
      %p582 = por %p580, %p581
      %p583 = scmp.ne.s32.totalorder %s575, %s577
      %p584 = scmp.eq.s32.totalorder %s38, 3
      %p585 = por %p583, %p584
      %p586 = scmp.ne.s32.totalorder %s577, %s578
      %p587 = scmp.eq.s32.totalorder %s38, 0
      %p588 = por %p586, %p587
      %p589 = scmp.ne.s32.totalorder %s577, %s578
      %p590 = scmp.eq.s32.totalorder %s39, 3
      %p591 = por %p589, %p590
      %p593 = scmp.ne.s32.totalorder %s578, %s592
      %p594 = scmp.eq.s32.totalorder %s39, 0
      %p595 = por %p593, %p594
      %s597 = sadd.s32 %s596, 1
      %p600 = scmp.eq.s32.totalorder %s33, 3
      %p601 = scmp.ne.s32.totalorder %s596, %s598
      %p602 = scmp.eq.s32.totalorder %s33, 0
      %p603 = por %p601, %p602
      %p604 = scmp.ne.s32.totalorder %s596, %s598
      %p605 = scmp.eq.s32.totalorder %s38, 3
      %p606 = por %p604, %p605
      %p607 = scmp.ne.s32.totalorder %s598, %s599
      %p608 = scmp.eq.s32.totalorder %s38, 0
      %p609 = por %p607, %p608
      %p610 = scmp.ne.s32.totalorder %s598, %s599
      %p611 = scmp.eq.s32.totalorder %s39, 3
      %p612 = por %p610, %p611
      %p614 = scmp.ne.s32.totalorder %s599, %s613
      %p615 = scmp.eq.s32.totalorder %s39, 0
      %p616 = por %p614, %p615
      %s617 = ssub.s32 %s40, %s52
      %p618 = scmp.eq.s32.totalorder %s617, 0
      %s620 = sadd.s32 %s619, 1
      %s621 = scalar_select %p618, %s619, %s620
      %p624 = pneg %p618
      %p625 = scmp.eq.s32.totalorder %s33, 3
      %p626 = por %p624, %p625
      %p627 = scmp.ne.s32.totalorder %s619, %s622
      %p628 = scmp.eq.s32.totalorder %s33, 0
      %p629 = por %p627, %p628
      %p630 = scmp.ne.s32.totalorder %s619, %s622
      %p631 = scmp.eq.s32.totalorder %s38, 3
      %p632 = por %p630, %p631
      %p633 = scmp.ne.s32.totalorder %s622, %s623
      %p634 = scmp.eq.s32.totalorder %s38, 0
      %p635 = por %p633, %p634
      %p636 = scmp.ne.s32.totalorder %s622, %s623
      %p637 = scmp.eq.s32.totalorder %s39, 3
      %p638 = por %p636, %p637
      %p640 = scmp.ne.s32.totalorder %s623, %s639
      %p641 = scmp.eq.s32.totalorder %s39, 0
      %p642 = por %p640, %p641
      %p643 = scmp.le.s32.totalorder 1, %s33
      %p644 = scmp.lt.s32.totalorder %s33, 5
      %p645 = pnand %p643, %p644
      %p646 = pneg %p645
      // Predicated region
      $region9: #{fixed_point_vit_forward.1} parent=5 // pred_check
        _
      $region10: #{fixed_point_vit_forward.1} parent=5 // pred_check_branch
        %648 = sbr.rel (%p645) target = $region12
      $region11: #{fixed_point_vit_forward.1} parent=5 // pred_region
        %s649 = ssub.s32 %s33, 1
        // Predicated region
        $region13: #{fixed_point_vit_forward.1} parent=11 // pred_check
          %p650 = pneg %p92
        $region14: #{fixed_point_vit_forward.1} parent=11 // pred_check_branch
          %652 = sbr.rel (%p650) target = $region16
        $region15: #{fixed_point_vit_forward.1} parent=11 // pred_region
          _
        $region16: #{fixed_point_vit_forward.1} parent=11 // pred_fallthru
          _
        // Predicated region
        $region17: #{fixed_point_vit_forward.1} parent=11 // pred_check
          %p653 = pneg %p113
        $region18: #{fixed_point_vit_forward.1} parent=11 // pred_check_branch
          %655 = sbr.rel (%p653) target = $region20
        $region19: #{fixed_point_vit_forward.1} parent=11 // pred_region
          _
        $region20: #{fixed_point_vit_forward.1} parent=11 // pred_fallthru
          _
        // Predicated region
        $region21: #{fixed_point_vit_forward.1} parent=11 // pred_check
          %p656 = pneg %p134
        $region22: #{fixed_point_vit_forward.1} parent=11 // pred_check_branch
          %658 = sbr.rel (%p656) target = $region24
        $region23: #{fixed_point_vit_forward.1} parent=11 // pred_region
          _
        $region24: #{fixed_point_vit_forward.1} parent=11 // pred_fallthru
          _
        // Predicated region
        $region25: #{fixed_point_vit_forward.1} parent=11 // pred_check
          %p659 = pneg %p155
        $region26: #{fixed_point_vit_forward.1} parent=11 // pred_check_branch
          %661 = sbr.rel (%p659) target = $region28
        $region27: #{fixed_point_vit_forward.1} parent=11 // pred_region
          _
        $region28: #{fixed_point_vit_forward.1} parent=11 // pred_fallthru
          _
        // Predicated region
        $region29: #{fixed_point_vit_forward.1} parent=11 // pred_check
          %p662 = pneg %p176
        $region30: #{fixed_point_vit_forward.1} parent=11 // pred_check_branch
          %664 = sbr.rel (%p662) target = $region32
        $region31: #{fixed_point_vit_forward.1} parent=11 // pred_region
          _
        $region32: #{fixed_point_vit_forward.1} parent=11 // pred_fallthru
          _
        // Predicated region
        $region33: #{fixed_point_vit_forward.1} parent=11 // pred_check
          %p665 = pneg %p197
        $region34: #{fixed_point_vit_forward.1} parent=11 // pred_check_branch
          %667 = sbr.rel (%p665) target = $region36
        $region35: #{fixed_point_vit_forward.1} parent=11 // pred_region
          _
        $region36: #{fixed_point_vit_forward.1} parent=11 // pred_fallthru
          _
        // Predicated region
        $region37: #{fixed_point_vit_forward.1} parent=11 // pred_check
          %p668 = pneg %p218
        $region38: #{fixed_point_vit_forward.1} parent=11 // pred_check_branch
          %670 = sbr.rel (%p668) target = $region40
        $region39: #{fixed_point_vit_forward.1} parent=11 // pred_region
          _
        $region40: #{fixed_point_vit_forward.1} parent=11 // pred_fallthru
          _
        // Predicated region
        $region41: #{fixed_point_vit_forward.1} parent=11 // pred_check
          %p671 = pneg %p239
        $region42: #{fixed_point_vit_forward.1} parent=11 // pred_check_branch
          %673 = sbr.rel (%p671) target = $region44
        $region43: #{fixed_point_vit_forward.1} parent=11 // pred_region
          _
        $region44: #{fixed_point_vit_forward.1} parent=11 // pred_fallthru
          _
        // Predicated region
        $region45: #{fixed_point_vit_forward.1} parent=11 // pred_check
          %p674 = pneg %p546
        $region46: #{fixed_point_vit_forward.1} parent=11 // pred_check_branch
          %676 = sbr.rel (%p674) target = $region48
        $region47: #{fixed_point_vit_forward.1} parent=11 // pred_region
          _
        $region48: #{fixed_point_vit_forward.1} parent=11 // pred_fallthru
          _
        // Predicated region
        $region49: #{fixed_point_vit_forward.1} parent=11 // pred_check
          %p677 = pneg %p567
        $region50: #{fixed_point_vit_forward.1} parent=11 // pred_check_branch
          %679 = sbr.rel (%p677) target = $region52
        $region51: #{fixed_point_vit_forward.1} parent=11 // pred_region
          _
        $region52: #{fixed_point_vit_forward.1} parent=11 // pred_fallthru
          _
        // Predicated region
        $region53: #{fixed_point_vit_forward.1} parent=11 // pred_check
          %p680 = pneg %p588
        $region54: #{fixed_point_vit_forward.1} parent=11 // pred_check_branch
          %682 = sbr.rel (%p680) target = $region56
        $region55: #{fixed_point_vit_forward.1} parent=11 // pred_region
          _
        $region56: #{fixed_point_vit_forward.1} parent=11 // pred_fallthru
          _
        // Predicated region
        $region57: #{fixed_point_vit_forward.1} parent=11 // pred_check
          %p683 = pneg %p609
        $region58: #{fixed_point_vit_forward.1} parent=11 // pred_check_branch
          %685 = sbr.rel (%p683) target = $region60
        $region59: #{fixed_point_vit_forward.1} parent=11 // pred_region
          _
        $region60: #{fixed_point_vit_forward.1} parent=11 // pred_fallthru
          _
      $region12: #{fixed_point_vit_forward.1} parent=5 // pred_fallthru
        _
      %p686 = scmp.lt.s32.totalorder %s33, 4
      // Predicated region
      $region61: #{fixed_point_vit_forward.1} parent=5 // pred_check
        %p687 = pneg %p686
      $region62: #{fixed_point_vit_forward.1} parent=5 // pred_check_branch
        %689 = sbr.rel (%p687) target = $region64
      $region63: #{fixed_point_vit_forward.1} parent=5 // pred_region
        // Predicated region
        $region65: #{fixed_point_vit_forward.1} parent=63 // pred_check
          %p690 = pneg %p65
        $region66: #{fixed_point_vit_forward.1} parent=63 // pred_check_branch
          %692 = sbr.rel (%p690) target = $region68
        $region67: #{fixed_point_vit_forward.1} parent=63 // pred_region
          %p693 = scmp.lt.s32.totalorder %s40, 1
          %s694 = scalar_select %p693, %s40, 1
          %s695 = smul.addr %s694, 2
          %s696 = smul.addr %s695, 4
          %s697 = scalar_lea.vmem %s0, %s696
        $region68: #{fixed_point_vit_forward.1} parent=63 // pred_fallthru
          _
        // Predicated region
        $region69: #{fixed_point_vit_forward.1} parent=63 // pred_check
          %p698 = pneg %p259
        $region70: #{fixed_point_vit_forward.1} parent=63 // pred_check_branch
          %700 = sbr.rel (%p698) target = $region72
        $region71: #{fixed_point_vit_forward.1} parent=63 // pred_region
          %p701 = scmp.lt.s32.totalorder %s41, 1
          %s702 = scalar_select %p701, %s41, 1
          %s703 = scalar_lea.vmem %s9, %s702
        $region72: #{fixed_point_vit_forward.1} parent=63 // pred_fallthru
          _
        // Predicated region
        $region73: #{fixed_point_vit_forward.1} parent=63 // pred_check
          %p704 = pneg %p285
        $region74: #{fixed_point_vit_forward.1} parent=63 // pred_check_branch
          %706 = sbr.rel (%p704) target = $region76
        $region75: #{fixed_point_vit_forward.1} parent=63 // pred_region
          %p707 = scmp.lt.s32.totalorder %s41, 1
          %s708 = scalar_select %p707, %s41, 1
          %s709 = scalar_lea.vmem %s10, %s708
        $region76: #{fixed_point_vit_forward.1} parent=63 // pred_fallthru
          _
        // Predicated region
        $region77: #{fixed_point_vit_forward.1} parent=63 // pred_check
          %p710 = pneg %p311
        $region78: #{fixed_point_vit_forward.1} parent=63 // pred_check_branch
          %712 = sbr.rel (%p710) target = $region80
        $region79: #{fixed_point_vit_forward.1} parent=63 // pred_region
          %p713 = scmp.lt.s32.totalorder %s41, 1
          %s714 = scalar_select %p713, %s41, 1
          %s715 = smul.addr %s714, 24
          %s716 = smul.addr %s715, 8
          %s717 = scalar_lea.vmem %s11, %s716
        $region80: #{fixed_point_vit_forward.1} parent=63 // pred_fallthru
          _
        // Predicated region
        $region81: #{fixed_point_vit_forward.1} parent=63 // pred_check
          %p718 = pneg %p337
        $region82: #{fixed_point_vit_forward.1} parent=63 // pred_check_branch
          %720 = sbr.rel (%p718) target = $region84
        $region83: #{fixed_point_vit_forward.1} parent=63 // pred_region
          %p721 = scmp.lt.s32.totalorder %s41, 1
          %s722 = scalar_select %p721, %s41, 1
          %s723 = smul.addr %s722, 4
          %s724 = smul.addr %s723, 8
          %s725 = scalar_lea.vmem %s12, %s724
        $region84: #{fixed_point_vit_forward.1} parent=63 // pred_fallthru
          _
        // Predicated region
        $region85: #{fixed_point_vit_forward.1} parent=63 // pred_check
          %p726 = pneg %p363
        $region86: #{fixed_point_vit_forward.1} parent=63 // pred_check_branch
          %728 = sbr.rel (%p726) target = $region88
        $region87: #{fixed_point_vit_forward.1} parent=63 // pred_region
          %p729 = scmp.lt.s32.totalorder %s41, 1
          %s730 = scalar_select %p729, %s41, 1
          %s731 = scalar_lea.vmem %s13, %s730
        $region88: #{fixed_point_vit_forward.1} parent=63 // pred_fallthru
          _
        // Predicated region
        $region89: #{fixed_point_vit_forward.1} parent=63 // pred_check
          %p732 = pneg %p389
        $region90: #{fixed_point_vit_forward.1} parent=63 // pred_check_branch
          %734 = sbr.rel (%p732) target = $region92
        $region91: #{fixed_point_vit_forward.1} parent=63 // pred_region
          %p735 = scmp.lt.s32.totalorder %s41, 1
          %s736 = scalar_select %p735, %s41, 1
          %s737 = scalar_lea.vmem %s14, %s736
        $region92: #{fixed_point_vit_forward.1} parent=63 // pred_fallthru
          _
        // Predicated region
        $region93: #{fixed_point_vit_forward.1} parent=63 // pred_check
          %p738 = pneg %p415
        $region94: #{fixed_point_vit_forward.1} parent=63 // pred_check_branch
          %740 = sbr.rel (%p738) target = $region96
        $region95: #{fixed_point_vit_forward.1} parent=63 // pred_region
          %p741 = scmp.lt.s32.totalorder %s41, 1
          %s742 = scalar_select %p741, %s41, 1
          %s743 = scalar_lea.vmem %s15, %s742
        $region96: #{fixed_point_vit_forward.1} parent=63 // pred_fallthru
          _
        // Predicated region
        $region97: #{fixed_point_vit_forward.1} parent=63 // pred_check
          %p744 = pneg %p441
        $region98: #{fixed_point_vit_forward.1} parent=63 // pred_check_branch
          %746 = sbr.rel (%p744) target = $region100
        $region99: #{fixed_point_vit_forward.1} parent=63 // pred_region
          %p747 = scmp.lt.s32.totalorder %s41, 1
          %s748 = scalar_select %p747, %s41, 1
          %s749 = smul.addr %s748, 4
          %s750 = smul.addr %s749, 8
          %s751 = scalar_lea.vmem %s16, %s750
        $region100: #{fixed_point_vit_forward.1} parent=63 // pred_fallthru
          _
        // Predicated region
        $region101: #{fixed_point_vit_forward.1} parent=63 // pred_check
          %p752 = pneg %p467
        $region102: #{fixed_point_vit_forward.1} parent=63 // pred_check_branch
          %754 = sbr.rel (%p752) target = $region104
        $region103: #{fixed_point_vit_forward.1} parent=63 // pred_region
          %p755 = scmp.lt.s32.totalorder %s41, 1
          %s756 = scalar_select %p755, %s41, 1
          %s757 = scalar_lea.vmem %s17, %s756
        $region104: #{fixed_point_vit_forward.1} parent=63 // pred_fallthru
          _
        // Predicated region
        $region105: #{fixed_point_vit_forward.1} parent=63 // pred_check
          %p758 = pneg %p493
        $region106: #{fixed_point_vit_forward.1} parent=63 // pred_check_branch
          %760 = sbr.rel (%p758) target = $region108
        $region107: #{fixed_point_vit_forward.1} parent=63 // pred_region
          %p761 = scmp.lt.s32.totalorder %s41, 1
          %s762 = scalar_select %p761, %s41, 1
          %s763 = smul.addr %s762, 8
          %s764 = smul.addr %s763, 8
          %s765 = scalar_lea.vmem %s18, %s764
        $region108: #{fixed_point_vit_forward.1} parent=63 // pred_fallthru
          _
        // Predicated region
        $region109: #{fixed_point_vit_forward.1} parent=63 // pred_check
          %p766 = pneg %p519
        $region110: #{fixed_point_vit_forward.1} parent=63 // pred_check_branch
          %768 = sbr.rel (%p766) target = $region112
        $region111: #{fixed_point_vit_forward.1} parent=63 // pred_region
          %p769 = scmp.lt.s32.totalorder %s41, 1
          %s770 = scalar_select %p769, %s41, 1
          %s771 = scalar_lea.vmem %s19, %s770
        $region112: #{fixed_point_vit_forward.1} parent=63 // pred_fallthru
          _
      $region64: #{fixed_point_vit_forward.1} parent=5 // pred_fallthru
        _
      %p772 = scmp.le.s32.totalorder 1, %s33
      %p773 = scmp.lt.s32.totalorder %s33, 5
      %p774 = pnand %p772, %p773
      %p775 = pneg %p774
      // Predicated region
      $region113: #{fixed_point_vit_forward.1} parent=5 // pred_check
        _
      $region114: #{fixed_point_vit_forward.1} parent=5 // pred_check_branch
        %777 = sbr.rel (%p774) target = $region116
      $region115: #{fixed_point_vit_forward.1} parent=5 // pred_region
        %s778 = ssub.s32 %s33, 1
        %p779 = scmp.lt.s32.totalorder %s42, 1
        %s780 = scalar_select %p779, %s42, 1
        %s781 = smul.addr %s780, 2
        %s782 = smul.addr %s781, 4
        %s783 = scalar_lea.vmem %s0, %s782
        %p784 = pneg %p71
        %p785 = pneg %p68
        %p786 = pneg %p92
        %p787 = pneg %p89
        %p788 = pneg %p113
        %p789 = pneg %p110
        %p790 = pneg %p134
        %p791 = pneg %p131
        %p792 = pneg %p155
        %p793 = pneg %p152
        %p794 = pneg %p176
        %p795 = pneg %p173
        %p796 = pneg %p197
        %p797 = pneg %p194
        %p798 = pneg %p218
        %p799 = pneg %p215
        %p800 = pneg %p239
        %p801 = pneg %p236
        %p802 = scmp.lt.s32.totalorder %s43, 1
        %s803 = scalar_select %p802, %s43, 1
        %s804 = scalar_lea.vmem %s9, %s803
        %p805 = pneg %p265
        %p806 = pneg %p262
        %p807 = scmp.lt.s32.totalorder %s43, 1
        %s808 = scalar_select %p807, %s43, 1
        %s809 = scalar_lea.vmem %s10, %s808
        %p810 = pneg %p291
        %p811 = pneg %p288
        %p812 = scmp.lt.s32.totalorder %s43, 1
        %s813 = scalar_select %p812, %s43, 1
        %s814 = smul.addr %s813, 24
        %s815 = smul.addr %s814, 8
        %s816 = scalar_lea.vmem %s11, %s815
        %p817 = pneg %p317
        %p818 = pneg %p314
        %p819 = scmp.lt.s32.totalorder %s43, 1
        %s820 = scalar_select %p819, %s43, 1
        %s821 = smul.addr %s820, 4
        %s822 = smul.addr %s821, 8
        %s823 = scalar_lea.vmem %s12, %s822
        %p824 = pneg %p343
        %p825 = pneg %p340
        %p826 = scmp.lt.s32.totalorder %s43, 1
        %s827 = scalar_select %p826, %s43, 1
        %s828 = scalar_lea.vmem %s13, %s827
        %p829 = pneg %p369
        %p830 = pneg %p366
        %p831 = scmp.lt.s32.totalorder %s43, 1
        %s832 = scalar_select %p831, %s43, 1
        %s833 = scalar_lea.vmem %s14, %s832
        %p834 = pneg %p395
        %p835 = pneg %p392
        %p836 = scmp.lt.s32.totalorder %s43, 1
        %s837 = scalar_select %p836, %s43, 1
        %s838 = scalar_lea.vmem %s15, %s837
        %p839 = pneg %p421
        %p840 = pneg %p418
        %p841 = scmp.lt.s32.totalorder %s43, 1
        %s842 = scalar_select %p841, %s43, 1
        %s843 = smul.addr %s842, 4
        %s844 = smul.addr %s843, 8
        %s845 = scalar_lea.vmem %s16, %s844
        %p846 = pneg %p447
        %p847 = pneg %p444
        %p848 = scmp.lt.s32.totalorder %s43, 1
        %s849 = scalar_select %p848, %s43, 1
        %s850 = scalar_lea.vmem %s17, %s849
        %p851 = pneg %p473
        %p852 = pneg %p470
        %p853 = scmp.lt.s32.totalorder %s43, 1
        %s854 = scalar_select %p853, %s43, 1
        %s855 = smul.addr %s854, 8
        %s856 = smul.addr %s855, 8
        %s857 = scalar_lea.vmem %s18, %s856
        %p858 = pneg %p499
        %p859 = pneg %p496
        %p860 = scmp.lt.s32.totalorder %s43, 1
        %s861 = scalar_select %p860, %s43, 1
        %s862 = scalar_lea.vmem %s19, %s861
        %p863 = pneg %p525
        %p864 = pneg %p522
        %p865 = pneg %p546
        %p866 = pneg %p543
        %p867 = pneg %p567
        %p868 = pneg %p564
        %p869 = pneg %p588
        %p870 = pneg %p585
        %p871 = pneg %p609
        %p872 = pneg %p606
        %p873 = pneg %p635
        %p874 = pneg %p632
        %s875 = sand.u32 %s622, 1
        %s876 = scalar_lea.sflag [#allocation4], %s875
        %s877 = sand.u32 %s622, 1
        %s878 = scalar_lea.vmem [#allocation3], %s877
        %p879 = scmp.lt.s32.totalorder %s42, 1
        %s880 = scalar_select %p879, %s42, 1
        %s881 = smul.addr %s880, 2
        %s882 = smul.addr %s881, 4
        %s883 = scalar_lea.vmem %s0, %s882
        %p884 = scmp.lt.s32.totalorder %s43, 1
        %s885 = scalar_select %p884, %s43, 1
        %s886 = scalar_lea.vmem %s9, %s885
        %p887 = scmp.lt.s32.totalorder %s43, 1
        %s888 = scalar_select %p887, %s43, 1
        %s889 = scalar_lea.vmem %s10, %s888
        %p890 = scmp.lt.s32.totalorder %s43, 1
        %s891 = scalar_select %p890, %s43, 1
        %s892 = smul.addr %s891, 24
        %s893 = smul.addr %s892, 8
        %s894 = scalar_lea.vmem %s11, %s893
        %p895 = scmp.lt.s32.totalorder %s43, 1
        %s896 = scalar_select %p895, %s43, 1
        %s897 = smul.addr %s896, 4
        %s898 = smul.addr %s897, 8
        %s899 = scalar_lea.vmem %s12, %s898
        %p900 = scmp.lt.s32.totalorder %s43, 1
        %s901 = scalar_select %p900, %s43, 1
        %s902 = scalar_lea.vmem %s13, %s901
        %p903 = scmp.lt.s32.totalorder %s43, 1
        %s904 = scalar_select %p903, %s43, 1
        %s905 = scalar_lea.vmem %s14, %s904
        %p906 = scmp.lt.s32.totalorder %s43, 1
        %s907 = scalar_select %p906, %s43, 1
        %s908 = scalar_lea.vmem %s15, %s907
        %p909 = scmp.lt.s32.totalorder %s43, 1
        %s910 = scalar_select %p909, %s43, 1
        %s911 = smul.addr %s910, 4
        %s912 = smul.addr %s911, 8
        %s913 = scalar_lea.vmem %s16, %s912
        %p914 = scmp.lt.s32.totalorder %s43, 1
        %s915 = scalar_select %p914, %s43, 1
        %s916 = scalar_lea.vmem %s17, %s915
        %p917 = scmp.lt.s32.totalorder %s43, 1
        %s918 = scalar_select %p917, %s43, 1
        %s919 = smul.addr %s918, 8
        %s920 = smul.addr %s919, 8
        %s921 = scalar_lea.vmem %s18, %s920
        %p922 = scmp.lt.s32.totalorder %s43, 1
        %s923 = scalar_select %p922, %s43, 1
        %s924 = scalar_lea.vmem %s19, %s923
        %p925 = scmp.eq.s32.totalorder %s43, 0
        // Predicated region
        $region117: #{fixed_point_vit_forward.1} parent=115 // pred_check
          %p926 = pneg %p925
        $region118: #{fixed_point_vit_forward.1} parent=115 // pred_check_branch
          %928 = sbr.rel (%p926) target = $region120
        $region119: #{fixed_point_vit_forward.1} parent=115 // pred_region
          %v929 = vld [vmem:[%s883] sm:$0xff]
          %v930 = vmax.f32 %v929, -7.999756
          %v931 = vmin.f32 %v930, 7.999756
          %v932 = vmul.f32 %v931, 4096.0
          %v933 = vcvt.f32.s32.to.zero.pseudo %v932
          %v934 = vcvt.s32.f32 %v933
          %v935 = vmul.f32 %v934, 0.00024414063
          %v936 = vld [vmem:[%s1] sm:$0x3]
          %v937 = vld [vmem:[%s2] sm:$0x3]
          %v939 = vcombine.high %v935, %v935
          %vm941 = vcmask 1043456
          %v942 = vsel %vm941, %v935, 0.0
          %vm943 = vcmask 519168
          %v944 = vsel %vm943, %v939, 0.0
          %v945 = vadd.f32 %v942, %v944
          %946 = vadd.xlane.f32.xlu0 %v945
          %v947 = vpop.xlane.xlu0 %946
          %v948 = vrcp.pop 192.0
          %v949 = vmul.f32 %v947, %v948
          %v952 = vunpack.c.l.s4 839922192
          %v953 = vunpack.c.0.s8 %v952
          %v954 = vlaneseq
          %v955 = vshrl.u32 %v954, 7
          %v956 = vsub.s32 %v953, %v955
          %v957 = vrot.slane %v949, %v956
          %v959 = vsub.f32 %v935, %v957
          %v960 = vmul.f32 %v959, %v959
          %v962 = vcombine.high %v960, %v960
          %v964 = vsel %vm941, %v960, 0.0
          %v965 = vsel %vm943, %v962, 0.0
          %v966 = vadd.f32 %v964, %v965
          %967 = vadd.xlane.f32.xlu0 %v966
          %v968 = vpop.xlane.xlu0 %967
          %v969 = vmul.f32 %v968, %v948
          %v970 = vadd.f32 %v969, 1e-05
          %v971 = vrsqrt.pop %v970
          %v974 = vunpack.c.l.s4 839922192
          %v975 = vunpack.c.0.s8 %v974
          %v976 = vlaneseq
          %v977 = vshrl.u32 %v976, 7
          %v978 = vsub.s32 %v975, %v977
          %v979 = vrot.slane %v971, %v978
          %v981 = vmul.f32 %v959, %v979
          %v983 = vlaneseq
          %v984 = vshrl.u32 %v983, 7
          %v985 = vsub.s32 0, %v984
          %v986 = vrot.slane %v936, %v985
          %v987 = vlaneseq
          %v988 = vshrl.u32 %v987, 7
          %v989 = vsub.s32 1, %v988
          %v990 = vrot.slane %v936, %v989
          %v991 = vcombine.low %v986, %v990
          %v993 = vmul.f32 %v981, %v991
          %v995 = vlaneseq
          %v996 = vshrl.u32 %v995, 7
          %v997 = vsub.s32 0, %v996
          %v998 = vrot.slane %v937, %v997
          %v999 = vlaneseq
          %v1000 = vshrl.u32 %v999, 7
          %v1001 = vsub.s32 1, %v1000
          %v1002 = vrot.slane %v937, %v1001
          %v1003 = vcombine.low %v998, %v1002
          %v1005 = vadd.f32 %v993, %v1003
          %v1006 = vmax.f32 %v1005, -7.999756
          %v1007 = vmin.f32 %v1006, 7.999756
          %v1008 = vmul.f32 %v1007, 4096.0
          %v1009 = vcvt.f32.s32.to.zero.pseudo %v1008
          %v1010 = vcvt.s32.f32 %v1009
          %v1011 = vmul.f32 %v1010, 0.00024414063
          %v1012 = vld [vmem:[%s3] sm:$0xff]
          %v1013 = vld [vmem:[%s3 + $0x8] sm:$0xff]
          %v1014 = vld [vmem:[%s3 + $0x10] sm:$0xff]
          %v1015 = vld [vmem:[%s3 + $0x18] sm:$0xff]
          %v1016 = vld [vmem:[%s3 + $0x20] sm:$0xff]
          %v1017 = vld [vmem:[%s3 + $0x28] sm:$0xff]
          %v1018 = vld [vmem:[%s3 + $0x30] sm:$0xff]
          %v1019 = vld [vmem:[%s3 + $0x38] sm:$0xff]
          %v1020 = vld [vmem:[%s3 + $0x40] sm:$0xff]
          %v1021 = vld [vmem:[%s3 + $0x48] sm:$0xff]
          %v1022 = vld [vmem:[%s3 + $0x50] sm:$0xff]
          %v1023 = vld [vmem:[%s3 + $0x58] sm:$0xff]
          %v1024 = vld [vmem:[%s3 + $0x60] sm:$0xff]
          %v1025 = vld [vmem:[%s3 + $0x68] sm:$0xff]
          %v1026 = vld [vmem:[%s3 + $0x70] sm:$0xff]
          %v1027 = vld [vmem:[%s3 + $0x78] sm:$0xff]
          %v1028 = vld [vmem:[%s3 + $0x80] sm:$0xff]
          %v1029 = vld [vmem:[%s3 + $0x88] sm:$0xff]
          %v1030 = vld [vmem:[%s3 + $0x90] sm:$0xff]
          %v1031 = vld [vmem:[%s3 + $0x98] sm:$0xff]
          %v1032 = vld [vmem:[%s3 + $0xa0] sm:$0xff]
          %v1033 = vld [vmem:[%s3 + $0xa8] sm:$0xff]
          %v1034 = vld [vmem:[%s3 + $0xb0] sm:$0xff]
          %v1035 = vld [vmem:[%s3 + $0xb8] sm:$0xff]
          %v1036 = vld [vmem:[%s4] sm:$0x1]
          %v1038 = vlaneseq
          %v1039 = vshrl.u32 %v1038, 7
          %v1040 = vsub.s32 0, %v1039
          %v1041 = vrot.slane %v1036, %v1040
          %v1044 = vcombine.high %v1011, %v1011
          %vm1045 = vcmask 523264
          %v1046 = vsel %vm1045, %v1044, 0
          %1048 = vmatprep.subr.mxu0 0.0
          %1049 = vmatpush1.msra.mxu0 %v1012
          %1050 = vmatprep.subr.mxu0 0.0
          %1051 = vmatpush1.msra.mxu0 %v1013
          %1052 = vmatprep.subr.mxu0 0.0
          %1053 = vmatpush1.msra.mxu0 %v1014
          %1054 = vmatprep.subr.mxu0 0.0
          %1055 = vmatpush1.msra.mxu0 %v1015
          %1056 = vmatprep.subr.mxu0 0.0
          %1057 = vmatpush1.msra.mxu0 %v1016
          %1058 = vmatprep.subr.mxu0 0.0
          %1059 = vmatpush1.msra.mxu0 %v1017
          %1060 = vmatprep.subr.mxu0 0.0
          %1061 = vmatpush1.msra.mxu0 %v1018
          %1062 = vmatprep.subr.mxu0 0.0
          %1063 = vmatpush1.msra.mxu0 %v1019
          %1064 = vmatprep.subr.mxu0 0.0
          %1065 = vmatpush1.msra.mxu0 %v1020
          %1066 = vmatprep.subr.mxu0 0.0
          %1067 = vmatpush1.msra.mxu0 %v1021
          %1068 = vmatprep.subr.mxu0 0.0
          %1069 = vmatpush1.msra.mxu0 %v1022
          %1070 = vmatprep.subr.mxu0 0.0
          %1071 = vmatpush1.msra.mxu0 %v1023
          %1072 = vmatprep.subr.mxu0 0.0
          %1073 = vmatpush1.msra.mxu0 %v1024
          %1074 = vmatprep.subr.mxu0 0.0
          %1075 = vmatpush1.msra.mxu0 %v1025
          %1076 = vmatprep.subr.mxu0 0.0
          %1077 = vmatpush1.msra.mxu0 %v1026
          %1078 = vmatprep.subr.mxu0 0.0
          %1079 = vmatpush1.msra.mxu0 %v1027
          %1080 = vmatprep.subr.mxu0 0.0
          %1081 = vmatpush1.msra.mxu0 %v1028
          %1082 = vmatprep.subr.mxu0 0.0
          %1083 = vmatpush1.msra.mxu0 %v1029
          %1084 = vmatprep.subr.mxu0 0.0
          %1085 = vmatpush1.msra.mxu0 %v1030
          %1086 = vmatprep.subr.mxu0 0.0
          %1087 = vmatpush1.msra.mxu0 %v1031
          %1088 = vmatprep.subr.mxu0 0.0
          %1089 = vmatpush1.msra.mxu0 %v1032
          %1090 = vmatprep.subr.mxu0 0.0
          %1091 = vmatpush1.msra.mxu0 %v1033
          %1092 = vmatprep.subr.mxu0 0.0
          %1093 = vmatpush1.msra.mxu0 %v1034
          %1094 = vmatprep.subr.mxu0 0.0
          %1095 = vmatpush1.msra.mxu0 %v1035
          %1096 = vmatprep.subr.mxu0 0.0
          %1097 = vmatpush1.msra.mxu0 0.0
          %1098 = vmatprep.subr.mxu0 0.0
          %1099 = vmatpush1.msra.mxu0 0.0
          %1100 = vmatprep.subr.mxu0 0.0
          %1101 = vmatpush1.msra.mxu0 0.0
          %1102 = vmatprep.subr.mxu0 0.0
          %1103 = vmatpush1.msra.mxu0 0.0
          %1104 = vmatprep.subr.mxu0 0.0
          %1105 = vmatpush1.msra.mxu0 0.0
          %1106 = vmatprep.subr.mxu0 0.0
          %1107 = vmatpush1.msra.mxu0 0.0
          %1108 = vmatprep.subr.mxu0 0.0
          %1109 = vmatpush1.msra.mxu0 0.0
          %1110 = vmatprep.subr.mxu0 0.0
          %1111 = vmatpush1.msra.mxu0 0.0
          %1112 = vmatprep.mubr.f32.mxu0 %v1046
          %1113 = vmatmul.mubr.f32.gmra.mrb[0].mxu0 %v1011
          %v1114 = vpop.f32.mrb[0].mxu0
          %v1115 = vadd.f32 %v1041, %v1114
          %v1116 = vpop.f32.mrb[0].mxu0
          %1117 = vdwg.mxu0
          %v1118 = vmax.f32 %v1115, -7.999756
          %v1119 = vmin.f32 %v1118, 7.999756
          %v1120 = vmul.f32 %v1119, 4096.0
          %v1121 = vcvt.f32.s32.to.zero.pseudo %v1120
          %v1122 = vcvt.s32.f32 %v1121
          %v1123 = vmul.f32 %v1122, 0.00024414063
          %v1124 = vld [vmem:[%s5] sm:$0x1]
          %v1125 = vld [vmem:[%s6] sm:$0x1]
          %vm1126 = vcmask 257024
          %v1127 = vsel %vm1126, %v1123, 0.0
          %1128 = vadd.xlane.f32.xlu0 %v1127
          %v1129 = vpop.xlane.xlu0 %1128
          %v1130 = vrcp.pop 32.0
          %v1131 = vmul.f32 %v1129, %v1130
          %v1132 = vsub.f32 %v1123, %v1131
          %v1133 = vmul.f32 %v1132, %v1132
          %v1134 = vsel %vm1126, %v1133, 0.0
          %1135 = vadd.xlane.f32.xlu0 %v1134
          %v1136 = vpop.xlane.xlu0 %1135
          %v1137 = vmul.f32 %v1136, %v1130
          %v1138 = vadd.f32 %v1137, 1e-05
          %v1139 = vrsqrt.pop %v1138
          %v1140 = vmul.f32 %v1132, %v1139
          %v1142 = vlaneseq
          %v1143 = vshrl.u32 %v1142, 7
          %v1144 = vsub.s32 0, %v1143
          %v1145 = vrot.slane %v1124, %v1144
          %v1147 = vmul.f32 %v1140, %v1145
          %v1149 = vlaneseq
          %v1150 = vshrl.u32 %v1149, 7
          %v1151 = vsub.s32 0, %v1150
          %v1152 = vrot.slane %v1125, %v1151
          %v1154 = vadd.f32 %v1147, %v1152
          %v1155 = vmax.f32 %v1154, -7.999756
          %v1156 = vmin.f32 %v1155, 7.999756
          %v1157 = vmul.f32 %v1156, 4096.0
          %v1158 = vcvt.f32.s32.to.zero.pseudo %v1157
          %v1159 = vcvt.s32.f32 %v1158
          %v1160 = vmul.f32 %v1159, 0.00024414063
          %v1161 = vld [vmem:[%s8] sm:$0x1f]
          %v1162 = vld [vmem:[%s7] sm:$0x1]
          %v1163 = vadd.f32 %v1162, %v1161
          %v1164 = vmax.f32 %v1163, -7.999756
          %v1165 = vmin.f32 %v1164, 7.999756
          %v1166 = vmul.f32 %v1165, 4096.0
          %v1167 = vcvt.f32.s32.to.zero.pseudo %v1166
          %v1168 = vcvt.s32.f32 %v1167
          %v1169 = vmul.f32 %v1168, 0.00024414063
          %vm1170 = vcmask 253952
          %1171 = vst.msk [vmem:[#allocation2] sm:$0x1] %vm1170, %v1169
          %v1173 = vrot.slane %v1161, 1
          %v1175 = vadd.f32 %v1160, %v1173
          %v1176 = vmax.f32 %v1175, -7.999756
          %v1177 = vmin.f32 %v1176, 7.999756
          %v1178 = vmul.f32 %v1177, 4096.0
          %v1179 = vcvt.f32.s32.to.zero.pseudo %v1178
          %v1180 = vcvt.s32.f32 %v1179
          %v1181 = vmul.f32 %v1180, 0.00024414063
          %1182 = vst.msk [vmem:[#allocation2 + $0x1] sm:$0xf] %vm1126, %v1181
        $region120: #{fixed_point_vit_forward.1} parent=115 // pred_fallthru
          _
        %v1183 = vld [vmem:[#allocation2] sm:$0x1f]
        %v1184 = vld [vmem:[%s886] sm:$0x1]
        %v1185 = vld [vmem:[%s889] sm:$0x1]
        %vm1186 = vcmask 258048
        %v1187 = vsel %vm1186, %v1183, 0.0
        %1188 = vadd.xlane.f32.xlu0 %v1187
        %v1189 = vpop.xlane.xlu0 %1188
        %v1190 = vrcp.pop 32.0
        %v1191 = vmul.f32 %v1189, %v1190
        %v1192 = vsub.f32 %v1183, %v1191
        %v1193 = vmul.f32 %v1192, %v1192
        %v1194 = vsel %vm1186, %v1193, 0.0
        %1195 = vadd.xlane.f32.xlu0 %v1194
        %v1196 = vpop.xlane.xlu0 %1195
        %v1197 = vmul.f32 %v1196, %v1190
        %v1198 = vadd.f32 %v1197, 1e-05
        %v1199 = vrsqrt.pop %v1198
        %v1200 = vmul.f32 %v1192, %v1199
        %v1202 = vlaneseq
        %v1203 = vshrl.u32 %v1202, 7
        %v1204 = vsub.s32 0, %v1203
        %v1205 = vrot.slane %v1184, %v1204
        %v1207 = vmul.f32 %v1200, %v1205
        %v1209 = vlaneseq
        %v1210 = vshrl.u32 %v1209, 7
        %v1211 = vsub.s32 0, %v1210
        %v1212 = vrot.slane %v1185, %v1211
        %v1214 = vadd.f32 %v1207, %v1212
        %v1215 = vmax.f32 %v1214, -7.999756
        %v1216 = vmin.f32 %v1215, 7.999756
        %v1217 = vmul.f32 %v1216, 4096.0
        %v1218 = vcvt.f32.s32.to.zero.pseudo %v1217
        %v1219 = vcvt.s32.f32 %v1218
        %v1220 = vmul.f32 %v1219, 0.00024414063
        %v1221 = vld [vmem:[%s894] sm:$0xff]
        %v1222 = vld [vmem:[%s894 + $0x8] sm:$0xff]
        %v1223 = vld [vmem:[%s894 + $0x10] sm:$0xff]
        %v1224 = vld [vmem:[%s894 + $0x18] sm:$0xff]
        %vm1225 = vcmask 261120
        %v1227 = vsel %vm1225, %v1220, 0
        %1229 = vmatprep.subr.mxu0 0.0
        %1230 = vmatpush1.msra.mxu0 %v1221
        %1231 = vmatprep.subr.mxu0 0.0
        %1232 = vmatpush1.msra.mxu0 %v1222
        %1233 = vmatprep.subr.mxu0 0.0
        %1234 = vmatpush1.msra.mxu0 %v1223
        %1235 = vmatprep.subr.mxu0 0.0
        %1236 = vmatpush1.msra.mxu0 %v1224
        %1237 = vmatprep.subr.mxu0 0.0
        %1238 = vmatpush1.msra.mxu0 0.0
        %1239 = vmatprep.subr.mxu0 0.0
        %1240 = vmatpush1.msra.mxu0 0.0
        %1241 = vmatprep.subr.mxu0 0.0
        %1242 = vmatpush1.msra.mxu0 0.0
        %1243 = vmatprep.subr.mxu0 0.0
        %1244 = vmatpush1.msra.mxu0 0.0
        %1245 = vmatprep.subr.mxu0 0.0
        %1246 = vmatpush1.msra.mxu0 0.0
        %1247 = vmatprep.subr.mxu0 0.0
        %1248 = vmatpush1.msra.mxu0 0.0
        %1249 = vmatprep.subr.mxu0 0.0
        %1250 = vmatpush1.msra.mxu0 0.0
        %1251 = vmatprep.subr.mxu0 0.0
        %1252 = vmatpush1.msra.mxu0 0.0
        %1253 = vmatprep.subr.mxu0 0.0
        %1254 = vmatpush1.msra.mxu0 0.0
        %1255 = vmatprep.subr.mxu0 0.0
        %1256 = vmatpush1.msra.mxu0 0.0
        %1257 = vmatprep.subr.mxu0 0.0
        %1258 = vmatpush1.msra.mxu0 0.0
        %1259 = vmatprep.subr.mxu0 0.0
        %1260 = vmatpush1.msra.mxu0 0.0
        %1261 = vmatprep.subr.mxu0 0.0
        %1262 = vmatpush1.msra.mxu0 0.0
        %1263 = vmatprep.subr.mxu0 0.0
        %1264 = vmatpush1.msra.mxu0 0.0
        %1265 = vmatprep.subr.mxu0 0.0
        %1266 = vmatpush1.msra.mxu0 0.0
        %1267 = vmatprep.subr.mxu0 0.0
        %1268 = vmatpush1.msra.mxu0 0.0
        %1269 = vmatprep.subr.mxu0 0.0
        %1270 = vmatpush1.msra.mxu0 0.0
        %1271 = vmatprep.subr.mxu0 0.0
        %1272 = vmatpush1.msra.mxu0 0.0
        %1273 = vmatprep.subr.mxu0 0.0
        %1274 = vmatpush1.msra.mxu0 0.0
        %1275 = vmatprep.subr.mxu0 0.0
        %1276 = vmatpush1.msra.mxu0 0.0
        %1277 = vmatprep.subr.mxu0 0.0
        %1278 = vmatpush1.msra.mxu0 0.0
        %1279 = vmatprep.subr.mxu0 0.0
        %1280 = vmatpush1.msra.mxu0 0.0
        %1281 = vmatprep.subr.mxu0 0.0
        %1282 = vmatpush1.msra.mxu0 0.0
        %1283 = vmatprep.subr.mxu0 0.0
        %1284 = vmatpush1.msra.mxu0 0.0
        %1285 = vmatprep.subr.mxu0 0.0
        %1286 = vmatpush1.msra.mxu0 0.0
        %1287 = vmatprep.subr.mxu0 0.0
        %1288 = vmatpush1.msra.mxu0 0.0
        %1289 = vmatprep.subr.mxu0 0.0
        %1290 = vmatpush1.msra.mxu0 0.0
        %1291 = vmatprep.subr.mxu0 0.0
        %1292 = vmatpush1.msra.mxu0 0.0
        %1293 = vmatprep.mubr.f32.mxu0 0.0
        %1294 = vmatmul.mubr.f32.gmra.mrb[0].mxu0 %v1227
        %v1295 = vpop.f32.mrb[0].mxu0
        %v1296 = vadd.f32 0.0, %v1295
        %v1297 = vpop.f32.mrb[0].mxu0
        %1298 = vdwg.mxu0
        %v1299 = vmax.f32 %v1296, -7.999756
        %v1300 = vmin.f32 %v1299, 7.999756
        %v1301 = vmul.f32 %v1300, 4096.0
        %v1302 = vcvt.f32.s32.to.zero.pseudo %v1301
        %v1303 = vcvt.s32.f32 %v1302
        %v1304 = vmul.f32 %v1303, 0.00024414063
        %s1305 = scalar_lea.vmem %s894, 32
        %v1306 = vld [vmem:[%s1305] sm:$0xff]
        %v1307 = vld [vmem:[%s1305 + $0x8] sm:$0xff]
        %v1308 = vld [vmem:[%s1305 + $0x10] sm:$0xff]
        %v1309 = vld [vmem:[%s1305 + $0x18] sm:$0xff]
        %1310 = vmatprep.subr.mxu0 0.0
        %1311 = vmatpush1.msra.mxu0 %v1306
        %1312 = vmatprep.subr.mxu0 0.0
        %1313 = vmatpush1.msra.mxu0 %v1307
        %1314 = vmatprep.subr.mxu0 0.0
        %1315 = vmatpush1.msra.mxu0 %v1308
        %1316 = vmatprep.subr.mxu0 0.0
        %1317 = vmatpush1.msra.mxu0 %v1309
        %1318 = vmatprep.subr.mxu0 0.0
        %1319 = vmatpush1.msra.mxu0 0.0
        %1320 = vmatprep.subr.mxu0 0.0
        %1321 = vmatpush1.msra.mxu0 0.0
        %1322 = vmatprep.subr.mxu0 0.0
        %1323 = vmatpush1.msra.mxu0 0.0
        %1324 = vmatprep.subr.mxu0 0.0
        %1325 = vmatpush1.msra.mxu0 0.0
        %1326 = vmatprep.subr.mxu0 0.0
        %1327 = vmatpush1.msra.mxu0 0.0
        %1328 = vmatprep.subr.mxu0 0.0
        %1329 = vmatpush1.msra.mxu0 0.0
        %1330 = vmatprep.subr.mxu0 0.0
        %1331 = vmatpush1.msra.mxu0 0.0
        %1332 = vmatprep.subr.mxu0 0.0
        %1333 = vmatpush1.msra.mxu0 0.0
        %1334 = vmatprep.subr.mxu0 0.0
        %1335 = vmatpush1.msra.mxu0 0.0
        %1336 = vmatprep.subr.mxu0 0.0
        %1337 = vmatpush1.msra.mxu0 0.0
        %1338 = vmatprep.subr.mxu0 0.0
        %1339 = vmatpush1.msra.mxu0 0.0
        %1340 = vmatprep.subr.mxu0 0.0
        %1341 = vmatpush1.msra.mxu0 0.0
        %1342 = vmatprep.subr.mxu0 0.0
        %1343 = vmatpush1.msra.mxu0 0.0
        %1344 = vmatprep.subr.mxu0 0.0
        %1345 = vmatpush1.msra.mxu0 0.0
        %1346 = vmatprep.subr.mxu0 0.0
        %1347 = vmatpush1.msra.mxu0 0.0
        %1348 = vmatprep.subr.mxu0 0.0
        %1349 = vmatpush1.msra.mxu0 0.0
        %1350 = vmatprep.subr.mxu0 0.0
        %1351 = vmatpush1.msra.mxu0 0.0
        %1352 = vmatprep.subr.mxu0 0.0
        %1353 = vmatpush1.msra.mxu0 0.0
        %1354 = vmatprep.subr.mxu0 0.0
        %1355 = vmatpush1.msra.mxu0 0.0
        %1356 = vmatprep.subr.mxu0 0.0
        %1357 = vmatpush1.msra.mxu0 0.0
        %1358 = vmatprep.subr.mxu0 0.0
        %1359 = vmatpush1.msra.mxu0 0.0
        %1360 = vmatprep.subr.mxu0 0.0
        %1361 = vmatpush1.msra.mxu0 0.0
        %1362 = vmatprep.subr.mxu0 0.0
        %1363 = vmatpush1.msra.mxu0 0.0
        %1364 = vmatprep.subr.mxu0 0.0
        %1365 = vmatpush1.msra.mxu0 0.0
        %1366 = vmatprep.subr.mxu0 0.0
        %1367 = vmatpush1.msra.mxu0 0.0
        %1368 = vmatprep.subr.mxu0 0.0
        %1369 = vmatpush1.msra.mxu0 0.0
        %1370 = vmatprep.subr.mxu0 0.0
        %1371 = vmatpush1.msra.mxu0 0.0
        %1372 = vmatprep.subr.mxu0 0.0
        %1373 = vmatpush1.msra.mxu0 0.0
        %1374 = vmatprep.mubr.f32.mxu0 0.0
        %1375 = vmatmul.mubr.f32.gmra.mrb[0].mxu0 %v1227
        %v1376 = vpop.f32.mrb[0].mxu0
        %v1377 = vadd.f32 0.0, %v1376
        %v1378 = vpop.f32.mrb[0].mxu0
        %1379 = vdwg.mxu0
        %v1380 = vmax.f32 %v1377, -7.999756
        %v1381 = vmin.f32 %v1380, 7.999756
        %v1382 = vmul.f32 %v1381, 4096.0
        %v1383 = vcvt.f32.s32.to.zero.pseudo %v1382
        %v1384 = vcvt.s32.f32 %v1383
        %v1385 = vmul.f32 %v1384, 0.00024414063
        %s1386 = scalar_lea.vmem %s894, 64
        %v1387 = vld [vmem:[%s1386] sm:$0xff]
        %v1388 = vld [vmem:[%s1386 + $0x8] sm:$0xff]
        %v1389 = vld [vmem:[%s1386 + $0x10] sm:$0xff]
        %v1390 = vld [vmem:[%s1386 + $0x18] sm:$0xff]
        %1391 = vmatprep.subr.mxu0 0.0
        %1392 = vmatpush1.msra.mxu0 %v1387
        %1393 = vmatprep.subr.mxu0 0.0
        %1394 = vmatpush1.msra.mxu0 %v1388
        %1395 = vmatprep.subr.mxu0 0.0
        %1396 = vmatpush1.msra.mxu0 %v1389
        %1397 = vmatprep.subr.mxu0 0.0
        %1398 = vmatpush1.msra.mxu0 %v1390
        %1399 = vmatprep.subr.mxu0 0.0
        %1400 = vmatpush1.msra.mxu0 0.0
        %1401 = vmatprep.subr.mxu0 0.0
        %1402 = vmatpush1.msra.mxu0 0.0
        %1403 = vmatprep.subr.mxu0 0.0
        %1404 = vmatpush1.msra.mxu0 0.0
        %1405 = vmatprep.subr.mxu0 0.0
        %1406 = vmatpush1.msra.mxu0 0.0
        %1407 = vmatprep.subr.mxu0 0.0
        %1408 = vmatpush1.msra.mxu0 0.0
        %1409 = vmatprep.subr.mxu0 0.0
        %1410 = vmatpush1.msra.mxu0 0.0
        %1411 = vmatprep.subr.mxu0 0.0
        %1412 = vmatpush1.msra.mxu0 0.0
        %1413 = vmatprep.subr.mxu0 0.0
        %1414 = vmatpush1.msra.mxu0 0.0
        %1415 = vmatprep.subr.mxu0 0.0
        %1416 = vmatpush1.msra.mxu0 0.0
        %1417 = vmatprep.subr.mxu0 0.0
        %1418 = vmatpush1.msra.mxu0 0.0
        %1419 = vmatprep.subr.mxu0 0.0
        %1420 = vmatpush1.msra.mxu0 0.0
        %1421 = vmatprep.subr.mxu0 0.0
        %1422 = vmatpush1.msra.mxu0 0.0
        %1423 = vmatprep.subr.mxu0 0.0
        %1424 = vmatpush1.msra.mxu0 0.0
        %1425 = vmatprep.subr.mxu0 0.0
        %1426 = vmatpush1.msra.mxu0 0.0
        %1427 = vmatprep.subr.mxu0 0.0
        %1428 = vmatpush1.msra.mxu0 0.0
        %1429 = vmatprep.subr.mxu0 0.0
        %1430 = vmatpush1.msra.mxu0 0.0
        %1431 = vmatprep.subr.mxu0 0.0
        %1432 = vmatpush1.msra.mxu0 0.0
        %1433 = vmatprep.subr.mxu0 0.0
        %1434 = vmatpush1.msra.mxu0 0.0
        %1435 = vmatprep.subr.mxu0 0.0
        %1436 = vmatpush1.msra.mxu0 0.0
        %1437 = vmatprep.subr.mxu0 0.0
        %1438 = vmatpush1.msra.mxu0 0.0
        %1439 = vmatprep.subr.mxu0 0.0
        %1440 = vmatpush1.msra.mxu0 0.0
        %1441 = vmatprep.subr.mxu0 0.0
        %1442 = vmatpush1.msra.mxu0 0.0
        %1443 = vmatprep.subr.mxu0 0.0
        %1444 = vmatpush1.msra.mxu0 0.0
        %1445 = vmatprep.subr.mxu0 0.0
        %1446 = vmatpush1.msra.mxu0 0.0
        %1447 = vmatprep.subr.mxu0 0.0
        %1448 = vmatpush1.msra.mxu0 0.0
        %1449 = vmatprep.subr.mxu0 0.0
        %1450 = vmatpush1.msra.mxu0 0.0
        %1451 = vmatprep.subr.mxu0 0.0
        %1452 = vmatpush1.msra.mxu0 0.0
        %1453 = vmatprep.subr.mxu0 0.0
        %1454 = vmatpush1.msra.mxu0 0.0
        %1455 = vmatprep.mubr.f32.mxu0 0.0
        %1456 = vmatmul.mubr.f32.gmra.mrb[0].mxu0 %v1227
        %v1457 = vpop.f32.mrb[0].mxu0
        %v1458 = vadd.f32 0.0, %v1457
        %v1459 = vpop.f32.mrb[0].mxu0
        %1460 = vdwg.mxu0
        %v1461 = vmax.f32 %v1458, -7.999756
        %v1462 = vmin.f32 %v1461, 7.999756
        %v1463 = vmul.f32 %v1462, 4096.0
        %v1464 = vcvt.f32.s32.to.zero.pseudo %v1463
        %v1465 = vcvt.s32.f32 %v1464
        %v1466 = vmul.f32 %v1465, 0.00024414063
        %vm1467 = vcmask 130048
        %v1469 = vsel %vm1467, %v1304, 0
        %v1472 = vsel %vm1467, %v1385, 0
        %1474 = vmatprep.subr.mxu0 0.0
        %1475 = vmatpush1.xpose.msra.mxu0 %v1472
        %1476 = vmatprep.subr.mxu0 0.0
        %1477 = vmatpush1.xpose.msra.mxu0 0.0
        %1478 = vmatprep.subr.mxu0 0.0
        %1479 = vmatpush1.xpose.msra.mxu0 0.0
        %1480 = vmatprep.subr.mxu0 0.0
        %1481 = vmatpush1.xpose.msra.mxu0 0.0
        %1482 = vmatprep.subr.mxu0 0.0
        %1483 = vmatpush1.xpose.msra.mxu0 0.0
        %1484 = vmatprep.subr.mxu0 0.0
        %1485 = vmatpush1.xpose.msra.mxu0 0.0
        %1486 = vmatprep.subr.mxu0 0.0
        %1487 = vmatpush1.xpose.msra.mxu0 0.0
        %1488 = vmatprep.subr.mxu0 0.0
        %1489 = vmatpush1.xpose.msra.mxu0 0.0
        %1490 = vmatprep.subr.mxu0 0.0
        %1491 = vmatpush1.xpose.msra.mxu0 0.0
        %1492 = vmatprep.subr.mxu0 0.0
        %1493 = vmatpush1.xpose.msra.mxu0 0.0
        %1494 = vmatprep.subr.mxu0 0.0
        %1495 = vmatpush1.xpose.msra.mxu0 0.0
        %1496 = vmatprep.subr.mxu0 0.0
        %1497 = vmatpush1.xpose.msra.mxu0 0.0
        %1498 = vmatprep.subr.mxu0 0.0
        %1499 = vmatpush1.xpose.msra.mxu0 0.0
        %1500 = vmatprep.subr.mxu0 0.0
        %1501 = vmatpush1.xpose.msra.mxu0 0.0
        %1502 = vmatprep.subr.mxu0 0.0
        %1503 = vmatpush1.xpose.msra.mxu0 0.0
        %1504 = vmatprep.subr.mxu0 0.0
        %1505 = vmatpush1.xpose.msra.mxu0 0.0
        %1506 = vmatprep.subr.mxu0 0.0
        %1507 = vmatpush1.xpose.msra.mxu0 0.0
        %1508 = vmatprep.subr.mxu0 0.0
        %1509 = vmatpush1.xpose.msra.mxu0 0.0
        %1510 = vmatprep.subr.mxu0 0.0
        %1511 = vmatpush1.xpose.msra.mxu0 0.0
        %1512 = vmatprep.subr.mxu0 0.0
        %1513 = vmatpush1.xpose.msra.mxu0 0.0
        %1514 = vmatprep.subr.mxu0 0.0
        %1515 = vmatpush1.xpose.msra.mxu0 0.0
        %1516 = vmatprep.subr.mxu0 0.0
        %1517 = vmatpush1.xpose.msra.mxu0 0.0
        %1518 = vmatprep.subr.mxu0 0.0
        %1519 = vmatpush1.xpose.msra.mxu0 0.0
        %1520 = vmatprep.subr.mxu0 0.0
        %1521 = vmatpush1.xpose.msra.mxu0 0.0
        %1522 = vmatprep.subr.mxu0 0.0
        %1523 = vmatpush1.xpose.msra.mxu0 0.0
        %1524 = vmatprep.subr.mxu0 0.0
        %1525 = vmatpush1.xpose.msra.mxu0 0.0
        %1526 = vmatprep.subr.mxu0 0.0
        %1527 = vmatpush1.xpose.msra.mxu0 0.0
        %1528 = vmatprep.subr.mxu0 0.0
        %1529 = vmatpush1.xpose.msra.mxu0 0.0
        %1530 = vmatprep.subr.mxu0 0.0
        %1531 = vmatpush1.xpose.msra.mxu0 0.0
        %1532 = vmatprep.subr.mxu0 0.0
        %1533 = vmatpush1.xpose.msra.mxu0 0.0
        %1534 = vmatprep.subr.mxu0 0.0
        %1535 = vmatpush1.xpose.msra.mxu0 0.0
        %1536 = vmatprep.subr.mxu0 0.0
        %1537 = vmatpush1.xpose.msra.mxu0 0.0
        %1538 = vmatprep.mubr.f32.mxu0 0.0
        %1539 = vmatmul.mubr.f32.gmra.mrb[0].mxu0 %v1469
        %v1540 = vpop.f32.mrb[0].mxu0
        %v1541 = vadd.f32 0.0, %v1540
        %v1542 = vpop.f32.mrb[0].mxu0
        %1543 = vdwg.mxu0
        %v1544 = vmul.f32 %v1541, 0.25
        %v1545 = vmax.f32 %v1544, -7.999756
        %v1546 = vmin.f32 %v1545, 7.999756
        %v1547 = vmul.f32 %v1546, 4096.0
        %v1548 = vcvt.f32.s32.to.zero.pseudo %v1547
        %v1549 = vcvt.s32.f32 %v1548
        %v1550 = vmul.f32 %v1549, 0.00024414063
        %vm1551 = vcmask 36864
        %v1552 = vsel %vm1551, %v1550, -inf
        %1553 = vmax.xlane.f32.xlu0 %v1552
        %v1554 = vpop.xlane.xlu0 %1553
        %v1555 = vsub.f32 %v1550, %v1554
        %v1556 = vmul.f32 %v1555, 1.442695
        %v1557 = vpow.pop %v1556
        %v1558 = vsel %vm1551, %v1557, 0.0
        %1559 = vadd.xlane.f32.xlu0 %v1558
        %v1560 = vpop.xlane.xlu0 %1559
        %v1561 = vrcp.pop %v1560
        %v1562 = vmul.f32 %v1557, %v1561
        %v1563 = vmax.f32 %v1562, -7.999756
        %v1564 = vmin.f32 %v1563, 7.999756
        %v1565 = vmul.f32 %v1564, 4096.0
        %v1566 = vcvt.f32.s32.to.zero.pseudo %v1565
        %v1567 = vcvt.s32.f32 %v1566
        %v1568 = vmul.f32 %v1567, 0.00024414063
        %vm1569 = vcmask 39936
        %v1571 = vsel %vm1569, %v1568, 0
        %vm1573 = vcmask 1044480
        %v1575 = vsel %vm1573, %v1466, 0
        %1577 = vmatprep.subr.mxu0 0.0
        %1578 = vmatpush1.msra.mxu0 %v1575
        %1579 = vmatprep.subr.mxu0 0.0
        %1580 = vmatpush1.msra.mxu0 0.0
        %1581 = vmatprep.subr.mxu0 0.0
        %1582 = vmatpush1.msra.mxu0 0.0
        %1583 = vmatprep.subr.mxu0 0.0
        %1584 = vmatpush1.msra.mxu0 0.0
        %1585 = vmatprep.subr.mxu0 0.0
        %1586 = vmatpush1.msra.mxu0 0.0
        %1587 = vmatprep.subr.mxu0 0.0
        %1588 = vmatpush1.msra.mxu0 0.0
        %1589 = vmatprep.subr.mxu0 0.0
        %1590 = vmatpush1.msra.mxu0 0.0
        %1591 = vmatprep.subr.mxu0 0.0
        %1592 = vmatpush1.msra.mxu0 0.0
        %1593 = vmatprep.subr.mxu0 0.0
        %1594 = vmatpush1.msra.mxu0 0.0
        %1595 = vmatprep.subr.mxu0 0.0
        %1596 = vmatpush1.msra.mxu0 0.0
        %1597 = vmatprep.subr.mxu0 0.0
        %1598 = vmatpush1.msra.mxu0 0.0
        %1599 = vmatprep.subr.mxu0 0.0
        %1600 = vmatpush1.msra.mxu0 0.0
        %1601 = vmatprep.subr.mxu0 0.0
        %1602 = vmatpush1.msra.mxu0 0.0
        %1603 = vmatprep.subr.mxu0 0.0
        %1604 = vmatpush1.msra.mxu0 0.0
        %1605 = vmatprep.subr.mxu0 0.0
        %1606 = vmatpush1.msra.mxu0 0.0
        %1607 = vmatprep.subr.mxu0 0.0
        %1608 = vmatpush1.msra.mxu0 0.0
        %1609 = vmatprep.subr.mxu0 0.0
        %1610 = vmatpush1.msra.mxu0 0.0
        %1611 = vmatprep.subr.mxu0 0.0
        %1612 = vmatpush1.msra.mxu0 0.0
        %1613 = vmatprep.subr.mxu0 0.0
        %1614 = vmatpush1.msra.mxu0 0.0
        %1615 = vmatprep.subr.mxu0 0.0
        %1616 = vmatpush1.msra.mxu0 0.0
        %1617 = vmatprep.subr.mxu0 0.0
        %1618 = vmatpush1.msra.mxu0 0.0
        %1619 = vmatprep.subr.mxu0 0.0
        %1620 = vmatpush1.msra.mxu0 0.0
        %1621 = vmatprep.subr.mxu0 0.0
        %1622 = vmatpush1.msra.mxu0 0.0
        %1623 = vmatprep.subr.mxu0 0.0
        %1624 = vmatpush1.msra.mxu0 0.0
        %1625 = vmatprep.subr.mxu0 0.0
        %1626 = vmatpush1.msra.mxu0 0.0
        %1627 = vmatprep.subr.mxu0 0.0
        %1628 = vmatpush1.msra.mxu0 0.0
        %1629 = vmatprep.subr.mxu0 0.0
        %1630 = vmatpush1.msra.mxu0 0.0
        %1631 = vmatprep.subr.mxu0 0.0
        %1632 = vmatpush1.msra.mxu0 0.0
        %1633 = vmatprep.subr.mxu0 0.0
        %1634 = vmatpush1.msra.mxu0 0.0
        %1635 = vmatprep.subr.mxu0 0.0
        %1636 = vmatpush1.msra.mxu0 0.0
        %1637 = vmatprep.subr.mxu0 0.0
        %1638 = vmatpush1.msra.mxu0 0.0
        %1639 = vmatprep.subr.mxu0 0.0
        %1640 = vmatpush1.msra.mxu0 0.0
        %1641 = vmatprep.mubr.f32.mxu0 0.0
        %1642 = vmatmul.mubr.f32.gmra.mrb[0].mxu0 %v1571
        %v1643 = vpop.f32.mrb[0].mxu0
        %v1644 = vadd.f32 0.0, %v1643
        %v1645 = vpop.f32.mrb[0].mxu0
        %1646 = vdwg.mxu0
        %v1647 = vmax.f32 %v1644, -7.999756
        %v1648 = vmin.f32 %v1647, 7.999756
        %v1649 = vmul.f32 %v1648, 4096.0
        %v1650 = vcvt.f32.s32.to.zero.pseudo %v1649
        %v1651 = vcvt.s32.f32 %v1650
        %v1652 = vmul.f32 %v1651, 0.00024414063
        %s1653 = scalar_lea.vmem %s894, 96
        %v1654 = vld [vmem:[%s1653] sm:$0xff]
        %v1655 = vld [vmem:[%s1653 + $0x8] sm:$0xff]
        %v1656 = vld [vmem:[%s1653 + $0x10] sm:$0xff]
        %v1657 = vld [vmem:[%s1653 + $0x18] sm:$0xff]
        %1658 = vmatprep.subr.mxu0 0.0
        %1659 = vmatpush1.msra.mxu0 %v1654
        %1660 = vmatprep.subr.mxu0 0.0
        %1661 = vmatpush1.msra.mxu0 %v1655
        %1662 = vmatprep.subr.mxu0 0.0
        %1663 = vmatpush1.msra.mxu0 %v1656
        %1664 = vmatprep.subr.mxu0 0.0
        %1665 = vmatpush1.msra.mxu0 %v1657
        %1666 = vmatprep.subr.mxu0 0.0
        %1667 = vmatpush1.msra.mxu0 0.0
        %1668 = vmatprep.subr.mxu0 0.0
        %1669 = vmatpush1.msra.mxu0 0.0
        %1670 = vmatprep.subr.mxu0 0.0
        %1671 = vmatpush1.msra.mxu0 0.0
        %1672 = vmatprep.subr.mxu0 0.0
        %1673 = vmatpush1.msra.mxu0 0.0
        %1674 = vmatprep.subr.mxu0 0.0
        %1675 = vmatpush1.msra.mxu0 0.0
        %1676 = vmatprep.subr.mxu0 0.0
        %1677 = vmatpush1.msra.mxu0 0.0
        %1678 = vmatprep.subr.mxu0 0.0
        %1679 = vmatpush1.msra.mxu0 0.0
        %1680 = vmatprep.subr.mxu0 0.0
        %1681 = vmatpush1.msra.mxu0 0.0
        %1682 = vmatprep.subr.mxu0 0.0
        %1683 = vmatpush1.msra.mxu0 0.0
        %1684 = vmatprep.subr.mxu0 0.0
        %1685 = vmatpush1.msra.mxu0 0.0
        %1686 = vmatprep.subr.mxu0 0.0
        %1687 = vmatpush1.msra.mxu0 0.0
        %1688 = vmatprep.subr.mxu0 0.0
        %1689 = vmatpush1.msra.mxu0 0.0
        %1690 = vmatprep.subr.mxu0 0.0
        %1691 = vmatpush1.msra.mxu0 0.0
        %1692 = vmatprep.subr.mxu0 0.0
        %1693 = vmatpush1.msra.mxu0 0.0
        %1694 = vmatprep.subr.mxu0 0.0
        %1695 = vmatpush1.msra.mxu0 0.0
        %1696 = vmatprep.subr.mxu0 0.0
        %1697 = vmatpush1.msra.mxu0 0.0
        %1698 = vmatprep.subr.mxu0 0.0
        %1699 = vmatpush1.msra.mxu0 0.0
        %1700 = vmatprep.subr.mxu0 0.0
        %1701 = vmatpush1.msra.mxu0 0.0
        %1702 = vmatprep.subr.mxu0 0.0
        %1703 = vmatpush1.msra.mxu0 0.0
        %1704 = vmatprep.subr.mxu0 0.0
        %1705 = vmatpush1.msra.mxu0 0.0
        %1706 = vmatprep.subr.mxu0 0.0
        %1707 = vmatpush1.msra.mxu0 0.0
        %1708 = vmatprep.subr.mxu0 0.0
        %1709 = vmatpush1.msra.mxu0 0.0
        %1710 = vmatprep.subr.mxu0 0.0
        %1711 = vmatpush1.msra.mxu0 0.0
        %1712 = vmatprep.subr.mxu0 0.0
        %1713 = vmatpush1.msra.mxu0 0.0
        %1714 = vmatprep.subr.mxu0 0.0
        %1715 = vmatpush1.msra.mxu0 0.0
        %1716 = vmatprep.subr.mxu0 0.0
        %1717 = vmatpush1.msra.mxu0 0.0
        %1718 = vmatprep.subr.mxu0 0.0
        %1719 = vmatpush1.msra.mxu0 0.0
        %1720 = vmatprep.subr.mxu0 0.0
        %1721 = vmatpush1.msra.mxu0 0.0
        %1722 = vmatprep.mubr.f32.mxu0 0.0
        %1723 = vmatmul.mubr.f32.gmra.mrb[0].mxu0 %v1227
        %v1724 = vpop.f32.mrb[0].mxu0
        %v1725 = vadd.f32 0.0, %v1724
        %v1726 = vpop.f32.mrb[0].mxu0
        %1727 = vdwg.mxu0
        %v1728 = vmax.f32 %v1725, -7.999756
        %v1729 = vmin.f32 %v1728, 7.999756
        %v1730 = vmul.f32 %v1729, 4096.0
        %v1731 = vcvt.f32.s32.to.zero.pseudo %v1730
        %v1732 = vcvt.s32.f32 %v1731
        %v1733 = vmul.f32 %v1732, 0.00024414063
        %s1734 = scalar_lea.vmem %s894, 128
        %v1735 = vld [vmem:[%s1734] sm:$0xff]
        %v1736 = vld [vmem:[%s1734 + $0x8] sm:$0xff]
        %v1737 = vld [vmem:[%s1734 + $0x10] sm:$0xff]
        %v1738 = vld [vmem:[%s1734 + $0x18] sm:$0xff]
        %1739 = vmatprep.subr.mxu0 0.0
        %1740 = vmatpush1.msra.mxu0 %v1735
        %1741 = vmatprep.subr.mxu0 0.0
        %1742 = vmatpush1.msra.mxu0 %v1736
        %1743 = vmatprep.subr.mxu0 0.0
        %1744 = vmatpush1.msra.mxu0 %v1737
        %1745 = vmatprep.subr.mxu0 0.0
        %1746 = vmatpush1.msra.mxu0 %v1738
        %1747 = vmatprep.subr.mxu0 0.0
        %1748 = vmatpush1.msra.mxu0 0.0
        %1749 = vmatprep.subr.mxu0 0.0
        %1750 = vmatpush1.msra.mxu0 0.0
        %1751 = vmatprep.subr.mxu0 0.0
        %1752 = vmatpush1.msra.mxu0 0.0
        %1753 = vmatprep.subr.mxu0 0.0
        %1754 = vmatpush1.msra.mxu0 0.0
        %1755 = vmatprep.subr.mxu0 0.0
        %1756 = vmatpush1.msra.mxu0 0.0
        %1757 = vmatprep.subr.mxu0 0.0
        %1758 = vmatpush1.msra.mxu0 0.0
        %1759 = vmatprep.subr.mxu0 0.0
        %1760 = vmatpush1.msra.mxu0 0.0
        %1761 = vmatprep.subr.mxu0 0.0
        %1762 = vmatpush1.msra.mxu0 0.0
        %1763 = vmatprep.subr.mxu0 0.0
        %1764 = vmatpush1.msra.mxu0 0.0
        %1765 = vmatprep.subr.mxu0 0.0
        %1766 = vmatpush1.msra.mxu0 0.0
        %1767 = vmatprep.subr.mxu0 0.0
        %1768 = vmatpush1.msra.mxu0 0.0
        %1769 = vmatprep.subr.mxu0 0.0
        %1770 = vmatpush1.msra.mxu0 0.0
        %1771 = vmatprep.subr.mxu0 0.0
        %1772 = vmatpush1.msra.mxu0 0.0
        %1773 = vmatprep.subr.mxu0 0.0
        %1774 = vmatpush1.msra.mxu0 0.0
        %1775 = vmatprep.subr.mxu0 0.0
        %1776 = vmatpush1.msra.mxu0 0.0
        %1777 = vmatprep.subr.mxu0 0.0
        %1778 = vmatpush1.msra.mxu0 0.0
        %1779 = vmatprep.subr.mxu0 0.0
        %1780 = vmatpush1.msra.mxu0 0.0
        %1781 = vmatprep.subr.mxu0 0.0
        %1782 = vmatpush1.msra.mxu0 0.0
        %1783 = vmatprep.subr.mxu0 0.0
        %1784 = vmatpush1.msra.mxu0 0.0
        %1785 = vmatprep.subr.mxu0 0.0
        %1786 = vmatpush1.msra.mxu0 0.0
        %1787 = vmatprep.subr.mxu0 0.0
        %1788 = vmatpush1.msra.mxu0 0.0
        %1789 = vmatprep.subr.mxu0 0.0
        %1790 = vmatpush1.msra.mxu0 0.0
        %1791 = vmatprep.subr.mxu0 0.0
        %1792 = vmatpush1.msra.mxu0 0.0
        %1793 = vmatprep.subr.mxu0 0.0
        %1794 = vmatpush1.msra.mxu0 0.0
        %1795 = vmatprep.subr.mxu0 0.0
        %1796 = vmatpush1.msra.mxu0 0.0
        %1797 = vmatprep.subr.mxu0 0.0
        %1798 = vmatpush1.msra.mxu0 0.0
        %1799 = vmatprep.subr.mxu0 0.0
        %1800 = vmatpush1.msra.mxu0 0.0
        %1801 = vmatprep.subr.mxu0 0.0
        %1802 = vmatpush1.msra.mxu0 0.0
        %1803 = vmatprep.mubr.f32.mxu0 0.0
        %1804 = vmatmul.mubr.f32.gmra.mrb[0].mxu0 %v1227
        %v1805 = vpop.f32.mrb[0].mxu0
        %v1806 = vadd.f32 0.0, %v1805
        %v1807 = vpop.f32.mrb[0].mxu0
        %1808 = vdwg.mxu0
        %v1809 = vmax.f32 %v1806, -7.999756
        %v1810 = vmin.f32 %v1809, 7.999756
        %v1811 = vmul.f32 %v1810, 4096.0
        %v1812 = vcvt.f32.s32.to.zero.pseudo %v1811
        %v1813 = vcvt.s32.f32 %v1812
        %v1814 = vmul.f32 %v1813, 0.00024414063
        %s1815 = scalar_lea.vmem %s894, 160
        %v1816 = vld [vmem:[%s1815] sm:$0xff]
        %v1817 = vld [vmem:[%s1815 + $0x8] sm:$0xff]
        %v1818 = vld [vmem:[%s1815 + $0x10] sm:$0xff]
        %v1819 = vld [vmem:[%s1815 + $0x18] sm:$0xff]
        %1820 = vmatprep.subr.mxu0 0.0
        %1821 = vmatpush1.msra.mxu0 %v1816
        %1822 = vmatprep.subr.mxu0 0.0
        %1823 = vmatpush1.msra.mxu0 %v1817
        %1824 = vmatprep.subr.mxu0 0.0
        %1825 = vmatpush1.msra.mxu0 %v1818
        %1826 = vmatprep.subr.mxu0 0.0
        %1827 = vmatpush1.msra.mxu0 %v1819
        %1828 = vmatprep.subr.mxu0 0.0
        %1829 = vmatpush1.msra.mxu0 0.0
        %1830 = vmatprep.subr.mxu0 0.0
        %1831 = vmatpush1.msra.mxu0 0.0
        %1832 = vmatprep.subr.mxu0 0.0
        %1833 = vmatpush1.msra.mxu0 0.0
        %1834 = vmatprep.subr.mxu0 0.0
        %1835 = vmatpush1.msra.mxu0 0.0
        %1836 = vmatprep.subr.mxu0 0.0
        %1837 = vmatpush1.msra.mxu0 0.0
        %1838 = vmatprep.subr.mxu0 0.0
        %1839 = vmatpush1.msra.mxu0 0.0
        %1840 = vmatprep.subr.mxu0 0.0
        %1841 = vmatpush1.msra.mxu0 0.0
        %1842 = vmatprep.subr.mxu0 0.0
        %1843 = vmatpush1.msra.mxu0 0.0
        %1844 = vmatprep.subr.mxu0 0.0
        %1845 = vmatpush1.msra.mxu0 0.0
        %1846 = vmatprep.subr.mxu0 0.0
        %1847 = vmatpush1.msra.mxu0 0.0
        %1848 = vmatprep.subr.mxu0 0.0
        %1849 = vmatpush1.msra.mxu0 0.0
        %1850 = vmatprep.subr.mxu0 0.0
        %1851 = vmatpush1.msra.mxu0 0.0
        %1852 = vmatprep.subr.mxu0 0.0
        %1853 = vmatpush1.msra.mxu0 0.0
        %1854 = vmatprep.subr.mxu0 0.0
        %1855 = vmatpush1.msra.mxu0 0.0
        %1856 = vmatprep.subr.mxu0 0.0
        %1857 = vmatpush1.msra.mxu0 0.0
        %1858 = vmatprep.subr.mxu0 0.0
        %1859 = vmatpush1.msra.mxu0 0.0
        %1860 = vmatprep.subr.mxu0 0.0
        %1861 = vmatpush1.msra.mxu0 0.0
        %1862 = vmatprep.subr.mxu0 0.0
        %1863 = vmatpush1.msra.mxu0 0.0
        %1864 = vmatprep.subr.mxu0 0.0
        %1865 = vmatpush1.msra.mxu0 0.0
        %1866 = vmatprep.subr.mxu0 0.0
        %1867 = vmatpush1.msra.mxu0 0.0
        %1868 = vmatprep.subr.mxu0 0.0
        %1869 = vmatpush1.msra.mxu0 0.0
        %1870 = vmatprep.subr.mxu0 0.0
        %1871 = vmatpush1.msra.mxu0 0.0
        %1872 = vmatprep.subr.mxu0 0.0
        %1873 = vmatpush1.msra.mxu0 0.0
        %1874 = vmatprep.subr.mxu0 0.0
        %1875 = vmatpush1.msra.mxu0 0.0
        %1876 = vmatprep.subr.mxu0 0.0
        %1877 = vmatpush1.msra.mxu0 0.0
        %1878 = vmatprep.subr.mxu0 0.0
        %1879 = vmatpush1.msra.mxu0 0.0
        %1880 = vmatprep.subr.mxu0 0.0
        %1881 = vmatpush1.msra.mxu0 0.0
        %1882 = vmatprep.subr.mxu0 0.0
        %1883 = vmatpush1.msra.mxu0 0.0
        %1884 = vmatprep.mubr.f32.mxu0 0.0
        %1885 = vmatmul.mubr.f32.gmra.mrb[0].mxu0 %v1227
        %v1886 = vpop.f32.mrb[0].mxu0
        %v1887 = vadd.f32 0.0, %v1886
        %v1888 = vpop.f32.mrb[0].mxu0
        %1889 = vdwg.mxu0
        %v1890 = vmax.f32 %v1887, -7.999756
        %v1891 = vmin.f32 %v1890, 7.999756
        %v1892 = vmul.f32 %v1891, 4096.0
        %v1893 = vcvt.f32.s32.to.zero.pseudo %v1892
        %v1894 = vcvt.s32.f32 %v1893
        %v1895 = vmul.f32 %v1894, 0.00024414063
        %v1897 = vsel %vm1467, %v1733, 0
        %v1900 = vsel %vm1467, %v1814, 0
        %1902 = vmatprep.subr.mxu0 0.0
        %1903 = vmatpush1.xpose.msra.mxu0 %v1900
        %1904 = vmatprep.subr.mxu0 0.0
        %1905 = vmatpush1.xpose.msra.mxu0 0.0
        %1906 = vmatprep.subr.mxu0 0.0
        %1907 = vmatpush1.xpose.msra.mxu0 0.0
        %1908 = vmatprep.subr.mxu0 0.0
        %1909 = vmatpush1.xpose.msra.mxu0 0.0
        %1910 = vmatprep.subr.mxu0 0.0
        %1911 = vmatpush1.xpose.msra.mxu0 0.0
        %1912 = vmatprep.subr.mxu0 0.0
        %1913 = vmatpush1.xpose.msra.mxu0 0.0
        %1914 = vmatprep.subr.mxu0 0.0
        %1915 = vmatpush1.xpose.msra.mxu0 0.0
        %1916 = vmatprep.subr.mxu0 0.0
        %1917 = vmatpush1.xpose.msra.mxu0 0.0
        %1918 = vmatprep.subr.mxu0 0.0
        %1919 = vmatpush1.xpose.msra.mxu0 0.0
        %1920 = vmatprep.subr.mxu0 0.0
        %1921 = vmatpush1.xpose.msra.mxu0 0.0
        %1922 = vmatprep.subr.mxu0 0.0
        %1923 = vmatpush1.xpose.msra.mxu0 0.0
        %1924 = vmatprep.subr.mxu0 0.0
        %1925 = vmatpush1.xpose.msra.mxu0 0.0
        %1926 = vmatprep.subr.mxu0 0.0
        %1927 = vmatpush1.xpose.msra.mxu0 0.0
        %1928 = vmatprep.subr.mxu0 0.0
        %1929 = vmatpush1.xpose.msra.mxu0 0.0
        %1930 = vmatprep.subr.mxu0 0.0
        %1931 = vmatpush1.xpose.msra.mxu0 0.0
        %1932 = vmatprep.subr.mxu0 0.0
        %1933 = vmatpush1.xpose.msra.mxu0 0.0
        %1934 = vmatprep.subr.mxu0 0.0
        %1935 = vmatpush1.xpose.msra.mxu0 0.0
        %1936 = vmatprep.subr.mxu0 0.0
        %1937 = vmatpush1.xpose.msra.mxu0 0.0
        %1938 = vmatprep.subr.mxu0 0.0
        %1939 = vmatpush1.xpose.msra.mxu0 0.0
        %1940 = vmatprep.subr.mxu0 0.0
        %1941 = vmatpush1.xpose.msra.mxu0 0.0
        %1942 = vmatprep.subr.mxu0 0.0
        %1943 = vmatpush1.xpose.msra.mxu0 0.0
        %1944 = vmatprep.subr.mxu0 0.0
        %1945 = vmatpush1.xpose.msra.mxu0 0.0
        %1946 = vmatprep.subr.mxu0 0.0
        %1947 = vmatpush1.xpose.msra.mxu0 0.0
        %1948 = vmatprep.subr.mxu0 0.0
        %1949 = vmatpush1.xpose.msra.mxu0 0.0
        %1950 = vmatprep.subr.mxu0 0.0
        %1951 = vmatpush1.xpose.msra.mxu0 0.0
        %1952 = vmatprep.subr.mxu0 0.0
        %1953 = vmatpush1.xpose.msra.mxu0 0.0
        %1954 = vmatprep.subr.mxu0 0.0
        %1955 = vmatpush1.xpose.msra.mxu0 0.0
        %1956 = vmatprep.subr.mxu0 0.0
        %1957 = vmatpush1.xpose.msra.mxu0 0.0
        %1958 = vmatprep.subr.mxu0 0.0
        %1959 = vmatpush1.xpose.msra.mxu0 0.0
        %1960 = vmatprep.subr.mxu0 0.0
        %1961 = vmatpush1.xpose.msra.mxu0 0.0
        %1962 = vmatprep.subr.mxu0 0.0
        %1963 = vmatpush1.xpose.msra.mxu0 0.0
        %1964 = vmatprep.subr.mxu0 0.0
        %1965 = vmatpush1.xpose.msra.mxu0 0.0
        %1966 = vmatprep.mubr.f32.mxu0 0.0
        %1967 = vmatmul.mubr.f32.gmra.mrb[0].mxu0 %v1897
        %v1968 = vpop.f32.mrb[0].mxu0
        %v1969 = vadd.f32 0.0, %v1968
        %v1970 = vpop.f32.mrb[0].mxu0
        %1971 = vdwg.mxu0
        %v1972 = vmul.f32 %v1969, 0.25
        %v1973 = vmax.f32 %v1972, -7.999756
        %v1974 = vmin.f32 %v1973, 7.999756
        %v1975 = vmul.f32 %v1974, 4096.0
        %v1976 = vcvt.f32.s32.to.zero.pseudo %v1975
        %v1977 = vcvt.s32.f32 %v1976
        %v1978 = vmul.f32 %v1977, 0.00024414063
        %v1979 = vsel %vm1551, %v1978, -inf
        %1980 = vmax.xlane.f32.xlu0 %v1979
        %v1981 = vpop.xlane.xlu0 %1980
        %v1982 = vsub.f32 %v1978, %v1981
        %v1983 = vmul.f32 %v1982, 1.442695
        %v1984 = vpow.pop %v1983
        %v1985 = vsel %vm1551, %v1984, 0.0
        %1986 = vadd.xlane.f32.xlu0 %v1985
        %v1987 = vpop.xlane.xlu0 %1986
        %v1988 = vrcp.pop %v1987
        %v1989 = vmul.f32 %v1984, %v1988
        %v1990 = vmax.f32 %v1989, -7.999756
        %v1991 = vmin.f32 %v1990, 7.999756
        %v1992 = vmul.f32 %v1991, 4096.0
        %v1993 = vcvt.f32.s32.to.zero.pseudo %v1992
        %v1994 = vcvt.s32.f32 %v1993
        %v1995 = vmul.f32 %v1994, 0.00024414063
        %v1997 = vsel %vm1569, %v1995, 0
        %v2000 = vsel %vm1573, %v1895, 0
        %2002 = vmatprep.subr.mxu0 0.0
        %2003 = vmatpush1.msra.mxu0 %v2000
        %2004 = vmatprep.subr.mxu0 0.0
        %2005 = vmatpush1.msra.mxu0 0.0
        %2006 = vmatprep.subr.mxu0 0.0
        %2007 = vmatpush1.msra.mxu0 0.0
        %2008 = vmatprep.subr.mxu0 0.0
        %2009 = vmatpush1.msra.mxu0 0.0
        %2010 = vmatprep.subr.mxu0 0.0
        %2011 = vmatpush1.msra.mxu0 0.0
        %2012 = vmatprep.subr.mxu0 0.0
        %2013 = vmatpush1.msra.mxu0 0.0
        %2014 = vmatprep.subr.mxu0 0.0
        %2015 = vmatpush1.msra.mxu0 0.0
        %2016 = vmatprep.subr.mxu0 0.0
        %2017 = vmatpush1.msra.mxu0 0.0
        %2018 = vmatprep.subr.mxu0 0.0
        %2019 = vmatpush1.msra.mxu0 0.0
        %2020 = vmatprep.subr.mxu0 0.0
        %2021 = vmatpush1.msra.mxu0 0.0
        %2022 = vmatprep.subr.mxu0 0.0
        %2023 = vmatpush1.msra.mxu0 0.0
        %2024 = vmatprep.subr.mxu0 0.0
        %2025 = vmatpush1.msra.mxu0 0.0
        %2026 = vmatprep.subr.mxu0 0.0
        %2027 = vmatpush1.msra.mxu0 0.0
        %2028 = vmatprep.subr.mxu0 0.0
        %2029 = vmatpush1.msra.mxu0 0.0
        %2030 = vmatprep.subr.mxu0 0.0
        %2031 = vmatpush1.msra.mxu0 0.0
        %2032 = vmatprep.subr.mxu0 0.0
        %2033 = vmatpush1.msra.mxu0 0.0
        %2034 = vmatprep.subr.mxu0 0.0
        %2035 = vmatpush1.msra.mxu0 0.0
        %2036 = vmatprep.subr.mxu0 0.0
        %2037 = vmatpush1.msra.mxu0 0.0
        %2038 = vmatprep.subr.mxu0 0.0
        %2039 = vmatpush1.msra.mxu0 0.0
        %2040 = vmatprep.subr.mxu0 0.0
        %2041 = vmatpush1.msra.mxu0 0.0
        %2042 = vmatprep.subr.mxu0 0.0
        %2043 = vmatpush1.msra.mxu0 0.0
        %2044 = vmatprep.subr.mxu0 0.0
        %2045 = vmatpush1.msra.mxu0 0.0
        %2046 = vmatprep.subr.mxu0 0.0
        %2047 = vmatpush1.msra.mxu0 0.0
        %2048 = vmatprep.subr.mxu0 0.0
        %2049 = vmatpush1.msra.mxu0 0.0
        %2050 = vmatprep.subr.mxu0 0.0
        %2051 = vmatpush1.msra.mxu0 0.0
        %2052 = vmatprep.subr.mxu0 0.0
        %2053 = vmatpush1.msra.mxu0 0.0
        %2054 = vmatprep.subr.mxu0 0.0
        %2055 = vmatpush1.msra.mxu0 0.0
        %2056 = vmatprep.subr.mxu0 0.0
        %2057 = vmatpush1.msra.mxu0 0.0
        %2058 = vmatprep.subr.mxu0 0.0
        %2059 = vmatpush1.msra.mxu0 0.0
        %2060 = vmatprep.subr.mxu0 0.0
        %2061 = vmatpush1.msra.mxu0 0.0
        %2062 = vmatprep.subr.mxu0 0.0
        %2063 = vmatpush1.msra.mxu0 0.0
        %2064 = vmatprep.subr.mxu0 0.0
        %2065 = vmatpush1.msra.mxu0 0.0
        %2066 = vmatprep.mubr.f32.mxu0 0.0
        %2067 = vmatmul.mubr.f32.gmra.mrb[0].mxu0 %v1997
        %v2068 = vpop.f32.mrb[0].mxu0
        %v2069 = vadd.f32 0.0, %v2068
        %v2070 = vpop.f32.mrb[0].mxu0
        %2071 = vdwg.mxu0
        %v2072 = vmax.f32 %v2069, -7.999756
        %v2073 = vmin.f32 %v2072, 7.999756
        %v2074 = vmul.f32 %v2073, 4096.0
        %v2075 = vcvt.f32.s32.to.zero.pseudo %v2074
        %v2076 = vcvt.s32.f32 %v2075
        %v2077 = vmul.f32 %v2076, 0.00024414063
        %2079 = vrot.lane.b32.xlu0 %v2077, 16
        %v2080 = vpop.permute.xlu0 %2079
        %v2082 = vsel %vm1467, %v1652, %v2080
        %v2083 = vld [vmem:[%s899] sm:$0xff]
        %v2084 = vld [vmem:[%s899 + $0x8] sm:$0xff]
        %v2085 = vld [vmem:[%s899 + $0x10] sm:$0xff]
        %v2086 = vld [vmem:[%s899 + $0x18] sm:$0xff]
        %v2087 = vld [vmem:[%s902] sm:$0x1]
        %v2089 = vlaneseq
        %v2090 = vshrl.u32 %v2089, 7
        %v2091 = vsub.s32 0, %v2090
        %v2092 = vrot.slane %v2087, %v2091
        %v2095 = vsel %vm1225, %v2082, 0
        %2097 = vmatprep.subr.mxu0 0.0
        %2098 = vmatpush1.msra.mxu0 %v2083
        %2099 = vmatprep.subr.mxu0 0.0
        %2100 = vmatpush1.msra.mxu0 %v2084
        %2101 = vmatprep.subr.mxu0 0.0
        %2102 = vmatpush1.msra.mxu0 %v2085
        %2103 = vmatprep.subr.mxu0 0.0
        %2104 = vmatpush1.msra.mxu0 %v2086
        %2105 = vmatprep.subr.mxu0 0.0
        %2106 = vmatpush1.msra.mxu0 0.0
        %2107 = vmatprep.subr.mxu0 0.0
        %2108 = vmatpush1.msra.mxu0 0.0
        %2109 = vmatprep.subr.mxu0 0.0
        %2110 = vmatpush1.msra.mxu0 0.0
        %2111 = vmatprep.subr.mxu0 0.0
        %2112 = vmatpush1.msra.mxu0 0.0
        %2113 = vmatprep.subr.mxu0 0.0
        %2114 = vmatpush1.msra.mxu0 0.0
        %2115 = vmatprep.subr.mxu0 0.0
        %2116 = vmatpush1.msra.mxu0 0.0
        %2117 = vmatprep.subr.mxu0 0.0
        %2118 = vmatpush1.msra.mxu0 0.0
        %2119 = vmatprep.subr.mxu0 0.0
        %2120 = vmatpush1.msra.mxu0 0.0
        %2121 = vmatprep.subr.mxu0 0.0
        %2122 = vmatpush1.msra.mxu0 0.0
        %2123 = vmatprep.subr.mxu0 0.0
        %2124 = vmatpush1.msra.mxu0 0.0
        %2125 = vmatprep.subr.mxu0 0.0
        %2126 = vmatpush1.msra.mxu0 0.0
        %2127 = vmatprep.subr.mxu0 0.0
        %2128 = vmatpush1.msra.mxu0 0.0
        %2129 = vmatprep.subr.mxu0 0.0
        %2130 = vmatpush1.msra.mxu0 0.0
        %2131 = vmatprep.subr.mxu0 0.0
        %2132 = vmatpush1.msra.mxu0 0.0
        %2133 = vmatprep.subr.mxu0 0.0
        %2134 = vmatpush1.msra.mxu0 0.0
        %2135 = vmatprep.subr.mxu0 0.0
        %2136 = vmatpush1.msra.mxu0 0.0
        %2137 = vmatprep.subr.mxu0 0.0
        %2138 = vmatpush1.msra.mxu0 0.0
        %2139 = vmatprep.subr.mxu0 0.0
        %2140 = vmatpush1.msra.mxu0 0.0
        %2141 = vmatprep.subr.mxu0 0.0
        %2142 = vmatpush1.msra.mxu0 0.0
        %2143 = vmatprep.subr.mxu0 0.0
        %2144 = vmatpush1.msra.mxu0 0.0
        %2145 = vmatprep.subr.mxu0 0.0
        %2146 = vmatpush1.msra.mxu0 0.0
        %2147 = vmatprep.subr.mxu0 0.0
        %2148 = vmatpush1.msra.mxu0 0.0
        %2149 = vmatprep.subr.mxu0 0.0
        %2150 = vmatpush1.msra.mxu0 0.0
        %2151 = vmatprep.subr.mxu0 0.0
        %2152 = vmatpush1.msra.mxu0 0.0
        %2153 = vmatprep.subr.mxu0 0.0
        %2154 = vmatpush1.msra.mxu0 0.0
        %2155 = vmatprep.subr.mxu0 0.0
        %2156 = vmatpush1.msra.mxu0 0.0
        %2157 = vmatprep.subr.mxu0 0.0
        %2158 = vmatpush1.msra.mxu0 0.0
        %2159 = vmatprep.subr.mxu0 0.0
        %2160 = vmatpush1.msra.mxu0 0.0
        %2161 = vmatprep.mubr.f32.mxu0 0.0
        %2162 = vmatmul.mubr.f32.gmra.mrb[0].mxu0 %v2095
        %v2163 = vpop.f32.mrb[0].mxu0
        %v2164 = vadd.f32 %v2092, %v2163
        %v2165 = vpop.f32.mrb[0].mxu0
        %2166 = vdwg.mxu0
        %v2167 = vmax.f32 %v2164, -7.999756
        %v2168 = vmin.f32 %v2167, 7.999756
        %v2169 = vmul.f32 %v2168, 4096.0
        %v2170 = vcvt.f32.s32.to.zero.pseudo %v2169
        %v2171 = vcvt.s32.f32 %v2170
        %v2172 = vmul.f32 %v2171, 0.00024414063
        %v2173 = vadd.f32 %v2172, %v1183
        %v2174 = vmax.f32 %v2173, -7.999756
        %v2175 = vmin.f32 %v2174, 7.999756
        %v2176 = vmul.f32 %v2175, 4096.0
        %v2177 = vcvt.f32.s32.to.zero.pseudo %v2176
        %v2178 = vcvt.s32.f32 %v2177
        %v2179 = vmul.f32 %v2178, 0.00024414063
        %v2180 = vld [vmem:[%s905] sm:$0x1]
        %v2181 = vld [vmem:[%s908] sm:$0x1]
        %v2182 = vsel %vm1186, %v2179, 0.0
        %2183 = vadd.xlane.f32.xlu0 %v2182
        %v2184 = vpop.xlane.xlu0 %2183
        %v2185 = vmul.f32 %v2184, %v1190
        %v2186 = vsub.f32 %v2179, %v2185
        %v2187 = vmul.f32 %v2186, %v2186
        %v2188 = vsel %vm1186, %v2187, 0.0
        %2189 = vadd.xlane.f32.xlu0 %v2188
        %v2190 = vpop.xlane.xlu0 %2189
        %v2191 = vmul.f32 %v2190, %v1190
        %v2192 = vadd.f32 %v2191, 1e-05
        %v2193 = vrsqrt.pop %v2192
        %v2194 = vmul.f32 %v2186, %v2193
        %v2196 = vlaneseq
        %v2197 = vshrl.u32 %v2196, 7
        %v2198 = vsub.s32 0, %v2197
        %v2199 = vrot.slane %v2180, %v2198
        %v2201 = vmul.f32 %v2194, %v2199
        %v2203 = vlaneseq
        %v2204 = vshrl.u32 %v2203, 7
        %v2205 = vsub.s32 0, %v2204
        %v2206 = vrot.slane %v2181, %v2205
        %v2208 = vadd.f32 %v2201, %v2206
        %v2209 = vmax.f32 %v2208, -7.999756
        %v2210 = vmin.f32 %v2209, 7.999756
        %v2211 = vmul.f32 %v2210, 4096.0
        %v2212 = vcvt.f32.s32.to.zero.pseudo %v2211
        %v2213 = vcvt.s32.f32 %v2212
        %v2214 = vmul.f32 %v2213, 0.00024414063
        %v2215 = vld [vmem:[%s913] sm:$0xff]
        %v2216 = vld [vmem:[%s913 + $0x8] sm:$0xff]
        %v2217 = vld [vmem:[%s913 + $0x10] sm:$0xff]
        %v2218 = vld [vmem:[%s913 + $0x18] sm:$0xff]
        %v2219 = vld [vmem:[%s916] sm:$0x1]
        %v2221 = vlaneseq
        %v2222 = vshrl.u32 %v2221, 7
        %v2223 = vsub.s32 0, %v2222
        %v2224 = vrot.slane %v2219, %v2223
        %v2227 = vsel %vm1225, %v2214, 0
        %2229 = vmatprep.subr.mxu0 0.0
        %2230 = vmatpush1.msra.mxu0 %v2215
        %2231 = vmatprep.subr.mxu0 0.0
        %2232 = vmatpush1.msra.mxu0 %v2216
        %2233 = vmatprep.subr.mxu0 0.0
        %2234 = vmatpush1.msra.mxu0 %v2217
        %2235 = vmatprep.subr.mxu0 0.0
        %2236 = vmatpush1.msra.mxu0 %v2218
        %2237 = vmatprep.subr.mxu0 0.0
        %2238 = vmatpush1.msra.mxu0 0.0
        %2239 = vmatprep.subr.mxu0 0.0
        %2240 = vmatpush1.msra.mxu0 0.0
        %2241 = vmatprep.subr.mxu0 0.0
        %2242 = vmatpush1.msra.mxu0 0.0
        %2243 = vmatprep.subr.mxu0 0.0
        %2244 = vmatpush1.msra.mxu0 0.0
        %2245 = vmatprep.subr.mxu0 0.0
        %2246 = vmatpush1.msra.mxu0 0.0
        %2247 = vmatprep.subr.mxu0 0.0
        %2248 = vmatpush1.msra.mxu0 0.0
        %2249 = vmatprep.subr.mxu0 0.0
        %2250 = vmatpush1.msra.mxu0 0.0
        %2251 = vmatprep.subr.mxu0 0.0
        %2252 = vmatpush1.msra.mxu0 0.0
        %2253 = vmatprep.subr.mxu0 0.0
        %2254 = vmatpush1.msra.mxu0 0.0
        %2255 = vmatprep.subr.mxu0 0.0
        %2256 = vmatpush1.msra.mxu0 0.0
        %2257 = vmatprep.subr.mxu0 0.0
        %2258 = vmatpush1.msra.mxu0 0.0
        %2259 = vmatprep.subr.mxu0 0.0
        %2260 = vmatpush1.msra.mxu0 0.0
        %2261 = vmatprep.subr.mxu0 0.0
        %2262 = vmatpush1.msra.mxu0 0.0
        %2263 = vmatprep.subr.mxu0 0.0
        %2264 = vmatpush1.msra.mxu0 0.0
        %2265 = vmatprep.subr.mxu0 0.0
        %2266 = vmatpush1.msra.mxu0 0.0
        %2267 = vmatprep.subr.mxu0 0.0
        %2268 = vmatpush1.msra.mxu0 0.0
        %2269 = vmatprep.subr.mxu0 0.0
        %2270 = vmatpush1.msra.mxu0 0.0
        %2271 = vmatprep.subr.mxu0 0.0
        %2272 = vmatpush1.msra.mxu0 0.0
        %2273 = vmatprep.subr.mxu0 0.0
        %2274 = vmatpush1.msra.mxu0 0.0
        %2275 = vmatprep.subr.mxu0 0.0
        %2276 = vmatpush1.msra.mxu0 0.0
        %2277 = vmatprep.subr.mxu0 0.0
        %2278 = vmatpush1.msra.mxu0 0.0
        %2279 = vmatprep.subr.mxu0 0.0
        %2280 = vmatpush1.msra.mxu0 0.0
        %2281 = vmatprep.subr.mxu0 0.0
        %2282 = vmatpush1.msra.mxu0 0.0
        %2283 = vmatprep.subr.mxu0 0.0
        %2284 = vmatpush1.msra.mxu0 0.0
        %2285 = vmatprep.subr.mxu0 0.0
        %2286 = vmatpush1.msra.mxu0 0.0
        %2287 = vmatprep.subr.mxu0 0.0
        %2288 = vmatpush1.msra.mxu0 0.0
        %2289 = vmatprep.subr.mxu0 0.0
        %2290 = vmatpush1.msra.mxu0 0.0
        %2291 = vmatprep.subr.mxu0 0.0
        %2292 = vmatpush1.msra.mxu0 0.0
        %2293 = vmatprep.mubr.f32.mxu0 0.0
        %2294 = vmatmul.mubr.f32.gmra.mrb[0].mxu0 %v2227
        %v2295 = vpop.f32.mrb[0].mxu0
        %v2296 = vadd.f32 %v2224, %v2295
        %v2297 = vpop.f32.mrb[0].mxu0
        %2298 = vdwg.mxu0
        %v2299 = vmax.f32 %v2296, -7.999756
        %v2300 = vmin.f32 %v2299, 7.999756
        %v2301 = vmul.f32 %v2300, 4096.0
        %v2302 = vcvt.f32.s32.to.zero.pseudo %v2301
        %v2303 = vcvt.s32.f32 %v2302
        %v2304 = vmul.f32 %v2303, 0.00024414063
        %v2305 = vmul.f32 %v2304, 0.5
        %v2306 = vmul.f32 %v2304, 0.70710677
        %vm2307 = vcmp.ge.f32.partialorder %v2306, 0.0
        %v2308 = vsel %vm2307, 1.0, -1.0
        %v2309 = vand.u32 2147483647, %v2306
        %v2310 = vmul.f32 %v2309, 0.3275911
        %v2311 = vadd.f32 %v2310, 1.0
        %v2312 = vrcp.pop %v2311
        %v2313 = vmul.f32 1.0, %v2312
        %v2314 = vmul.f32 %v2313, 1.0614054
        %v2315 = vadd.f32 %v2314, -1.4531521
        %v2316 = vmul.f32 %v2313, %v2315
        %v2317 = vadd.f32 %v2316, 1.4214138
        %v2318 = vmul.f32 %v2313, %v2317
        %v2319 = vadd.f32 %v2318, -0.28449672
        %v2320 = vmul.f32 %v2313, %v2319
        %v2321 = vadd.f32 %v2320, 0.2548296
        %v2322 = vmul.f32 %v2313, %v2321
        %v2323 = vsub.f32 0.0, %v2309
        %v2324 = vmul.f32 %v2323, %v2309
        %v2325 = vmul.f32 %v2324, 1.442695
        %v2326 = vpow.pop %v2325
        %v2327 = vmul.f32 %v2322, %v2326
        %v2328 = vsub.f32 1.0, %v2327
        %v2329 = vmul.f32 %v2308, %v2328
        %v2330 = vadd.f32 %v2329, 1.0
        %v2331 = vmul.f32 %v2305, %v2330
        %v2332 = vmax.f32 %v2331, -7.999756
        %v2333 = vmin.f32 %v2332, 7.999756
        %v2334 = vmul.f32 %v2333, 4096.0
        %v2335 = vcvt.f32.s32.to.zero.pseudo %v2334
        %v2336 = vcvt.s32.f32 %v2335
        %v2337 = vmul.f32 %v2336, 0.00024414063
        %v2338 = vld [vmem:[%s921] sm:$0xff]
        %v2339 = vld [vmem:[%s921 + $0x8] sm:$0xff]
        %v2340 = vld [vmem:[%s921 + $0x10] sm:$0xff]
        %v2341 = vld [vmem:[%s921 + $0x18] sm:$0xff]
        %v2342 = vld [vmem:[%s921 + $0x20] sm:$0xff]
        %v2343 = vld [vmem:[%s921 + $0x28] sm:$0xff]
        %v2344 = vld [vmem:[%s921 + $0x30] sm:$0xff]
        %v2345 = vld [vmem:[%s921 + $0x38] sm:$0xff]
        %v2346 = vld [vmem:[%s924] sm:$0x1]
        %v2348 = vlaneseq
        %v2349 = vshrl.u32 %v2348, 7
        %v2350 = vsub.s32 0, %v2349
        %v2351 = vrot.slane %v2346, %v2350
        %vm2353 = vcmask 523264
        %v2355 = vsel %vm2353, %v2337, 0
        %2357 = vmatprep.subr.mxu0 0.0
        %2358 = vmatpush1.msra.mxu0 %v2338
        %2359 = vmatprep.subr.mxu0 0.0
        %2360 = vmatpush1.msra.mxu0 %v2339
        %2361 = vmatprep.subr.mxu0 0.0
        %2362 = vmatpush1.msra.mxu0 %v2340
        %2363 = vmatprep.subr.mxu0 0.0
        %2364 = vmatpush1.msra.mxu0 %v2341
        %2365 = vmatprep.subr.mxu0 0.0
        %2366 = vmatpush1.msra.mxu0 %v2342
        %2367 = vmatprep.subr.mxu0 0.0
        %2368 = vmatpush1.msra.mxu0 %v2343
        %2369 = vmatprep.subr.mxu0 0.0
        %2370 = vmatpush1.msra.mxu0 %v2344
        %2371 = vmatprep.subr.mxu0 0.0
        %2372 = vmatpush1.msra.mxu0 %v2345
        %2373 = vmatprep.subr.mxu0 0.0
        %2374 = vmatpush1.msra.mxu0 0.0
        %2375 = vmatprep.subr.mxu0 0.0
        %2376 = vmatpush1.msra.mxu0 0.0
        %2377 = vmatprep.subr.mxu0 0.0
        %2378 = vmatpush1.msra.mxu0 0.0
        %2379 = vmatprep.subr.mxu0 0.0
        %2380 = vmatpush1.msra.mxu0 0.0
        %2381 = vmatprep.subr.mxu0 0.0
        %2382 = vmatpush1.msra.mxu0 0.0
        %2383 = vmatprep.subr.mxu0 0.0
        %2384 = vmatpush1.msra.mxu0 0.0
        %2385 = vmatprep.subr.mxu0 0.0
        %2386 = vmatpush1.msra.mxu0 0.0
        %2387 = vmatprep.subr.mxu0 0.0
        %2388 = vmatpush1.msra.mxu0 0.0
        %2389 = vmatprep.subr.mxu0 0.0
        %2390 = vmatpush1.msra.mxu0 0.0
        %2391 = vmatprep.subr.mxu0 0.0
        %2392 = vmatpush1.msra.mxu0 0.0
        %2393 = vmatprep.subr.mxu0 0.0
        %2394 = vmatpush1.msra.mxu0 0.0
        %2395 = vmatprep.subr.mxu0 0.0
        %2396 = vmatpush1.msra.mxu0 0.0
        %2397 = vmatprep.subr.mxu0 0.0
        %2398 = vmatpush1.msra.mxu0 0.0
        %2399 = vmatprep.subr.mxu0 0.0
        %2400 = vmatpush1.msra.mxu0 0.0
        %2401 = vmatprep.subr.mxu0 0.0
        %2402 = vmatpush1.msra.mxu0 0.0
        %2403 = vmatprep.subr.mxu0 0.0
        %2404 = vmatpush1.msra.mxu0 0.0
        %2405 = vmatprep.subr.mxu0 0.0
        %2406 = vmatpush1.msra.mxu0 0.0
        %2407 = vmatprep.subr.mxu0 0.0
        %2408 = vmatpush1.msra.mxu0 0.0
        %2409 = vmatprep.subr.mxu0 0.0
        %2410 = vmatpush1.msra.mxu0 0.0
        %2411 = vmatprep.subr.mxu0 0.0
        %2412 = vmatpush1.msra.mxu0 0.0
        %2413 = vmatprep.subr.mxu0 0.0
        %2414 = vmatpush1.msra.mxu0 0.0
        %2415 = vmatprep.subr.mxu0 0.0
        %2416 = vmatpush1.msra.mxu0 0.0
        %2417 = vmatprep.subr.mxu0 0.0
        %2418 = vmatpush1.msra.mxu0 0.0
        %2419 = vmatprep.subr.mxu0 0.0
        %2420 = vmatpush1.msra.mxu0 0.0
        %2421 = vmatprep.mubr.f32.mxu0 0.0
        %2422 = vmatmul.mubr.f32.gmra.mrb[0].mxu0 %v2355
        %v2423 = vpop.f32.mrb[0].mxu0
        %v2424 = vadd.f32 %v2351, %v2423
        %v2425 = vpop.f32.mrb[0].mxu0
        %2426 = vdwg.mxu0
        %v2427 = vmax.f32 %v2424, -7.999756
        %v2428 = vmin.f32 %v2427, 7.999756
        %v2429 = vmul.f32 %v2428, 4096.0
        %v2430 = vcvt.f32.s32.to.zero.pseudo %v2429
        %v2431 = vcvt.s32.f32 %v2430
        %v2432 = vmul.f32 %v2431, 0.00024414063
        %v2433 = vadd.f32 %v2432, %v2179
        %v2434 = vmax.f32 %v2433, -7.999756
        %v2435 = vmin.f32 %v2434, 7.999756
        %v2436 = vmul.f32 %v2435, 4096.0
        %v2437 = vcvt.f32.s32.to.zero.pseudo %v2436
        %v2438 = vcvt.s32.f32 %v2437
        %v2439 = vmul.f32 %v2438, 0.00024414063
        %2440 = vst.msk [vmem:[#allocation2] sm:$0x1f] %vm1186, %v2439
        %p2441 = scmp.eq.s32.totalorder %s43, 1
        // Predicated region
        $region121: #{fixed_point_vit_forward.1} parent=115 // pred_check
          %p2442 = pneg %p2441
        $region122: #{fixed_point_vit_forward.1} parent=115 // pred_check_branch
          %2444 = sbr.rel (%p2442) target = $region124
        $region123: #{fixed_point_vit_forward.1} parent=115 // pred_region
          %v2445 = vld [vmem:[%s20] sm:$0x1]
          %v2446 = vld [vmem:[%s21] sm:$0x1]
          %vm2447 = vcmask 253952
          %v2448 = vsel %vm2447, %v2439, 0.0
          %2449 = vadd.xlane.f32.xlu0 %v2448
          %v2450 = vpop.xlane.xlu0 %2449
          %v2451 = vmul.f32 %v2450, %v1190
          %v2452 = vsub.f32 %v2439, %v2451
          %v2453 = vmul.f32 %v2452, %v2452
          %v2454 = vsel %vm2447, %v2453, 0.0
          %2455 = vadd.xlane.f32.xlu0 %v2454
          %v2456 = vpop.xlane.xlu0 %2455
          %v2457 = vmul.f32 %v2456, %v1190
          %v2458 = vadd.f32 %v2457, 1e-05
          %v2459 = vrsqrt.pop %v2458
          %v2460 = vmul.f32 %v2452, %v2459
          %v2461 = vmul.f32 %v2460, %v2445
          %v2462 = vadd.f32 %v2461, %v2446
          %v2463 = vmax.f32 %v2462, -7.999756
          %v2464 = vmin.f32 %v2463, 7.999756
          %v2465 = vmul.f32 %v2464, 4096.0
          %v2466 = vcvt.f32.s32.to.zero.pseudo %v2465
          %v2467 = vcvt.s32.f32 %v2466
          %v2468 = vmul.f32 %v2467, 0.00024414063
          %v2469 = vld [vmem:[%s22] sm:$0xff]
          %v2470 = vld [vmem:[%s22 + $0x8] sm:$0xff]
          %v2471 = vld [vmem:[%s22 + $0x10] sm:$0xff]
          %v2472 = vld [vmem:[%s22 + $0x18] sm:$0xff]
          %v2473 = vld [vmem:[%s23] sm:$0x1]
          %v2475 = vsel %vm1225, %v2468, 0
          %2477 = vmatprep.subr.mxu0 0.0
          %2478 = vmatpush1.msra.mxu0 %v2469
          %2479 = vmatprep.subr.mxu0 0.0
          %2480 = vmatpush1.msra.mxu0 %v2470
          %2481 = vmatprep.subr.mxu0 0.0
          %2482 = vmatpush1.msra.mxu0 %v2471
          %2483 = vmatprep.subr.mxu0 0.0
          %2484 = vmatpush1.msra.mxu0 %v2472
          %2485 = vmatprep.subr.mxu0 0.0
          %2486 = vmatpush1.msra.mxu0 0.0
          %2487 = vmatprep.subr.mxu0 0.0
          %2488 = vmatpush1.msra.mxu0 0.0
          %2489 = vmatprep.subr.mxu0 0.0
          %2490 = vmatpush1.msra.mxu0 0.0
          %2491 = vmatprep.subr.mxu0 0.0
          %2492 = vmatpush1.msra.mxu0 0.0
          %2493 = vmatprep.subr.mxu0 0.0
          %2494 = vmatpush1.msra.mxu0 0.0
          %2495 = vmatprep.subr.mxu0 0.0
          %2496 = vmatpush1.msra.mxu0 0.0
          %2497 = vmatprep.subr.mxu0 0.0
          %2498 = vmatpush1.msra.mxu0 0.0
          %2499 = vmatprep.subr.mxu0 0.0
          %2500 = vmatpush1.msra.mxu0 0.0
          %2501 = vmatprep.subr.mxu0 0.0
          %2502 = vmatpush1.msra.mxu0 0.0
          %2503 = vmatprep.subr.mxu0 0.0
          %2504 = vmatpush1.msra.mxu0 0.0
          %2505 = vmatprep.subr.mxu0 0.0
          %2506 = vmatpush1.msra.mxu0 0.0
          %2507 = vmatprep.subr.mxu0 0.0
          %2508 = vmatpush1.msra.mxu0 0.0
          %2509 = vmatprep.subr.mxu0 0.0
          %2510 = vmatpush1.msra.mxu0 0.0
          %2511 = vmatprep.subr.mxu0 0.0
          %2512 = vmatpush1.msra.mxu0 0.0
          %2513 = vmatprep.subr.mxu0 0.0
          %2514 = vmatpush1.msra.mxu0 0.0
          %2515 = vmatprep.subr.mxu0 0.0
          %2516 = vmatpush1.msra.mxu0 0.0
          %2517 = vmatprep.subr.mxu0 0.0
          %2518 = vmatpush1.msra.mxu0 0.0
          %2519 = vmatprep.subr.mxu0 0.0
          %2520 = vmatpush1.msra.mxu0 0.0
          %2521 = vmatprep.subr.mxu0 0.0
          %2522 = vmatpush1.msra.mxu0 0.0
          %2523 = vmatprep.subr.mxu0 0.0
          %2524 = vmatpush1.msra.mxu0 0.0
          %2525 = vmatprep.subr.mxu0 0.0
          %2526 = vmatpush1.msra.mxu0 0.0
          %2527 = vmatprep.subr.mxu0 0.0
          %2528 = vmatpush1.msra.mxu0 0.0
          %2529 = vmatprep.subr.mxu0 0.0
          %2530 = vmatpush1.msra.mxu0 0.0
          %2531 = vmatprep.subr.mxu0 0.0
          %2532 = vmatpush1.msra.mxu0 0.0
          %2533 = vmatprep.subr.mxu0 0.0
          %2534 = vmatpush1.msra.mxu0 0.0
          %2535 = vmatprep.subr.mxu0 0.0
          %2536 = vmatpush1.msra.mxu0 0.0
          %2537 = vmatprep.subr.mxu0 0.0
          %2538 = vmatpush1.msra.mxu0 0.0
          %2539 = vmatprep.subr.mxu0 0.0
          %2540 = vmatpush1.msra.mxu0 0.0
          %2541 = vmatprep.mubr.f32.mxu0 0.0
          %2542 = vmatmul.mubr.f32.gmra.mrb[0].mxu0 %v2475
          %v2543 = vpop.f32.mrb[0].mxu0
          %v2544 = vadd.f32 %v2473, %v2543
          %v2545 = vpop.f32.mrb[0].mxu0
          %2546 = vdwg.mxu0
          %v2547 = vmax.f32 %v2544, -7.999756
          %v2548 = vmin.f32 %v2547, 7.999756
          %v2549 = vmul.f32 %v2548, 4096.0
          %v2550 = vcvt.f32.s32.to.zero.pseudo %v2549
          %v2551 = vcvt.s32.f32 %v2550
          %v2552 = vmul.f32 %v2551, 0.00024414063
          %vm2553 = vcmask 73728
          %2554 = vst.msk [vmem:[%s878] sm:$0x1] %vm2553, %v2552
        $region124: #{fixed_point_vit_forward.1} parent=115 // pred_fallthru
          _
        %s2555 = sand.u32 %s622, 1
        %s2556 = scalar_lea.sflag [#allocation4], %s2555
        %s2557 = sand.u32 %s622, 1
        %s2558 = scalar_lea.vmem [#allocation3], %s2557
        // Predicated region
        $region125: #{fixed_point_vit_forward.1} parent=115 // pred_check
          %p2559 = pneg %p632
        $region126: #{fixed_point_vit_forward.1} parent=115 // pred_check_branch
          %2561 = sbr.rel (%p2559) target = $region128
        $region127: #{fixed_point_vit_forward.1} parent=115 // pred_region
          %s2563 = ssub.s32 16, 16
          %2564 = vsyncadd %s2556, %s2563
          %s2565 = smul.addr %s42, 16
          %s2566 = scalar_lea.hbm %s24, %s2565
          %s2568 = sshll.u32 %s2558, 4
          %s2569 = int_to_ptr.vmem [resolvable:$true] %s2568
          %2571 = dma.vmem_to_hbm [thread:$0]  %s2569, 16, %s2566, %s2556
        $region128: #{fixed_point_vit_forward.1} parent=115 // pred_fallthru
          _
      $region116: #{fixed_point_vit_forward.1} parent=5 // pred_fallthru
        _
      %p2572 = scmp.le.s32.totalorder 2, %s33
      // Predicated region
      $region129: #{fixed_point_vit_forward.1} parent=5 // pred_check
        %p2573 = pneg %p2572
      $region130: #{fixed_point_vit_forward.1} parent=5 // pred_check_branch
        %2575 = sbr.rel (%p2573) target = $region132
      $region131: #{fixed_point_vit_forward.1} parent=5 // pred_region
        %s2576 = ssub.s32 %s33, 2
        // Predicated region
        $region133: #{fixed_point_vit_forward.1} parent=131 // pred_check
          %p2577 = pneg %p638
        $region134: #{fixed_point_vit_forward.1} parent=131 // pred_check_branch
          %2579 = sbr.rel (%p2577) target = $region136
        $region135: #{fixed_point_vit_forward.1} parent=131 // pred_region
          %s2580 = sand.u32 %s623, 1
          %s2581 = scalar_lea.sflag [#allocation4], %s2580
          %s2582 = sand.u32 %s623, 1
          %s2583 = scalar_lea.vmem [#allocation3], %s2582
          %2584 = dma.done %s2581, 16
        $region136: #{fixed_point_vit_forward.1} parent=131 // pred_fallthru
          _
      $region132: #{fixed_point_vit_forward.1} parent=5 // pred_fallthru
        _
    $region6: #{fixed_point_vit_forward.1} parent=1 // loop_footer
      %s37 = sadd.s32 1, %s33
    $region7: #{fixed_point_vit_forward.1} parent=1 // loop_footer_branch
      %32 = sbr.rel target = $region3
    $region8: #{fixed_point_vit_forward.1} parent=1 // loop_exit
      _
    %2585 = vsyncpa [#allocation4], 1
    %s2586 = scalar_lea.sflag [#allocation4], 1
    %2587 = vsyncpa %s2586, 1

</llo_original>
